<compile_context>
chip_gen: v7x
topology: tpu7x:2x2x1
jax: 0.10.0
libtpu: 0.0.40
codegen_flags: <defaults>
</compile_context>

<pallas_src>
import functools
import math

import jax
import jax.numpy as jnp
from jax.experimental import pallas as pl
from jax.experimental.pallas import tpu as pltpu

# ---------------- synthetic "BERT" config (small) ----------------
HIDDEN = 32
N_HEADS = 2
HEAD_DIM = HIDDEN // N_HEADS
N_LAYERS = 2
INTERMEDIATE = 64
VOCAB = 128
MAX_POS = 64
LN_EPS = 1e-12

VEC_W = 128                      # >= max(3H, 4H, INTERMEDIATE)
VEC_ROWS = 2 + 8 * N_LAYERS + 1  # emb LN (2) + 8 per layer + lstm bias

_VMEM = pl.BlockSpec(memory_space=pltpu.MemorySpace.VMEM)


def _layernorm(x, g, b):
    # Single lane-reduce pass: reduce x and x*x together (one XLU pass over
    # a (2N, H) slab instead of two over (N, H)); var = E[x^2] - E[x]^2,
    # clamped to guard f32 cancellation.
    n, d = x.shape
    sums = jnp.sum(jnp.concatenate([x, x * x], axis=0), axis=-1,
                   keepdims=True) * (1.0 / d)
    mean = sums[:n]
    var = jnp.maximum(sums[n:] - mean * mean, 0.0)
    return (x - mean) * jax.lax.rsqrt(var + LN_EPS) * g + b


# ---------------- fused whole-model kernel ----------------
def _bert_lstm_kernel(emb_ref, mask_ref, vec_ref,
                      wqkv_ref, wo_ref, w1_ref, w2_ref, lstm_w_ref,
                      o_ref, *, B, S):
    H = HIDDEN
    dH = HEAD_DIM
    scale = 1.0 / math.sqrt(dH)

    def vec(row, width):
        # Static (1, width) slice from the packed bias/LN slab.
        return vec_ref[row:row + 1, 0:width]

    # Embedding layernorm on the flattened [B*S, H] slab.
    x2 = _layernorm(emb_ref[...].reshape(B * S, H), vec(0, H), vec(1, H))

    # Additive attention mask, built in-kernel; broadcast hoisted out of the
    # layer/head loops (JAX does not CSE broadcast_in_dim).
    mask_add = (1.0 - mask_ref[...]) * -1e9                 # (B, S) over keys
    mask_b = jnp.broadcast_to(mask_add[:, None, :], (B, S, S))

    # ---- BERT encoder layers (fully unrolled; N_LAYERS is small) ----
    for l in range(N_LAYERS):
        r = 2 + l * 8
        # Fused QKV projection: one [B*S, H] x [H, 3H] matmul.
        qkv = (jnp.dot(x2, wqkv_ref[l], preferred_element_type=jnp.float32)
               + vec(r + 0, 3 * H))
        q3 = qkv[:, 0 * H:1 * H].reshape(B, S, H)
        k3 = qkv[:, 1 * H:2 * H].reshape(B, S, H)
        v3 = qkv[:, 2 * H:3 * H].reshape(B, S, H)

        # Per-head attention; contexts concatenated back to (B*S, H) so the
        # output projection is ONE K=32 matmul (no partial-matmul accumulator).
        ctxs = []
        for hd in range(N_HEADS):
            sl = slice(hd * dH, (hd + 1) * dH)
            s = jnp.einsum("bqd,bkd->bqk", q3[:, :, sl], k3[:, :, sl],
                           preferred_element_type=jnp.float32) * scale
            s = s + mask_b
            m = jnp.max(s, axis=-1, keepdims=True)
            e = jnp.exp(s - m)
            p = e * pl.reciprocal(jnp.sum(e, axis=-1, keepdims=True),
                                  approx=True)
            ctxs.append(jnp.einsum("bqk,bkd->bqd", p, v3[:, :, sl],
                                   preferred_element_type=jnp.float32))
        ctx_all = jnp.concatenate(ctxs, axis=-1).reshape(B * S, H)
        attn_out = (jnp.dot(ctx_all, wo_ref[l],
                            preferred_element_type=jnp.float32)
                    + vec(r + 1, H))
        x2 = _layernorm(x2 + attn_out, vec(r + 2, H), vec(r + 3, H))

        # Feed-forward block.
        ffn = (jnp.dot(x2, w1_ref[l], preferred_element_type=jnp.float32)
               + vec(r + 4, INTERMEDIATE))
        # TODO(synk): HF/PyTorch BERT uses exact (erf) GELU; tanh approximation used here.
        ffn = jax.nn.gelu(ffn, approximate=True)
        ffn = (jnp.dot(ffn, w2_ref[l], preferred_element_type=jnp.float32)
               + vec(r + 5, H))
        x2 = _layernorm(x2 + ffn, vec(r + 6, H), vec(r + 7, H))

    # ---- LSTM over the BERT sequence output (batch_first=True) ----
    # Time-major relayout ONCE so each recurrence step reads a contiguous
    # sublane block; input projection for ALL timesteps is one matmul.
    x_tm = x2.reshape(B, S, H).transpose(1, 0, 2).reshape(S * B, H)
    wih = lstm_w_ref[0:H, :]
    whh = lstm_w_ref[H:2 * H, :]
    gates_x = (jnp.dot(x_tm, wih, preferred_element_type=jnp.float32)
               + vec(2 + 8 * N_LAYERS, 4 * H))               # (S*B, 4H)

    h = jnp.zeros((B, H), jnp.float32)
    c = jnp.zeros((B, H), jnp.float32)
    hs = []
    for t in range(S):
        gates = gates_x[t * B:(t + 1) * B, :] + jnp.dot(
            h, whh, preferred_element_type=jnp.float32)
        sig = jax.nn.sigmoid(gates)             # full (B, 4H) slab at once
        g = jnp.tanh(gates[:, 2 * H:3 * H])     # only g slice redone with tanh
        i_g = sig[:, 0 * H:1 * H]
        f_g = sig[:, 1 * H:2 * H]
        o_g = sig[:, 3 * H:4 * H]
        c = f_g * c + i_g * g
        h = o_g * jnp.tanh(c)
        hs.append(h)

    # Single lane-dense store: (B, S*H) = (2, 256); no per-timestep masked vst.
    o_ref[...] = jnp.concatenate(hs, axis=-1)


# ---------------- model wrapper (one pallas_call) ----------------
def bert_lstm_forward(params, ids, attention_mask=None):
    B, S = ids.shape
    # Embedding gather stays in plain JAX (single XLA gather on tiny tables).
    emb = (params["word_emb"][ids]
           + params["pos_emb"][:S][None, :, :]
           + params["type_emb"][0][None, None, :])

    if attention_mask is None:
        attention_mask = jnp.ones((B, S), jnp.float32)
    mask = attention_mask.astype(jnp.float32)   # additive mask built in-kernel

    kernel = functools.partial(_bert_lstm_kernel, B=B, S=S)
    out = pl.pallas_call(
        kernel,
        out_shape=jax.ShapeDtypeStruct((B, S * HIDDEN), jnp.float32),
        in_specs=[_VMEM] * 8,
        out_specs=_VMEM,
    )(emb, mask, params["vecs"],
      params["wqkv"], params["wo"], params["w1"], params["w2"],
      params["lstm_w"])
    return out.reshape(B, S, HIDDEN)            # free reshape of lane-dense slab


# ---------------- deterministic synthetic parameters ----------------
def init_params(key):
    keys = iter(jax.random.split(key, 64))

    def dense(shape):
        return jax.random.normal(next(keys), shape, jnp.float32) * 0.02

    def row(v):
        v = jnp.asarray(v, jnp.float32).reshape(-1)
        return jnp.pad(v, (0, VEC_W - v.shape[0]))

    p = {
        "word_emb": dense((VOCAB, HIDDEN)),
        "pos_emb": dense((MAX_POS, HIDDEN)),
        "type_emb": dense((2, HIDDEN)),
    }

    # Packed bias / LayerNorm vector slab: one row (<=128 wide) per vector.
    vec_rows = [row(jnp.ones((HIDDEN,))),    # emb LN gamma
                row(jnp.zeros((HIDDEN,)))]   # emb LN beta

    wqkv, wo, w1, w2 = [], [], [], []
    for _ in range(N_LAYERS):
        # Q|K|V weights pre-concatenated along the output dim -> one matmul.
        wqkv.append(dense((HIDDEN, 3 * HIDDEN)))
        wo.append(dense((HIDDEN, HIDDEN)))
        w1.append(dense((HIDDEN, INTERMEDIATE)))
        w2.append(dense((INTERMEDIATE, HIDDEN)))
        vec_rows.append(row(jnp.zeros((3 * HIDDEN,))))      # bqkv
        vec_rows.append(row(jnp.zeros((HIDDEN,))))          # bo
        vec_rows.append(row(jnp.ones((HIDDEN,))))           # ln1 gamma
        vec_rows.append(row(jnp.zeros((HIDDEN,))))          # ln1 beta
        vec_rows.append(row(jnp.zeros((INTERMEDIATE,))))    # b1
        vec_rows.append(row(jnp.zeros((HIDDEN,))))          # b2
        vec_rows.append(row(jnp.ones((HIDDEN,))))           # ln2 gamma
        vec_rows.append(row(jnp.zeros((HIDDEN,))))          # ln2 beta

    # torch.nn.LSTM: gates = x W_ih^T + b_ih + h W_hh^T + b_hh; gate order
    # i, f, g, o.  Single combined bias row (= b_ih + b_hh).
    vec_rows.append(row(jnp.zeros((4 * HIDDEN,))))          # lstm bias

    p["vecs"] = jnp.stack(vec_rows)                         # (VEC_ROWS, 128)
    assert p["vecs"].shape == (VEC_ROWS, VEC_W)

    p["wqkv"] = jnp.stack(wqkv)
    p["wo"] = jnp.stack(wo)
    p["w1"] = jnp.stack(w1)
    p["w2"] = jnp.stack(w2)
    # LSTM weights stored pre-transposed ([in, 4H]) and stacked [W_ih^T ; W_hh^T].
    p["lstm_w"] = jnp.concatenate([dense((HIDDEN, 4 * HIDDEN)),
                                   dense((HIDDEN, 4 * HIDDEN))], axis=0)
    return p


if __name__ == "__main__":
    key = jax.random.PRNGKey(0)
    B, S = 2, 8
    pkey, ikey = jax.random.split(key)
    params = init_params(pkey)
    token_ids = jax.random.randint(ikey, (B, S), 0, VOCAB, dtype=jnp.int32)
    attn_mask = jnp.ones((B, S), jnp.float32)

    fwd = jax.jit(bert_lstm_forward)
    out = fwd(params, token_ids, attention_mask=attn_mask)
    out = jax.block_until_ready(out)
    assert out.shape == (B, S, HIDDEN), out.shape
    assert jnp.all(jnp.isfinite(out))
    print("KERNEL_OK")
</pallas_src>

<mosaic_0001>
module attributes {stable_mosaic.version = 11 : i64} {
  func.func @_bert_lstm_kernel(%arg0: memref<2x8x32xf32, #tpu.memory_space<vmem>>, %arg1: memref<2x8xf32, #tpu.memory_space<vmem>>, %arg2: memref<19x128xf32, #tpu.memory_space<vmem>>, %arg3: memref<2x32x96xf32, #tpu.memory_space<vmem>>, %arg4: memref<2x32x32xf32, #tpu.memory_space<vmem>>, %arg5: memref<2x32x64xf32, #tpu.memory_space<vmem>>, %arg6: memref<2x64x32xf32, #tpu.memory_space<vmem>>, %arg7: memref<64x128xf32, #tpu.memory_space<vmem>>, %arg8: memref<2x256xf32, #tpu.memory_space<vmem>>) attributes {dimension_semantics = [], scalar_prefetch = 0 : i64, scratch_operands = 0 : i64, tpu.core_type = #tpu.core_type<tc>} {
    %c0 = arith.constant 0 : index
    %c0_0 = arith.constant 0 : index
    %c0_1 = arith.constant 0 : index
    %0 = vector.load %arg0[%c0, %c0_0, %c0_1] : memref<2x8x32xf32, #tpu.memory_space<vmem>>, vector<2x8x32xf32>
    %1 = vector.shape_cast %0 : vector<2x8x32xf32> to vector<16x32xf32>
    %c0_2 = arith.constant 0 : index
    %c0_3 = arith.constant 0 : index
    %2 = vector.load %arg2[%c0_2, %c0_3] : memref<19x128xf32, #tpu.memory_space<vmem>>, vector<1x32xf32>
    %c1 = arith.constant 1 : index
    %c0_4 = arith.constant 0 : index
    %3 = vector.load %arg2[%c1, %c0_4] : memref<19x128xf32, #tpu.memory_space<vmem>>, vector<1x32xf32>
    %4 = arith.mulf %1, %1 : vector<16x32xf32>
    %5 = tpu.concatenate %1, %4 in 0 : vector<16x32xf32>, vector<16x32xf32> -> vector<32x32xf32>
    %cst = arith.constant dense<0.000000e+00> : vector<32xf32>
    %6 = vector.multi_reduction <add>, %5, %cst [1] : vector<32x32xf32> to vector<32xf32>
    %7 = vector.shape_cast %6 : vector<32xf32> to vector<32x1xf32>
    %cst_5 = arith.constant 3.125000e-02 : f32
    %8 = vector.broadcast %cst_5 : f32 to vector<32x1xf32>
    %9 = arith.mulf %7, %8 : vector<32x1xf32>
    %10 = vector.extract_strided_slice %9 {offsets = [0, 0], sizes = [16, 1], strides = [1, 1]} : vector<32x1xf32> to vector<16x1xf32>
    %11 = vector.extract_strided_slice %9 {offsets = [16, 0], sizes = [16, 1], strides = [1, 1]} : vector<32x1xf32> to vector<16x1xf32>
    %12 = arith.mulf %10, %10 : vector<16x1xf32>
    %13 = arith.subf %11, %12 : vector<16x1xf32>
    %cst_6 = arith.constant 0.000000e+00 : f32
    %14 = vector.broadcast %cst_6 : f32 to vector<16x1xf32>
    %15 = arith.maximumf %13, %14 : vector<16x1xf32>
    %16 = vector.broadcast %10 : vector<16x1xf32> to vector<16x32xf32>
    %17 = arith.subf %1, %16 : vector<16x32xf32>
    %cst_7 = arith.constant 9.99999996E-13 : f32
    %18 = vector.broadcast %cst_7 : f32 to vector<16x1xf32>
    %19 = arith.addf %15, %18 : vector<16x1xf32>
    %20 = math.rsqrt %19 : vector<16x1xf32>
    %21 = vector.broadcast %20 : vector<16x1xf32> to vector<16x32xf32>
    %22 = arith.mulf %17, %21 : vector<16x32xf32>
    %23 = vector.broadcast %2 : vector<1x32xf32> to vector<16x32xf32>
    %24 = arith.mulf %22, %23 : vector<16x32xf32>
    %25 = vector.broadcast %3 : vector<1x32xf32> to vector<16x32xf32>
    %26 = arith.addf %24, %25 : vector<16x32xf32>
    %c0_8 = arith.constant 0 : index
    %c0_9 = arith.constant 0 : index
    %27 = vector.load %arg1[%c0_8, %c0_9] : memref<2x8xf32, #tpu.memory_space<vmem>>, vector<2x8xf32>
    %cst_10 = arith.constant 1.000000e+00 : f32
    %28 = vector.broadcast %cst_10 : f32 to vector<2x8xf32>
    %29 = arith.subf %28, %27 : vector<2x8xf32>
    %cst_11 = arith.constant -1.000000e+09 : f32
    %30 = vector.broadcast %cst_11 : f32 to vector<2x8xf32>
    %31 = arith.mulf %29, %30 : vector<2x8xf32>
    %32 = vector.shape_cast %31 : vector<2x8xf32> to vector<2x1x8xf32>
    %33 = vector.shape_cast %32 : vector<2x1x8xf32> to vector<2x1x8xf32>
    %34 = vector.broadcast %33 : vector<2x1x8xf32> to vector<2x8x8xf32>
    %c0_12 = arith.constant 0 : index
    %c0_13 = arith.constant 0 : index
    %c0_14 = arith.constant 0 : index
    %35 = vector.load %arg3[%c0_12, %c0_13, %c0_14] : memref<2x32x96xf32, #tpu.memory_space<vmem>>, vector<1x32x96xf32>
    %36 = vector.shape_cast %35 : vector<1x32x96xf32> to vector<32x96xf32>
    %cst_15 = arith.constant dense<0.000000e+00> : vector<16x96xf32>
    %37 = tpu.matmul %26, %36, %cst_15 {dimension_numbers = #tpu.dot_dimension_numbers<[1], [0], [0], [1], [0, 0, 1, 1], [], []>} : vector<16x32xf32>, vector<32x96xf32>, vector<16x96xf32> -> vector<16x96xf32>
    %c2 = arith.constant 2 : index
    %c0_16 = arith.constant 0 : index
    %38 = vector.load %arg2[%c2, %c0_16] : memref<19x128xf32, #tpu.memory_space<vmem>>, vector<1x96xf32>
    %39 = vector.broadcast %38 : vector<1x96xf32> to vector<16x96xf32>
    %40 = arith.addf %37, %39 : vector<16x96xf32>
    %41 = vector.extract_strided_slice %40 {offsets = [0, 0], sizes = [16, 32], strides = [1, 1]} : vector<16x96xf32> to vector<16x32xf32>
    %42 = vector.shape_cast %41 : vector<16x32xf32> to vector<2x8x32xf32>
    %43 = vector.extract_strided_slice %40 {offsets = [0, 32], sizes = [16, 32], strides = [1, 1]} : vector<16x96xf32> to vector<16x32xf32>
    %44 = vector.shape_cast %43 : vector<16x32xf32> to vector<2x8x32xf32>
    %45 = vector.extract_strided_slice %40 {offsets = [0, 64], sizes = [16, 32], strides = [1, 1]} : vector<16x96xf32> to vector<16x32xf32>
    %46 = vector.shape_cast %45 : vector<16x32xf32> to vector<2x8x32xf32>
    %47 = vector.extract_strided_slice %42 {offsets = [0, 0, 0], sizes = [2, 8, 16], strides = [1, 1, 1]} : vector<2x8x32xf32> to vector<2x8x16xf32>
    %48 = vector.extract_strided_slice %44 {offsets = [0, 0, 0], sizes = [2, 8, 16], strides = [1, 1, 1]} : vector<2x8x32xf32> to vector<2x8x16xf32>
    "tpu.trace_start"() <{level = 10 : i32, message = "bqd,bkd->bqk"}> : () -> ()
    %cst_17 = arith.constant dense<0.000000e+00> : vector<2x8x8xf32>
    %49 = tpu.matmul %47, %48, %cst_17 {dimension_numbers = #tpu.dot_dimension_numbers<[2], [2], [1], [1], [0, 0, 0, 1, 1, 1], [0], [0]>} : vector<2x8x16xf32>, vector<2x8x16xf32>, vector<2x8x8xf32> -> vector<2x8x8xf32>
    "tpu.trace_stop"() : () -> ()
    %cst_18 = arith.constant 2.500000e-01 : f32
    %50 = vector.broadcast %cst_18 : f32 to vector<2x8x8xf32>
    %51 = arith.mulf %49, %50 : vector<2x8x8xf32>
    %52 = arith.addf %51, %34 : vector<2x8x8xf32>
    %cst_19 = arith.constant dense<0xFF800000> : vector<2x8xf32>
    %53 = vector.multi_reduction <maximumf>, %52, %cst_19 [2] : vector<2x8x8xf32> to vector<2x8xf32>
    %54 = vector.shape_cast %53 : vector<2x8xf32> to vector<2x8x1xf32>
    %55 = vector.broadcast %54 : vector<2x8x1xf32> to vector<2x8x8xf32>
    %56 = arith.subf %52, %55 : vector<2x8x8xf32>
    %57 = math.exp %56 : vector<2x8x8xf32>
    %cst_20 = arith.constant dense<0.000000e+00> : vector<2x8xf32>
    %58 = vector.multi_reduction <add>, %57, %cst_20 [2] : vector<2x8x8xf32> to vector<2x8xf32>
    %59 = vector.shape_cast %58 : vector<2x8xf32> to vector<2x8x1xf32>
    %60 = tpu.reciprocal %59 {approx = true} : vector<2x8x1xf32> -> vector<2x8x1xf32>
    %61 = vector.broadcast %60 : vector<2x8x1xf32> to vector<2x8x8xf32>
    %62 = arith.mulf %57, %61 : vector<2x8x8xf32>
    %63 = vector.extract_strided_slice %46 {offsets = [0, 0, 0], sizes = [2, 8, 16], strides = [1, 1, 1]} : vector<2x8x32xf32> to vector<2x8x16xf32>
    "tpu.trace_start"() <{level = 10 : i32, message = "bqk,bkd->bqd"}> : () -> ()
    %cst_21 = arith.constant dense<0.000000e+00> : vector<2x8x16xf32>
    %64 = tpu.matmul %62, %63, %cst_21 {dimension_numbers = #tpu.dot_dimension_numbers<[2], [1], [1], [2], [0, 0, 0, 1, 1, 2], [0], [0]>} : vector<2x8x8xf32>, vector<2x8x16xf32>, vector<2x8x16xf32> -> vector<2x8x16xf32>
    "tpu.trace_stop"() : () -> ()
    %65 = vector.extract_strided_slice %42 {offsets = [0, 0, 16], sizes = [2, 8, 16], strides = [1, 1, 1]} : vector<2x8x32xf32> to vector<2x8x16xf32>
    %66 = vector.extract_strided_slice %44 {offsets = [0, 0, 16], sizes = [2, 8, 16], strides = [1, 1, 1]} : vector<2x8x32xf32> to vector<2x8x16xf32>
    "tpu.trace_start"() <{level = 10 : i32, message = "bqd,bkd->bqk"}> : () -> ()
    %cst_22 = arith.constant dense<0.000000e+00> : vector<2x8x8xf32>
    %67 = tpu.matmul %65, %66, %cst_22 {dimension_numbers = #tpu.dot_dimension_numbers<[2], [2], [1], [1], [0, 0, 0, 1, 1, 1], [0], [0]>} : vector<2x8x16xf32>, vector<2x8x16xf32>, vector<2x8x8xf32> -> vector<2x8x8xf32>
    "tpu.trace_stop"() : () -> ()
    %cst_23 = arith.constant 2.500000e-01 : f32
    %68 = vector.broadcast %cst_23 : f32 to vector<2x8x8xf32>
    %69 = arith.mulf %67, %68 : vector<2x8x8xf32>
    %70 = arith.addf %69, %34 : vector<2x8x8xf32>
    %cst_24 = arith.constant dense<0xFF800000> : vector<2x8xf32>
    %71 = vector.multi_reduction <maximumf>, %70, %cst_24 [2] : vector<2x8x8xf32> to vector<2x8xf32>
    %72 = vector.shape_cast %71 : vector<2x8xf32> to vector<2x8x1xf32>
    %73 = vector.broadcast %72 : vector<2x8x1xf32> to vector<2x8x8xf32>
    %74 = arith.subf %70, %73 : vector<2x8x8xf32>
    %75 = math.exp %74 : vector<2x8x8xf32>
    %cst_25 = arith.constant dense<0.000000e+00> : vector<2x8xf32>
    %76 = vector.multi_reduction <add>, %75, %cst_25 [2] : vector<2x8x8xf32> to vector<2x8xf32>
    %77 = vector.shape_cast %76 : vector<2x8xf32> to vector<2x8x1xf32>
    %78 = tpu.reciprocal %77 {approx = true} : vector<2x8x1xf32> -> vector<2x8x1xf32>
    %79 = vector.broadcast %78 : vector<2x8x1xf32> to vector<2x8x8xf32>
    %80 = arith.mulf %75, %79 : vector<2x8x8xf32>
    %81 = vector.extract_strided_slice %46 {offsets = [0, 0, 16], sizes = [2, 8, 16], strides = [1, 1, 1]} : vector<2x8x32xf32> to vector<2x8x16xf32>
    "tpu.trace_start"() <{level = 10 : i32, message = "bqk,bkd->bqd"}> : () -> ()
    %cst_26 = arith.constant dense<0.000000e+00> : vector<2x8x16xf32>
    %82 = tpu.matmul %80, %81, %cst_26 {dimension_numbers = #tpu.dot_dimension_numbers<[2], [1], [1], [2], [0, 0, 0, 1, 1, 2], [0], [0]>} : vector<2x8x8xf32>, vector<2x8x16xf32>, vector<2x8x16xf32> -> vector<2x8x16xf32>
    "tpu.trace_stop"() : () -> ()
    %83 = tpu.concatenate %64, %82 in 2 : vector<2x8x16xf32>, vector<2x8x16xf32> -> vector<2x8x32xf32>
    %84 = vector.shape_cast %83 : vector<2x8x32xf32> to vector<16x32xf32>
    %c0_27 = arith.constant 0 : index
    %c0_28 = arith.constant 0 : index
    %c0_29 = arith.constant 0 : index
    %85 = vector.load %arg4[%c0_27, %c0_28, %c0_29] : memref<2x32x32xf32, #tpu.memory_space<vmem>>, vector<1x32x32xf32>
    %86 = vector.shape_cast %85 : vector<1x32x32xf32> to vector<32x32xf32>
    %cst_30 = arith.constant dense<0.000000e+00> : vector<16x32xf32>
    %87 = tpu.matmul %84, %86, %cst_30 {dimension_numbers = #tpu.dot_dimension_numbers<[1], [0], [0], [1], [0, 0, 1, 1], [], []>} : vector<16x32xf32>, vector<32x32xf32>, vector<16x32xf32> -> vector<16x32xf32>
    %c3 = arith.constant 3 : index
    %c0_31 = arith.constant 0 : index
    %88 = vector.load %arg2[%c3, %c0_31] : memref<19x128xf32, #tpu.memory_space<vmem>>, vector<1x32xf32>
    %89 = vector.broadcast %88 : vector<1x32xf32> to vector<16x32xf32>
    %90 = arith.addf %87, %89 : vector<16x32xf32>
    %91 = arith.addf %26, %90 : vector<16x32xf32>
    %c4 = arith.constant 4 : index
    %c0_32 = arith.constant 0 : index
    %92 = vector.load %arg2[%c4, %c0_32] : memref<19x128xf32, #tpu.memory_space<vmem>>, vector<1x32xf32>
    %c5 = arith.constant 5 : index
    %c0_33 = arith.constant 0 : index
    %93 = vector.load %arg2[%c5, %c0_33] : memref<19x128xf32, #tpu.memory_space<vmem>>, vector<1x32xf32>
    %94 = arith.mulf %91, %91 : vector<16x32xf32>
    %95 = tpu.concatenate %91, %94 in 0 : vector<16x32xf32>, vector<16x32xf32> -> vector<32x32xf32>
    %cst_34 = arith.constant dense<0.000000e+00> : vector<32xf32>
    %96 = vector.multi_reduction <add>, %95, %cst_34 [1] : vector<32x32xf32> to vector<32xf32>
    %97 = vector.shape_cast %96 : vector<32xf32> to vector<32x1xf32>
    %cst_35 = arith.constant 3.125000e-02 : f32
    %98 = vector.broadcast %cst_35 : f32 to vector<32x1xf32>
    %99 = arith.mulf %97, %98 : vector<32x1xf32>
    %100 = vector.extract_strided_slice %99 {offsets = [0, 0], sizes = [16, 1], strides = [1, 1]} : vector<32x1xf32> to vector<16x1xf32>
    %101 = vector.extract_strided_slice %99 {offsets = [16, 0], sizes = [16, 1], strides = [1, 1]} : vector<32x1xf32> to vector<16x1xf32>
    %102 = arith.mulf %100, %100 : vector<16x1xf32>
    %103 = arith.subf %101, %102 : vector<16x1xf32>
    %cst_36 = arith.constant 0.000000e+00 : f32
    %104 = vector.broadcast %cst_36 : f32 to vector<16x1xf32>
    %105 = arith.maximumf %103, %104 : vector<16x1xf32>
    %106 = vector.broadcast %100 : vector<16x1xf32> to vector<16x32xf32>
    %107 = arith.subf %91, %106 : vector<16x32xf32>
    %cst_37 = arith.constant 9.99999996E-13 : f32
    %108 = vector.broadcast %cst_37 : f32 to vector<16x1xf32>
    %109 = arith.addf %105, %108 : vector<16x1xf32>
    %110 = math.rsqrt %109 : vector<16x1xf32>
    %111 = vector.broadcast %110 : vector<16x1xf32> to vector<16x32xf32>
    %112 = arith.mulf %107, %111 : vector<16x32xf32>
    %113 = vector.broadcast %92 : vector<1x32xf32> to vector<16x32xf32>
    %114 = arith.mulf %112, %113 : vector<16x32xf32>
    %115 = vector.broadcast %93 : vector<1x32xf32> to vector<16x32xf32>
    %116 = arith.addf %114, %115 : vector<16x32xf32>
    %c0_38 = arith.constant 0 : index
    %c0_39 = arith.constant 0 : index
    %c0_40 = arith.constant 0 : index
    %117 = vector.load %arg5[%c0_38, %c0_39, %c0_40] : memref<2x32x64xf32, #tpu.memory_space<vmem>>, vector<1x32x64xf32>
    %118 = vector.shape_cast %117 : vector<1x32x64xf32> to vector<32x64xf32>
    %cst_41 = arith.constant dense<0.000000e+00> : vector<16x64xf32>
    %119 = tpu.matmul %116, %118, %cst_41 {dimension_numbers = #tpu.dot_dimension_numbers<[1], [0], [0], [1], [0, 0, 1, 1], [], []>} : vector<16x32xf32>, vector<32x64xf32>, vector<16x64xf32> -> vector<16x64xf32>
    %c6 = arith.constant 6 : index
    %c0_42 = arith.constant 0 : index
    %120 = vector.load %arg2[%c6, %c0_42] : memref<19x128xf32, #tpu.memory_space<vmem>>, vector<1x64xf32>
    %121 = vector.broadcast %120 : vector<1x64xf32> to vector<16x64xf32>
    %122 = arith.addf %119, %121 : vector<16x64xf32>
    %123 = arith.mulf %122, %122 : vector<16x64xf32>
    %124 = arith.mulf %122, %123 : vector<16x64xf32>
    %cst_43 = arith.constant 4.471500e-02 : f32
    %125 = vector.broadcast %cst_43 : f32 to vector<16x64xf32>
    %126 = arith.mulf %125, %124 : vector<16x64xf32>
    %127 = arith.addf %122, %126 : vector<16x64xf32>
    %cst_44 = arith.constant 0.797884583 : f32
    %128 = vector.broadcast %cst_44 : f32 to vector<16x64xf32>
    %129 = arith.mulf %128, %127 : vector<16x64xf32>
    %130 = math.tanh %129 : vector<16x64xf32>
    %cst_45 = arith.constant 1.000000e+00 : f32
    %131 = vector.broadcast %cst_45 : f32 to vector<16x64xf32>
    %132 = arith.addf %131, %130 : vector<16x64xf32>
    %cst_46 = arith.constant 5.000000e-01 : f32
    %133 = vector.broadcast %cst_46 : f32 to vector<16x64xf32>
    %134 = arith.mulf %133, %132 : vector<16x64xf32>
    %135 = arith.mulf %122, %134 : vector<16x64xf32>
    %c0_47 = arith.constant 0 : index
    %c0_48 = arith.constant 0 : index
    %c0_49 = arith.constant 0 : index
    %136 = vector.load %arg6[%c0_47, %c0_48, %c0_49] : memref<2x64x32xf32, #tpu.memory_space<vmem>>, vector<1x64x32xf32>
    %137 = vector.shape_cast %136 : vector<1x64x32xf32> to vector<64x32xf32>
    %cst_50 = arith.constant dense<0.000000e+00> : vector<16x32xf32>
    %138 = tpu.matmul %135, %137, %cst_50 {dimension_numbers = #tpu.dot_dimension_numbers<[1], [0], [0], [1], [0, 0, 1, 1], [], []>} : vector<16x64xf32>, vector<64x32xf32>, vector<16x32xf32> -> vector<16x32xf32>
    %c7 = arith.constant 7 : index
    %c0_51 = arith.constant 0 : index
    %139 = vector.load %arg2[%c7, %c0_51] : memref<19x128xf32, #tpu.memory_space<vmem>>, vector<1x32xf32>
    %140 = vector.broadcast %139 : vector<1x32xf32> to vector<16x32xf32>
    %141 = arith.addf %138, %140 : vector<16x32xf32>
    %142 = arith.addf %116, %141 : vector<16x32xf32>
    %c8 = arith.constant 8 : index
    %c0_52 = arith.constant 0 : index
    %143 = vector.load %arg2[%c8, %c0_52] : memref<19x128xf32, #tpu.memory_space<vmem>>, vector<1x32xf32>
    %c9 = arith.constant 9 : index
    %c0_53 = arith.constant 0 : index
    %144 = vector.load %arg2[%c9, %c0_53] : memref<19x128xf32, #tpu.memory_space<vmem>>, vector<1x32xf32>
    %145 = arith.mulf %142, %142 : vector<16x32xf32>
    %146 = tpu.concatenate %142, %145 in 0 : vector<16x32xf32>, vector<16x32xf32> -> vector<32x32xf32>
    %cst_54 = arith.constant dense<0.000000e+00> : vector<32xf32>
    %147 = vector.multi_reduction <add>, %146, %cst_54 [1] : vector<32x32xf32> to vector<32xf32>
    %148 = vector.shape_cast %147 : vector<32xf32> to vector<32x1xf32>
    %cst_55 = arith.constant 3.125000e-02 : f32
    %149 = vector.broadcast %cst_55 : f32 to vector<32x1xf32>
    %150 = arith.mulf %148, %149 : vector<32x1xf32>
    %151 = vector.extract_strided_slice %150 {offsets = [0, 0], sizes = [16, 1], strides = [1, 1]} : vector<32x1xf32> to vector<16x1xf32>
    %152 = vector.extract_strided_slice %150 {offsets = [16, 0], sizes = [16, 1], strides = [1, 1]} : vector<32x1xf32> to vector<16x1xf32>
    %153 = arith.mulf %151, %151 : vector<16x1xf32>
    %154 = arith.subf %152, %153 : vector<16x1xf32>
    %cst_56 = arith.constant 0.000000e+00 : f32
    %155 = vector.broadcast %cst_56 : f32 to vector<16x1xf32>
    %156 = arith.maximumf %154, %155 : vector<16x1xf32>
    %157 = vector.broadcast %151 : vector<16x1xf32> to vector<16x32xf32>
    %158 = arith.subf %142, %157 : vector<16x32xf32>
    %cst_57 = arith.constant 9.99999996E-13 : f32
    %159 = vector.broadcast %cst_57 : f32 to vector<16x1xf32>
    %160 = arith.addf %156, %159 : vector<16x1xf32>
    %161 = math.rsqrt %160 : vector<16x1xf32>
    %162 = vector.broadcast %161 : vector<16x1xf32> to vector<16x32xf32>
    %163 = arith.mulf %158, %162 : vector<16x32xf32>
    %164 = vector.broadcast %143 : vector<1x32xf32> to vector<16x32xf32>
    %165 = arith.mulf %163, %164 : vector<16x32xf32>
    %166 = vector.broadcast %144 : vector<1x32xf32> to vector<16x32xf32>
    %167 = arith.addf %165, %166 : vector<16x32xf32>
    %c1_58 = arith.constant 1 : index
    %c0_59 = arith.constant 0 : index
    %c0_60 = arith.constant 0 : index
    %168 = vector.load %arg3[%c1_58, %c0_59, %c0_60] : memref<2x32x96xf32, #tpu.memory_space<vmem>>, vector<1x32x96xf32>
    %169 = vector.shape_cast %168 : vector<1x32x96xf32> to vector<32x96xf32>
    %cst_61 = arith.constant dense<0.000000e+00> : vector<16x96xf32>
    %170 = tpu.matmul %167, %169, %cst_61 {dimension_numbers = #tpu.dot_dimension_numbers<[1], [0], [0], [1], [0, 0, 1, 1], [], []>} : vector<16x32xf32>, vector<32x96xf32>, vector<16x96xf32> -> vector<16x96xf32>
    %c10 = arith.constant 10 : index
    %c0_62 = arith.constant 0 : index
    %171 = vector.load %arg2[%c10, %c0_62] : memref<19x128xf32, #tpu.memory_space<vmem>>, vector<1x96xf32>
    %172 = vector.broadcast %171 : vector<1x96xf32> to vector<16x96xf32>
    %173 = arith.addf %170, %172 : vector<16x96xf32>
    %174 = vector.extract_strided_slice %173 {offsets = [0, 0], sizes = [16, 32], strides = [1, 1]} : vector<16x96xf32> to vector<16x32xf32>
    %175 = vector.shape_cast %174 : vector<16x32xf32> to vector<2x8x32xf32>
    %176 = vector.extract_strided_slice %173 {offsets = [0, 32], sizes = [16, 32], strides = [1, 1]} : vector<16x96xf32> to vector<16x32xf32>
    %177 = vector.shape_cast %176 : vector<16x32xf32> to vector<2x8x32xf32>
    %178 = vector.extract_strided_slice %173 {offsets = [0, 64], sizes = [16, 32], strides = [1, 1]} : vector<16x96xf32> to vector<16x32xf32>
    %179 = vector.shape_cast %178 : vector<16x32xf32> to vector<2x8x32xf32>
    %180 = vector.extract_strided_slice %175 {offsets = [0, 0, 0], sizes = [2, 8, 16], strides = [1, 1, 1]} : vector<2x8x32xf32> to vector<2x8x16xf32>
    %181 = vector.extract_strided_slice %177 {offsets = [0, 0, 0], sizes = [2, 8, 16], strides = [1, 1, 1]} : vector<2x8x32xf32> to vector<2x8x16xf32>
    "tpu.trace_start"() <{level = 10 : i32, message = "bqd,bkd->bqk"}> : () -> ()
    %cst_63 = arith.constant dense<0.000000e+00> : vector<2x8x8xf32>
    %182 = tpu.matmul %180, %181, %cst_63 {dimension_numbers = #tpu.dot_dimension_numbers<[2], [2], [1], [1], [0, 0, 0, 1, 1, 1], [0], [0]>} : vector<2x8x16xf32>, vector<2x8x16xf32>, vector<2x8x8xf32> -> vector<2x8x8xf32>
    "tpu.trace_stop"() : () -> ()
    %cst_64 = arith.constant 2.500000e-01 : f32
    %183 = vector.broadcast %cst_64 : f32 to vector<2x8x8xf32>
    %184 = arith.mulf %182, %183 : vector<2x8x8xf32>
    %185 = arith.addf %184, %34 : vector<2x8x8xf32>
    %cst_65 = arith.constant dense<0xFF800000> : vector<2x8xf32>
    %186 = vector.multi_reduction <maximumf>, %185, %cst_65 [2] : vector<2x8x8xf32> to vector<2x8xf32>
    %187 = vector.shape_cast %186 : vector<2x8xf32> to vector<2x8x1xf32>
    %188 = vector.broadcast %187 : vector<2x8x1xf32> to vector<2x8x8xf32>
    %189 = arith.subf %185, %188 : vector<2x8x8xf32>
    %190 = math.exp %189 : vector<2x8x8xf32>
    %cst_66 = arith.constant dense<0.000000e+00> : vector<2x8xf32>
    %191 = vector.multi_reduction <add>, %190, %cst_66 [2] : vector<2x8x8xf32> to vector<2x8xf32>
    %192 = vector.shape_cast %191 : vector<2x8xf32> to vector<2x8x1xf32>
    %193 = tpu.reciprocal %192 {approx = true} : vector<2x8x1xf32> -> vector<2x8x1xf32>
    %194 = vector.broadcast %193 : vector<2x8x1xf32> to vector<2x8x8xf32>
    %195 = arith.mulf %190, %194 : vector<2x8x8xf32>
    %196 = vector.extract_strided_slice %179 {offsets = [0, 0, 0], sizes = [2, 8, 16], strides = [1, 1, 1]} : vector<2x8x32xf32> to vector<2x8x16xf32>
    "tpu.trace_start"() <{level = 10 : i32, message = "bqk,bkd->bqd"}> : () -> ()
    %cst_67 = arith.constant dense<0.000000e+00> : vector<2x8x16xf32>
    %197 = tpu.matmul %195, %196, %cst_67 {dimension_numbers = #tpu.dot_dimension_numbers<[2], [1], [1], [2], [0, 0, 0, 1, 1, 2], [0], [0]>} : vector<2x8x8xf32>, vector<2x8x16xf32>, vector<2x8x16xf32> -> vector<2x8x16xf32>
    "tpu.trace_stop"() : () -> ()
    %198 = vector.extract_strided_slice %175 {offsets = [0, 0, 16], sizes = [2, 8, 16], strides = [1, 1, 1]} : vector<2x8x32xf32> to vector<2x8x16xf32>
    %199 = vector.extract_strided_slice %177 {offsets = [0, 0, 16], sizes = [2, 8, 16], strides = [1, 1, 1]} : vector<2x8x32xf32> to vector<2x8x16xf32>
    "tpu.trace_start"() <{level = 10 : i32, message = "bqd,bkd->bqk"}> : () -> ()
    %cst_68 = arith.constant dense<0.000000e+00> : vector<2x8x8xf32>
    %200 = tpu.matmul %198, %199, %cst_68 {dimension_numbers = #tpu.dot_dimension_numbers<[2], [2], [1], [1], [0, 0, 0, 1, 1, 1], [0], [0]>} : vector<2x8x16xf32>, vector<2x8x16xf32>, vector<2x8x8xf32> -> vector<2x8x8xf32>
    "tpu.trace_stop"() : () -> ()
    %cst_69 = arith.constant 2.500000e-01 : f32
    %201 = vector.broadcast %cst_69 : f32 to vector<2x8x8xf32>
    %202 = arith.mulf %200, %201 : vector<2x8x8xf32>
    %203 = arith.addf %202, %34 : vector<2x8x8xf32>
    %cst_70 = arith.constant dense<0xFF800000> : vector<2x8xf32>
    %204 = vector.multi_reduction <maximumf>, %203, %cst_70 [2] : vector<2x8x8xf32> to vector<2x8xf32>
    %205 = vector.shape_cast %204 : vector<2x8xf32> to vector<2x8x1xf32>
    %206 = vector.broadcast %205 : vector<2x8x1xf32> to vector<2x8x8xf32>
    %207 = arith.subf %203, %206 : vector<2x8x8xf32>
    %208 = math.exp %207 : vector<2x8x8xf32>
    %cst_71 = arith.constant dense<0.000000e+00> : vector<2x8xf32>
    %209 = vector.multi_reduction <add>, %208, %cst_71 [2] : vector<2x8x8xf32> to vector<2x8xf32>
    %210 = vector.shape_cast %209 : vector<2x8xf32> to vector<2x8x1xf32>
    %211 = tpu.reciprocal %210 {approx = true} : vector<2x8x1xf32> -> vector<2x8x1xf32>
    %212 = vector.broadcast %211 : vector<2x8x1xf32> to vector<2x8x8xf32>
    %213 = arith.mulf %208, %212 : vector<2x8x8xf32>
    %214 = vector.extract_strided_slice %179 {offsets = [0, 0, 16], sizes = [2, 8, 16], strides = [1, 1, 1]} : vector<2x8x32xf32> to vector<2x8x16xf32>
    "tpu.trace_start"() <{level = 10 : i32, message = "bqk,bkd->bqd"}> : () -> ()
    %cst_72 = arith.constant dense<0.000000e+00> : vector<2x8x16xf32>
    %215 = tpu.matmul %213, %214, %cst_72 {dimension_numbers = #tpu.dot_dimension_numbers<[2], [1], [1], [2], [0, 0, 0, 1, 1, 2], [0], [0]>} : vector<2x8x8xf32>, vector<2x8x16xf32>, vector<2x8x16xf32> -> vector<2x8x16xf32>
    "tpu.trace_stop"() : () -> ()
    %216 = tpu.concatenate %197, %215 in 2 : vector<2x8x16xf32>, vector<2x8x16xf32> -> vector<2x8x32xf32>
    %217 = vector.shape_cast %216 : vector<2x8x32xf32> to vector<16x32xf32>
    %c1_73 = arith.constant 1 : index
    %c0_74 = arith.constant 0 : index
    %c0_75 = arith.constant 0 : index
    %218 = vector.load %arg4[%c1_73, %c0_74, %c0_75] : memref<2x32x32xf32, #tpu.memory_space<vmem>>, vector<1x32x32xf32>
    %219 = vector.shape_cast %218 : vector<1x32x32xf32> to vector<32x32xf32>
    %cst_76 = arith.constant dense<0.000000e+00> : vector<16x32xf32>
    %220 = tpu.matmul %217, %219, %cst_76 {dimension_numbers = #tpu.dot_dimension_numbers<[1], [0], [0], [1], [0, 0, 1, 1], [], []>} : vector<16x32xf32>, vector<32x32xf32>, vector<16x32xf32> -> vector<16x32xf32>
    %c11 = arith.constant 11 : index
    %c0_77 = arith.constant 0 : index
    %221 = vector.load %arg2[%c11, %c0_77] : memref<19x128xf32, #tpu.memory_space<vmem>>, vector<1x32xf32>
    %222 = vector.broadcast %221 : vector<1x32xf32> to vector<16x32xf32>
    %223 = arith.addf %220, %222 : vector<16x32xf32>
    %224 = arith.addf %167, %223 : vector<16x32xf32>
    %c12 = arith.constant 12 : index
    %c0_78 = arith.constant 0 : index
    %225 = vector.load %arg2[%c12, %c0_78] : memref<19x128xf32, #tpu.memory_space<vmem>>, vector<1x32xf32>
    %c13 = arith.constant 13 : index
    %c0_79 = arith.constant 0 : index
    %226 = vector.load %arg2[%c13, %c0_79] : memref<19x128xf32, #tpu.memory_space<vmem>>, vector<1x32xf32>
    %227 = arith.mulf %224, %224 : vector<16x32xf32>
    %228 = tpu.concatenate %224, %227 in 0 : vector<16x32xf32>, vector<16x32xf32> -> vector<32x32xf32>
    %cst_80 = arith.constant dense<0.000000e+00> : vector<32xf32>
    %229 = vector.multi_reduction <add>, %228, %cst_80 [1] : vector<32x32xf32> to vector<32xf32>
    %230 = vector.shape_cast %229 : vector<32xf32> to vector<32x1xf32>
    %cst_81 = arith.constant 3.125000e-02 : f32
    %231 = vector.broadcast %cst_81 : f32 to vector<32x1xf32>
    %232 = arith.mulf %230, %231 : vector<32x1xf32>
    %233 = vector.extract_strided_slice %232 {offsets = [0, 0], sizes = [16, 1], strides = [1, 1]} : vector<32x1xf32> to vector<16x1xf32>
    %234 = vector.extract_strided_slice %232 {offsets = [16, 0], sizes = [16, 1], strides = [1, 1]} : vector<32x1xf32> to vector<16x1xf32>
    %235 = arith.mulf %233, %233 : vector<16x1xf32>
    %236 = arith.subf %234, %235 : vector<16x1xf32>
    %cst_82 = arith.constant 0.000000e+00 : f32
    %237 = vector.broadcast %cst_82 : f32 to vector<16x1xf32>
    %238 = arith.maximumf %236, %237 : vector<16x1xf32>
    %239 = vector.broadcast %233 : vector<16x1xf32> to vector<16x32xf32>
    %240 = arith.subf %224, %239 : vector<16x32xf32>
    %cst_83 = arith.constant 9.99999996E-13 : f32
    %241 = vector.broadcast %cst_83 : f32 to vector<16x1xf32>
    %242 = arith.addf %238, %241 : vector<16x1xf32>
    %243 = math.rsqrt %242 : vector<16x1xf32>
    %244 = vector.broadcast %243 : vector<16x1xf32> to vector<16x32xf32>
    %245 = arith.mulf %240, %244 : vector<16x32xf32>
    %246 = vector.broadcast %225 : vector<1x32xf32> to vector<16x32xf32>
    %247 = arith.mulf %245, %246 : vector<16x32xf32>
    %248 = vector.broadcast %226 : vector<1x32xf32> to vector<16x32xf32>
    %249 = arith.addf %247, %248 : vector<16x32xf32>
    %c1_84 = arith.constant 1 : index
    %c0_85 = arith.constant 0 : index
    %c0_86 = arith.constant 0 : index
    %250 = vector.load %arg5[%c1_84, %c0_85, %c0_86] : memref<2x32x64xf32, #tpu.memory_space<vmem>>, vector<1x32x64xf32>
    %251 = vector.shape_cast %250 : vector<1x32x64xf32> to vector<32x64xf32>
    %cst_87 = arith.constant dense<0.000000e+00> : vector<16x64xf32>
    %252 = tpu.matmul %249, %251, %cst_87 {dimension_numbers = #tpu.dot_dimension_numbers<[1], [0], [0], [1], [0, 0, 1, 1], [], []>} : vector<16x32xf32>, vector<32x64xf32>, vector<16x64xf32> -> vector<16x64xf32>
    %c14 = arith.constant 14 : index
    %c0_88 = arith.constant 0 : index
    %253 = vector.load %arg2[%c14, %c0_88] : memref<19x128xf32, #tpu.memory_space<vmem>>, vector<1x64xf32>
    %254 = vector.broadcast %253 : vector<1x64xf32> to vector<16x64xf32>
    %255 = arith.addf %252, %254 : vector<16x64xf32>
    %256 = arith.mulf %255, %255 : vector<16x64xf32>
    %257 = arith.mulf %255, %256 : vector<16x64xf32>
    %cst_89 = arith.constant 4.471500e-02 : f32
    %258 = vector.broadcast %cst_89 : f32 to vector<16x64xf32>
    %259 = arith.mulf %258, %257 : vector<16x64xf32>
    %260 = arith.addf %255, %259 : vector<16x64xf32>
    %cst_90 = arith.constant 0.797884583 : f32
    %261 = vector.broadcast %cst_90 : f32 to vector<16x64xf32>
    %262 = arith.mulf %261, %260 : vector<16x64xf32>
    %263 = math.tanh %262 : vector<16x64xf32>
    %cst_91 = arith.constant 1.000000e+00 : f32
    %264 = vector.broadcast %cst_91 : f32 to vector<16x64xf32>
    %265 = arith.addf %264, %263 : vector<16x64xf32>
    %cst_92 = arith.constant 5.000000e-01 : f32
    %266 = vector.broadcast %cst_92 : f32 to vector<16x64xf32>
    %267 = arith.mulf %266, %265 : vector<16x64xf32>
    %268 = arith.mulf %255, %267 : vector<16x64xf32>
    %c1_93 = arith.constant 1 : index
    %c0_94 = arith.constant 0 : index
    %c0_95 = arith.constant 0 : index
    %269 = vector.load %arg6[%c1_93, %c0_94, %c0_95] : memref<2x64x32xf32, #tpu.memory_space<vmem>>, vector<1x64x32xf32>
    %270 = vector.shape_cast %269 : vector<1x64x32xf32> to vector<64x32xf32>
    %cst_96 = arith.constant dense<0.000000e+00> : vector<16x32xf32>
    %271 = tpu.matmul %268, %270, %cst_96 {dimension_numbers = #tpu.dot_dimension_numbers<[1], [0], [0], [1], [0, 0, 1, 1], [], []>} : vector<16x64xf32>, vector<64x32xf32>, vector<16x32xf32> -> vector<16x32xf32>
    %c15 = arith.constant 15 : index
    %c0_97 = arith.constant 0 : index
    %272 = vector.load %arg2[%c15, %c0_97] : memref<19x128xf32, #tpu.memory_space<vmem>>, vector<1x32xf32>
    %273 = vector.broadcast %272 : vector<1x32xf32> to vector<16x32xf32>
    %274 = arith.addf %271, %273 : vector<16x32xf32>
    %275 = arith.addf %249, %274 : vector<16x32xf32>
    %c16 = arith.constant 16 : index
    %c0_98 = arith.constant 0 : index
    %276 = vector.load %arg2[%c16, %c0_98] : memref<19x128xf32, #tpu.memory_space<vmem>>, vector<1x32xf32>
    %c17 = arith.constant 17 : index
    %c0_99 = arith.constant 0 : index
    %277 = vector.load %arg2[%c17, %c0_99] : memref<19x128xf32, #tpu.memory_space<vmem>>, vector<1x32xf32>
    %278 = arith.mulf %275, %275 : vector<16x32xf32>
    %279 = tpu.concatenate %275, %278 in 0 : vector<16x32xf32>, vector<16x32xf32> -> vector<32x32xf32>
    %cst_100 = arith.constant dense<0.000000e+00> : vector<32xf32>
    %280 = vector.multi_reduction <add>, %279, %cst_100 [1] : vector<32x32xf32> to vector<32xf32>
    %281 = vector.shape_cast %280 : vector<32xf32> to vector<32x1xf32>
    %cst_101 = arith.constant 3.125000e-02 : f32
    %282 = vector.broadcast %cst_101 : f32 to vector<32x1xf32>
    %283 = arith.mulf %281, %282 : vector<32x1xf32>
    %284 = vector.extract_strided_slice %283 {offsets = [0, 0], sizes = [16, 1], strides = [1, 1]} : vector<32x1xf32> to vector<16x1xf32>
    %285 = vector.extract_strided_slice %283 {offsets = [16, 0], sizes = [16, 1], strides = [1, 1]} : vector<32x1xf32> to vector<16x1xf32>
    %286 = arith.mulf %284, %284 : vector<16x1xf32>
    %287 = arith.subf %285, %286 : vector<16x1xf32>
    %cst_102 = arith.constant 0.000000e+00 : f32
    %288 = vector.broadcast %cst_102 : f32 to vector<16x1xf32>
    %289 = arith.maximumf %287, %288 : vector<16x1xf32>
    %290 = vector.broadcast %284 : vector<16x1xf32> to vector<16x32xf32>
    %291 = arith.subf %275, %290 : vector<16x32xf32>
    %cst_103 = arith.constant 9.99999996E-13 : f32
    %292 = vector.broadcast %cst_103 : f32 to vector<16x1xf32>
    %293 = arith.addf %289, %292 : vector<16x1xf32>
    %294 = math.rsqrt %293 : vector<16x1xf32>
    %295 = vector.broadcast %294 : vector<16x1xf32> to vector<16x32xf32>
    %296 = arith.mulf %291, %295 : vector<16x32xf32>
    %297 = vector.broadcast %276 : vector<1x32xf32> to vector<16x32xf32>
    %298 = arith.mulf %296, %297 : vector<16x32xf32>
    %299 = vector.broadcast %277 : vector<1x32xf32> to vector<16x32xf32>
    %300 = arith.addf %298, %299 : vector<16x32xf32>
    %301 = vector.shape_cast %300 : vector<16x32xf32> to vector<2x8x32xf32>
    %302 = tpu.transpose %301, [1, 0, 2] : vector<2x8x32xf32> -> vector<8x2x32xf32>
    %303 = vector.shape_cast %302 : vector<8x2x32xf32> to vector<16x32xf32>
    %c0_104 = arith.constant 0 : index
    %c0_105 = arith.constant 0 : index
    %304 = vector.load %arg7[%c0_104, %c0_105] : memref<64x128xf32, #tpu.memory_space<vmem>>, vector<32x128xf32>
    %c32 = arith.constant 32 : index
    %c0_106 = arith.constant 0 : index
    %305 = vector.load %arg7[%c32, %c0_106] : memref<64x128xf32, #tpu.memory_space<vmem>>, vector<32x128xf32>
    %cst_107 = arith.constant dense<0.000000e+00> : vector<16x128xf32>
    %306 = tpu.matmul %303, %304, %cst_107 {dimension_numbers = #tpu.dot_dimension_numbers<[1], [0], [0], [1], [0, 0, 1, 1], [], []>} : vector<16x32xf32>, vector<32x128xf32>, vector<16x128xf32> -> vector<16x128xf32>
    %c18 = arith.constant 18 : index
    %c0_108 = arith.constant 0 : index
    %307 = vector.load %arg2[%c18, %c0_108] : memref<19x128xf32, #tpu.memory_space<vmem>>, vector<1x128xf32>
    %308 = vector.broadcast %307 : vector<1x128xf32> to vector<16x128xf32>
    %309 = arith.addf %306, %308 : vector<16x128xf32>
    %cst_109 = arith.constant 0.000000e+00 : f32
    %310 = vector.broadcast %cst_109 : f32 to vector<2x32xf32>
    %cst_110 = arith.constant 0.000000e+00 : f32
    %311 = vector.broadcast %cst_110 : f32 to vector<2x32xf32>
    %312 = vector.extract_strided_slice %309 {offsets = [0, 0], sizes = [2, 128], strides = [1, 1]} : vector<16x128xf32> to vector<2x128xf32>
    %cst_111 = arith.constant dense<0.000000e+00> : vector<2x128xf32>
    %313 = tpu.matmul %310, %305, %cst_111 {dimension_numbers = #tpu.dot_dimension_numbers<[1], [0], [0], [1], [0, 0, 1, 1], [], []>} : vector<2x32xf32>, vector<32x128xf32>, vector<2x128xf32> -> vector<2x128xf32>
    %314 = arith.addf %312, %313 : vector<2x128xf32>
    %315 = arith.negf %314 : vector<2x128xf32>
    %316 = math.exp %315 : vector<2x128xf32>
    %cst_112 = arith.constant 1.000000e+00 : f32
    %317 = vector.broadcast %cst_112 : f32 to vector<2x128xf32>
    %318 = arith.addf %317, %316 : vector<2x128xf32>
    %319 = arith.divf %317, %318 : vector<2x128xf32>
    %320 = vector.extract_strided_slice %314 {offsets = [0, 64], sizes = [2, 32], strides = [1, 1]} : vector<2x128xf32> to vector<2x32xf32>
    %321 = math.tanh %320 : vector<2x32xf32>
    %322 = vector.extract_strided_slice %319 {offsets = [0, 0], sizes = [2, 32], strides = [1, 1]} : vector<2x128xf32> to vector<2x32xf32>
    %323 = vector.extract_strided_slice %319 {offsets = [0, 32], sizes = [2, 32], strides = [1, 1]} : vector<2x128xf32> to vector<2x32xf32>
    %324 = vector.extract_strided_slice %319 {offsets = [0, 96], sizes = [2, 32], strides = [1, 1]} : vector<2x128xf32> to vector<2x32xf32>
    %325 = arith.mulf %323, %311 : vector<2x32xf32>
    %326 = arith.mulf %322, %321 : vector<2x32xf32>
    %327 = arith.addf %325, %326 : vector<2x32xf32>
    %328 = math.tanh %327 : vector<2x32xf32>
    %329 = arith.mulf %324, %328 : vector<2x32xf32>
    %330 = vector.extract_strided_slice %309 {offsets = [2, 0], sizes = [2, 128], strides = [1, 1]} : vector<16x128xf32> to vector<2x128xf32>
    %cst_113 = arith.constant dense<0.000000e+00> : vector<2x128xf32>
    %331 = tpu.matmul %329, %305, %cst_113 {dimension_numbers = #tpu.dot_dimension_numbers<[1], [0], [0], [1], [0, 0, 1, 1], [], []>} : vector<2x32xf32>, vector<32x128xf32>, vector<2x128xf32> -> vector<2x128xf32>
    %332 = arith.addf %330, %331 : vector<2x128xf32>
    %333 = arith.negf %332 : vector<2x128xf32>
    %334 = math.exp %333 : vector<2x128xf32>
    %cst_114 = arith.constant 1.000000e+00 : f32
    %335 = vector.broadcast %cst_114 : f32 to vector<2x128xf32>
    %336 = arith.addf %335, %334 : vector<2x128xf32>
    %337 = arith.divf %335, %336 : vector<2x128xf32>
    %338 = vector.extract_strided_slice %332 {offsets = [0, 64], sizes = [2, 32], strides = [1, 1]} : vector<2x128xf32> to vector<2x32xf32>
    %339 = math.tanh %338 : vector<2x32xf32>
    %340 = vector.extract_strided_slice %337 {offsets = [0, 0], sizes = [2, 32], strides = [1, 1]} : vector<2x128xf32> to vector<2x32xf32>
    %341 = vector.extract_strided_slice %337 {offsets = [0, 32], sizes = [2, 32], strides = [1, 1]} : vector<2x128xf32> to vector<2x32xf32>
    %342 = vector.extract_strided_slice %337 {offsets = [0, 96], sizes = [2, 32], strides = [1, 1]} : vector<2x128xf32> to vector<2x32xf32>
    %343 = arith.mulf %341, %327 : vector<2x32xf32>
    %344 = arith.mulf %340, %339 : vector<2x32xf32>
    %345 = arith.addf %343, %344 : vector<2x32xf32>
    %346 = math.tanh %345 : vector<2x32xf32>
    %347 = arith.mulf %342, %346 : vector<2x32xf32>
    %348 = vector.extract_strided_slice %309 {offsets = [4, 0], sizes = [2, 128], strides = [1, 1]} : vector<16x128xf32> to vector<2x128xf32>
    %cst_115 = arith.constant dense<0.000000e+00> : vector<2x128xf32>
    %349 = tpu.matmul %347, %305, %cst_115 {dimension_numbers = #tpu.dot_dimension_numbers<[1], [0], [0], [1], [0, 0, 1, 1], [], []>} : vector<2x32xf32>, vector<32x128xf32>, vector<2x128xf32> -> vector<2x128xf32>
    %350 = arith.addf %348, %349 : vector<2x128xf32>
    %351 = arith.negf %350 : vector<2x128xf32>
    %352 = math.exp %351 : vector<2x128xf32>
    %cst_116 = arith.constant 1.000000e+00 : f32
    %353 = vector.broadcast %cst_116 : f32 to vector<2x128xf32>
    %354 = arith.addf %353, %352 : vector<2x128xf32>
    %355 = arith.divf %353, %354 : vector<2x128xf32>
    %356 = vector.extract_strided_slice %350 {offsets = [0, 64], sizes = [2, 32], strides = [1, 1]} : vector<2x128xf32> to vector<2x32xf32>
    %357 = math.tanh %356 : vector<2x32xf32>
    %358 = vector.extract_strided_slice %355 {offsets = [0, 0], sizes = [2, 32], strides = [1, 1]} : vector<2x128xf32> to vector<2x32xf32>
    %359 = vector.extract_strided_slice %355 {offsets = [0, 32], sizes = [2, 32], strides = [1, 1]} : vector<2x128xf32> to vector<2x32xf32>
    %360 = vector.extract_strided_slice %355 {offsets = [0, 96], sizes = [2, 32], strides = [1, 1]} : vector<2x128xf32> to vector<2x32xf32>
    %361 = arith.mulf %359, %345 : vector<2x32xf32>
    %362 = arith.mulf %358, %357 : vector<2x32xf32>
    %363 = arith.addf %361, %362 : vector<2x32xf32>
    %364 = math.tanh %363 : vector<2x32xf32>
    %365 = arith.mulf %360, %364 : vector<2x32xf32>
    %366 = vector.extract_strided_slice %309 {offsets = [6, 0], sizes = [2, 128], strides = [1, 1]} : vector<16x128xf32> to vector<2x128xf32>
    %cst_117 = arith.constant dense<0.000000e+00> : vector<2x128xf32>
    %367 = tpu.matmul %365, %305, %cst_117 {dimension_numbers = #tpu.dot_dimension_numbers<[1], [0], [0], [1], [0, 0, 1, 1], [], []>} : vector<2x32xf32>, vector<32x128xf32>, vector<2x128xf32> -> vector<2x128xf32>
    %368 = arith.addf %366, %367 : vector<2x128xf32>
    %369 = arith.negf %368 : vector<2x128xf32>
    %370 = math.exp %369 : vector<2x128xf32>
    %cst_118 = arith.constant 1.000000e+00 : f32
    %371 = vector.broadcast %cst_118 : f32 to vector<2x128xf32>
    %372 = arith.addf %371, %370 : vector<2x128xf32>
    %373 = arith.divf %371, %372 : vector<2x128xf32>
    %374 = vector.extract_strided_slice %368 {offsets = [0, 64], sizes = [2, 32], strides = [1, 1]} : vector<2x128xf32> to vector<2x32xf32>
    %375 = math.tanh %374 : vector<2x32xf32>
    %376 = vector.extract_strided_slice %373 {offsets = [0, 0], sizes = [2, 32], strides = [1, 1]} : vector<2x128xf32> to vector<2x32xf32>
    %377 = vector.extract_strided_slice %373 {offsets = [0, 32], sizes = [2, 32], strides = [1, 1]} : vector<2x128xf32> to vector<2x32xf32>
    %378 = vector.extract_strided_slice %373 {offsets = [0, 96], sizes = [2, 32], strides = [1, 1]} : vector<2x128xf32> to vector<2x32xf32>
    %379 = arith.mulf %377, %363 : vector<2x32xf32>
    %380 = arith.mulf %376, %375 : vector<2x32xf32>
    %381 = arith.addf %379, %380 : vector<2x32xf32>
    %382 = math.tanh %381 : vector<2x32xf32>
    %383 = arith.mulf %378, %382 : vector<2x32xf32>
    %384 = vector.extract_strided_slice %309 {offsets = [8, 0], sizes = [2, 128], strides = [1, 1]} : vector<16x128xf32> to vector<2x128xf32>
    %cst_119 = arith.constant dense<0.000000e+00> : vector<2x128xf32>
    %385 = tpu.matmul %383, %305, %cst_119 {dimension_numbers = #tpu.dot_dimension_numbers<[1], [0], [0], [1], [0, 0, 1, 1], [], []>} : vector<2x32xf32>, vector<32x128xf32>, vector<2x128xf32> -> vector<2x128xf32>
    %386 = arith.addf %384, %385 : vector<2x128xf32>
    %387 = arith.negf %386 : vector<2x128xf32>
    %388 = math.exp %387 : vector<2x128xf32>
    %cst_120 = arith.constant 1.000000e+00 : f32
    %389 = vector.broadcast %cst_120 : f32 to vector<2x128xf32>
    %390 = arith.addf %389, %388 : vector<2x128xf32>
    %391 = arith.divf %389, %390 : vector<2x128xf32>
    %392 = vector.extract_strided_slice %386 {offsets = [0, 64], sizes = [2, 32], strides = [1, 1]} : vector<2x128xf32> to vector<2x32xf32>
    %393 = math.tanh %392 : vector<2x32xf32>
    %394 = vector.extract_strided_slice %391 {offsets = [0, 0], sizes = [2, 32], strides = [1, 1]} : vector<2x128xf32> to vector<2x32xf32>
    %395 = vector.extract_strided_slice %391 {offsets = [0, 32], sizes = [2, 32], strides = [1, 1]} : vector<2x128xf32> to vector<2x32xf32>
    %396 = vector.extract_strided_slice %391 {offsets = [0, 96], sizes = [2, 32], strides = [1, 1]} : vector<2x128xf32> to vector<2x32xf32>
    %397 = arith.mulf %395, %381 : vector<2x32xf32>
    %398 = arith.mulf %394, %393 : vector<2x32xf32>
    %399 = arith.addf %397, %398 : vector<2x32xf32>
    %400 = math.tanh %399 : vector<2x32xf32>
    %401 = arith.mulf %396, %400 : vector<2x32xf32>
    %402 = vector.extract_strided_slice %309 {offsets = [10, 0], sizes = [2, 128], strides = [1, 1]} : vector<16x128xf32> to vector<2x128xf32>
    %cst_121 = arith.constant dense<0.000000e+00> : vector<2x128xf32>
    %403 = tpu.matmul %401, %305, %cst_121 {dimension_numbers = #tpu.dot_dimension_numbers<[1], [0], [0], [1], [0, 0, 1, 1], [], []>} : vector<2x32xf32>, vector<32x128xf32>, vector<2x128xf32> -> vector<2x128xf32>
    %404 = arith.addf %402, %403 : vector<2x128xf32>
    %405 = arith.negf %404 : vector<2x128xf32>
    %406 = math.exp %405 : vector<2x128xf32>
    %cst_122 = arith.constant 1.000000e+00 : f32
    %407 = vector.broadcast %cst_122 : f32 to vector<2x128xf32>
    %408 = arith.addf %407, %406 : vector<2x128xf32>
    %409 = arith.divf %407, %408 : vector<2x128xf32>
    %410 = vector.extract_strided_slice %404 {offsets = [0, 64], sizes = [2, 32], strides = [1, 1]} : vector<2x128xf32> to vector<2x32xf32>
    %411 = math.tanh %410 : vector<2x32xf32>
    %412 = vector.extract_strided_slice %409 {offsets = [0, 0], sizes = [2, 32], strides = [1, 1]} : vector<2x128xf32> to vector<2x32xf32>
    %413 = vector.extract_strided_slice %409 {offsets = [0, 32], sizes = [2, 32], strides = [1, 1]} : vector<2x128xf32> to vector<2x32xf32>
    %414 = vector.extract_strided_slice %409 {offsets = [0, 96], sizes = [2, 32], strides = [1, 1]} : vector<2x128xf32> to vector<2x32xf32>
    %415 = arith.mulf %413, %399 : vector<2x32xf32>
    %416 = arith.mulf %412, %411 : vector<2x32xf32>
    %417 = arith.addf %415, %416 : vector<2x32xf32>
    %418 = math.tanh %417 : vector<2x32xf32>
    %419 = arith.mulf %414, %418 : vector<2x32xf32>
    %420 = vector.extract_strided_slice %309 {offsets = [12, 0], sizes = [2, 128], strides = [1, 1]} : vector<16x128xf32> to vector<2x128xf32>
    %cst_123 = arith.constant dense<0.000000e+00> : vector<2x128xf32>
    %421 = tpu.matmul %419, %305, %cst_123 {dimension_numbers = #tpu.dot_dimension_numbers<[1], [0], [0], [1], [0, 0, 1, 1], [], []>} : vector<2x32xf32>, vector<32x128xf32>, vector<2x128xf32> -> vector<2x128xf32>
    %422 = arith.addf %420, %421 : vector<2x128xf32>
    %423 = arith.negf %422 : vector<2x128xf32>
    %424 = math.exp %423 : vector<2x128xf32>
    %cst_124 = arith.constant 1.000000e+00 : f32
    %425 = vector.broadcast %cst_124 : f32 to vector<2x128xf32>
    %426 = arith.addf %425, %424 : vector<2x128xf32>
    %427 = arith.divf %425, %426 : vector<2x128xf32>
    %428 = vector.extract_strided_slice %422 {offsets = [0, 64], sizes = [2, 32], strides = [1, 1]} : vector<2x128xf32> to vector<2x32xf32>
    %429 = math.tanh %428 : vector<2x32xf32>
    %430 = vector.extract_strided_slice %427 {offsets = [0, 0], sizes = [2, 32], strides = [1, 1]} : vector<2x128xf32> to vector<2x32xf32>
    %431 = vector.extract_strided_slice %427 {offsets = [0, 32], sizes = [2, 32], strides = [1, 1]} : vector<2x128xf32> to vector<2x32xf32>
    %432 = vector.extract_strided_slice %427 {offsets = [0, 96], sizes = [2, 32], strides = [1, 1]} : vector<2x128xf32> to vector<2x32xf32>
    %433 = arith.mulf %431, %417 : vector<2x32xf32>
    %434 = arith.mulf %430, %429 : vector<2x32xf32>
    %435 = arith.addf %433, %434 : vector<2x32xf32>
    %436 = math.tanh %435 : vector<2x32xf32>
    %437 = arith.mulf %432, %436 : vector<2x32xf32>
    %438 = vector.extract_strided_slice %309 {offsets = [14, 0], sizes = [2, 128], strides = [1, 1]} : vector<16x128xf32> to vector<2x128xf32>
    %cst_125 = arith.constant dense<0.000000e+00> : vector<2x128xf32>
    %439 = tpu.matmul %437, %305, %cst_125 {dimension_numbers = #tpu.dot_dimension_numbers<[1], [0], [0], [1], [0, 0, 1, 1], [], []>} : vector<2x32xf32>, vector<32x128xf32>, vector<2x128xf32> -> vector<2x128xf32>
    %440 = arith.addf %438, %439 : vector<2x128xf32>
    %441 = arith.negf %440 : vector<2x128xf32>
    %442 = math.exp %441 : vector<2x128xf32>
    %cst_126 = arith.constant 1.000000e+00 : f32
    %443 = vector.broadcast %cst_126 : f32 to vector<2x128xf32>
    %444 = arith.addf %443, %442 : vector<2x128xf32>
    %445 = arith.divf %443, %444 : vector<2x128xf32>
    %446 = vector.extract_strided_slice %440 {offsets = [0, 64], sizes = [2, 32], strides = [1, 1]} : vector<2x128xf32> to vector<2x32xf32>
    %447 = math.tanh %446 : vector<2x32xf32>
    %448 = vector.extract_strided_slice %445 {offsets = [0, 0], sizes = [2, 32], strides = [1, 1]} : vector<2x128xf32> to vector<2x32xf32>
    %449 = vector.extract_strided_slice %445 {offsets = [0, 32], sizes = [2, 32], strides = [1, 1]} : vector<2x128xf32> to vector<2x32xf32>
    %450 = vector.extract_strided_slice %445 {offsets = [0, 96], sizes = [2, 32], strides = [1, 1]} : vector<2x128xf32> to vector<2x32xf32>
    %451 = arith.mulf %449, %435 : vector<2x32xf32>
    %452 = arith.mulf %448, %447 : vector<2x32xf32>
    %453 = arith.addf %451, %452 : vector<2x32xf32>
    %454 = math.tanh %453 : vector<2x32xf32>
    %455 = arith.mulf %450, %454 : vector<2x32xf32>
    %456 = tpu.concatenate %329, %347, %365, %383, %401, %419, %437, %455 in 1 : vector<2x32xf32>, vector<2x32xf32>, vector<2x32xf32>, vector<2x32xf32>, vector<2x32xf32>, vector<2x32xf32>, vector<2x32xf32>, vector<2x32xf32> -> vector<2x256xf32>
    %c0_127 = arith.constant 0 : index
    %c0_128 = arith.constant 0 : index
    %457 = vector.load %arg8[%c0_127, %c0_128] : memref<2x256xf32, #tpu.memory_space<vmem>>, vector<2x256xf32>
    tpu.vector_store %arg8[%c0_127, %c0_128], %456 {strides = array<i32>} : memref<2x256xf32, #tpu.memory_space<vmem>>, vector<2x256xf32>,
    return
  }
}

</mosaic_0001>

<llo_original>
// kernel: bert_lstm_forward.1
$region0: #{bert_lstm_forward.1}
  #allocation0 [shape = 'u32[]', space=smem, size = 0x4, offset = 0x4, fixed_abs, tag = 'smem constant byte address 0x4 - core index']
  #allocation1 [shape = 'u32[144,128]{1,0:T(1,128)}', space=vmem, size = 0x12000, scoped, tag = 'internal scratch']
  %s0 = inlined_call_operand.vmem [shape: f32[2,8,32], index: 0, kind: input, shape index: {}]
  %s1 = inlined_call_operand.vmem [shape: f32[2,8], index: 1, kind: input, shape index: {}]
  %s2 = inlined_call_operand.vmem [shape: f32[19,128], index: 2, kind: input, shape index: {}]
  %s3 = inlined_call_operand.vmem [shape: f32[2,32,96], index: 3, kind: input, shape index: {}]
  %s4 = inlined_call_operand.vmem [shape: f32[2,32,32], index: 4, kind: input, shape index: {}]
  %s5 = inlined_call_operand.vmem [shape: f32[2,32,64], index: 5, kind: input, shape index: {}]
  %s6 = inlined_call_operand.vmem [shape: f32[2,64,32], index: 6, kind: input, shape index: {}]
  %s7 = inlined_call_operand.vmem [shape: f32[64,128], index: 7, kind: input, shape index: {}]
  %s8 = inlined_call_operand.vmem [shape: f32[2,256], index: 8, kind: output, shape index: {}]
  %s9 = sld [smem:[#allocation0]]
  $region42: #{bert_lstm_forward.1} parent=0
    _
  %s11 = ssub.s32 1, %s9
  %s12 = scalar_select 0, %s11, %s9
  // Predicated region
  $region2: #{bert_lstm_forward.1} parent=0 // pred_check
    _
  $region3: #{bert_lstm_forward.1} parent=0 // pred_check_branch
    %14 = sbr.rel (0) target = $region5
  $region4: #{bert_lstm_forward.1} parent=0 // pred_region
    _
  $region5: #{bert_lstm_forward.1} parent=0 // pred_fallthru
    _
  // Predicated region
  $region6: #{bert_lstm_forward.1} parent=0 // pred_check
    _
  $region7: #{bert_lstm_forward.1} parent=0 // pred_check_branch
    %16 = sbr.rel (0) target = $region9
  $region8: #{bert_lstm_forward.1} parent=0 // pred_region
    _
  $region9: #{bert_lstm_forward.1} parent=0 // pred_fallthru
    _
  // Predicated region
  $region10: #{bert_lstm_forward.1} parent=0 // pred_check
    _
  $region11: #{bert_lstm_forward.1} parent=0 // pred_check_branch
    %18 = sbr.rel (0) target = $region13
  $region12: #{bert_lstm_forward.1} parent=0 // pred_region
    _
  $region13: #{bert_lstm_forward.1} parent=0 // pred_fallthru
    _
  // Predicated region
  $region14: #{bert_lstm_forward.1} parent=0 // pred_check
    _
  $region15: #{bert_lstm_forward.1} parent=0 // pred_check_branch
    %20 = sbr.rel (0) target = $region17
  $region16: #{bert_lstm_forward.1} parent=0 // pred_region
    _
  $region17: #{bert_lstm_forward.1} parent=0 // pred_fallthru
    _
  // Predicated region
  $region18: #{bert_lstm_forward.1} parent=0 // pred_check
    _
  $region19: #{bert_lstm_forward.1} parent=0 // pred_check_branch
    %22 = sbr.rel (0) target = $region21
  $region20: #{bert_lstm_forward.1} parent=0 // pred_region
    _
  $region21: #{bert_lstm_forward.1} parent=0 // pred_fallthru
    _
  // Predicated region
  $region22: #{bert_lstm_forward.1} parent=0 // pred_check
    _
  $region23: #{bert_lstm_forward.1} parent=0 // pred_check_branch
    %24 = sbr.rel (0) target = $region25
  $region24: #{bert_lstm_forward.1} parent=0 // pred_region
    _
  $region25: #{bert_lstm_forward.1} parent=0 // pred_fallthru
    _
  // Predicated region
  $region26: #{bert_lstm_forward.1} parent=0 // pred_check
    _
  $region27: #{bert_lstm_forward.1} parent=0 // pred_check_branch
    %26 = sbr.rel (0) target = $region29
  $region28: #{bert_lstm_forward.1} parent=0 // pred_region
    _
  $region29: #{bert_lstm_forward.1} parent=0 // pred_fallthru
    _
  // Predicated region
  $region30: #{bert_lstm_forward.1} parent=0 // pred_check
    _
  $region31: #{bert_lstm_forward.1} parent=0 // pred_check_branch
    %28 = sbr.rel (0) target = $region33
  $region32: #{bert_lstm_forward.1} parent=0 // pred_region
    _
  $region33: #{bert_lstm_forward.1} parent=0 // pred_fallthru
    _
  %v29 = vld [vmem:[%s0] sm:$0xff]
  %v30 = vld [vmem:[%s0 + $0x8] sm:$0xff]
  %v31 = vld [vmem:[%s2] sm:$0x1]
  %v32 = vld [vmem:[%s2 + $0x1] sm:$0x1]
  %v33 = vmul.f32 %v29, %v29
  %v34 = vmul.f32 %v30, %v30
  %vm35 = vcmask 261120
  %v36 = vsel %vm35, %v29, 0.0
  %37 = vadd.xlane.f32.xlu0 %v36
  %v38 = vpop.xlane.xlu0 %37
  %v39 = vsel %vm35, %v30, 0.0
  %40 = vadd.xlane.f32.xlu0 %v39
  %v41 = vpop.xlane.xlu0 %40
  %v42 = vsel %vm35, %v33, 0.0
  %43 = vadd.xlane.f32.xlu0 %v42
  %v44 = vpop.xlane.xlu0 %43
  %v45 = vsel %vm35, %v34, 0.0
  %46 = vadd.xlane.f32.xlu0 %v45
  %v47 = vpop.xlane.xlu0 %46
  %v48 = vmul.f32 %v38, 0.03125
  %v49 = vmul.f32 %v41, 0.03125
  %v50 = vmul.f32 %v44, 0.03125
  %v51 = vmul.f32 %v47, 0.03125
  %v52 = vmul.f32 %v48, %v48
  %v53 = vmul.f32 %v49, %v49
  %v54 = vsub.f32 %v50, %v52
  %v55 = vsub.f32 %v51, %v53
  %v56 = vmax.f32 %v54, 0.0
  %v57 = vmax.f32 %v55, 0.0
  %v58 = vsub.f32 %v29, %v48
  %v59 = vsub.f32 %v30, %v49
  %v60 = vadd.f32 %v56, 1e-12
  %v61 = vadd.f32 %v57, 1e-12
  %v62 = vrsqrt.pop %v60
  %v63 = vrsqrt.pop %v61
  %v64 = vmul.f32 %v58, %v62
  %v65 = vmul.f32 %v59, %v63
  %v66 = vlaneseq
  %v67 = vshrl.u32 %v66, 7
  %v68 = vsub.s32 0, %v67
  %v69 = vrot.slane %v31, %v68
  %v70 = vmul.f32 %v64, %v69
  %v71 = vmul.f32 %v65, %v69
  %v72 = vlaneseq
  %v73 = vshrl.u32 %v72, 7
  %v74 = vsub.s32 0, %v73
  %v75 = vrot.slane %v32, %v74
  %v76 = vadd.f32 %v70, %v75
  %v77 = vadd.f32 %v71, %v75
  %v78 = vld [vmem:[%s1] sm:$0x3]
  %v79 = vsub.f32 1.0, %v78
  %v80 = vmul.f32 %v79, -1e+09
  %v83 = vunpack.c.l.s4 1966171168
  %v84 = vunpack.c.0.s8 %v83
  %v85 = vlaneseq
  %v86 = vshrl.u32 %v85, 7
  %v87 = vsub.s32 %v84, %v86
  %v88 = vrot.slane %v80, %v87
  %v89 = vcombine.high %v88, %v88
  %v91 = vunpack.c.l.s4 1966171168
  %v92 = vunpack.c.0.s8 %v91
  %v93 = vlaneseq
  %v94 = vshrl.u32 %v93, 7
  %v95 = vsub.s32 %v92, %v94
  %v96 = vrot.slane %v88, %v95
  %v98 = vunpack.c.l.s4 1966171168
  %v99 = vunpack.c.0.s8 %v98
  %v100 = vlaneseq
  %v101 = vshrl.u32 %v100, 7
  %v102 = vsub.s32 %v99, %v101
  %v103 = vrot.slane %v89, %v102
  %v104 = vlaneseq
  %v105 = vshrl.u32 %v104, 7
  %v106 = vsub.s32 0, %v105
  %v107 = vrot.slane %v96, %v106
  %v108 = vlaneseq
  %v109 = vshrl.u32 %v108, 7
  %v110 = vsub.s32 0, %v109
  %v111 = vrot.slane %v103, %v110
  %v114 = vld [vmem:[%s3] sm:$0xff]
  %v115 = vld [vmem:[%s3 + $0x8] sm:$0xff]
  %v116 = vld [vmem:[%s3 + $0x10] sm:$0xff]
  %v117 = vld [vmem:[%s3 + $0x18] sm:$0xff]
  %v118 = vld [vmem:[%s2 + $0x2] sm:$0x1]
  %v119 = vlaneseq
  %v120 = vshrl.u32 %v119, 7
  %v121 = vsub.s32 0, %v120
  %v122 = vrot.slane %v118, %v121
  %v124 = vsel %vm35, %v76, 0
  %v127 = vsel %vm35, %v77, 0
  %129 = vmatprep.subr.mxu0 0.0
  %130 = vmatpush1.msra.mxu0 %v114
  %131 = vmatprep.subr.mxu0 0.0
  %132 = vmatpush1.msra.mxu0 %v115
  %133 = vmatprep.subr.mxu0 0.0
  %134 = vmatpush1.msra.mxu0 %v116
  %135 = vmatprep.subr.mxu0 0.0
  %136 = vmatpush1.msra.mxu0 %v117
  %137 = vmatprep.subr.mxu0 0.0
  %138 = vmatpush1.msra.mxu0 0.0
  %139 = vmatprep.subr.mxu0 0.0
  %140 = vmatpush1.msra.mxu0 0.0
  %141 = vmatprep.subr.mxu0 0.0
  %142 = vmatpush1.msra.mxu0 0.0
  %143 = vmatprep.subr.mxu0 0.0
  %144 = vmatpush1.msra.mxu0 0.0
  %145 = vmatprep.subr.mxu0 0.0
  %146 = vmatpush1.msra.mxu0 0.0
  %147 = vmatprep.subr.mxu0 0.0
  %148 = vmatpush1.msra.mxu0 0.0
  %149 = vmatprep.subr.mxu0 0.0
  %150 = vmatpush1.msra.mxu0 0.0
  %151 = vmatprep.subr.mxu0 0.0
  %152 = vmatpush1.msra.mxu0 0.0
  %153 = vmatprep.subr.mxu0 0.0
  %154 = vmatpush1.msra.mxu0 0.0
  %155 = vmatprep.subr.mxu0 0.0
  %156 = vmatpush1.msra.mxu0 0.0
  %157 = vmatprep.subr.mxu0 0.0
  %158 = vmatpush1.msra.mxu0 0.0
  %159 = vmatprep.subr.mxu0 0.0
  %160 = vmatpush1.msra.mxu0 0.0
  %161 = vmatprep.subr.mxu0 0.0
  %162 = vmatpush1.msra.mxu0 0.0
  %163 = vmatprep.subr.mxu0 0.0
  %164 = vmatpush1.msra.mxu0 0.0
  %165 = vmatprep.subr.mxu0 0.0
  %166 = vmatpush1.msra.mxu0 0.0
  %167 = vmatprep.subr.mxu0 0.0
  %168 = vmatpush1.msra.mxu0 0.0
  %169 = vmatprep.subr.mxu0 0.0
  %170 = vmatpush1.msra.mxu0 0.0
  %171 = vmatprep.subr.mxu0 0.0
  %172 = vmatpush1.msra.mxu0 0.0
  %173 = vmatprep.subr.mxu0 0.0
  %174 = vmatpush1.msra.mxu0 0.0
  %175 = vmatprep.subr.mxu0 0.0
  %176 = vmatpush1.msra.mxu0 0.0
  %177 = vmatprep.subr.mxu0 0.0
  %178 = vmatpush1.msra.mxu0 0.0
  %179 = vmatprep.subr.mxu0 0.0
  %180 = vmatpush1.msra.mxu0 0.0
  %181 = vmatprep.subr.mxu0 0.0
  %182 = vmatpush1.msra.mxu0 0.0
  %183 = vmatprep.subr.mxu0 0.0
  %184 = vmatpush1.msra.mxu0 0.0
  %185 = vmatprep.subr.mxu0 0.0
  %186 = vmatpush1.msra.mxu0 0.0
  %187 = vmatprep.subr.mxu0 0.0
  %188 = vmatpush1.msra.mxu0 0.0
  %189 = vmatprep.subr.mxu0 0.0
  %190 = vmatpush1.msra.mxu0 0.0
  %191 = vmatprep.subr.mxu0 0.0
  %192 = vmatpush1.msra.mxu0 0.0
  %193 = vmatprep.mubr.f32.mxu0 0.0
  %194 = vmatmul.mubr.f32.gmra.mrb[0].mxu0 %v124
  %v195 = vpop.f32.mrb[0].mxu0
  %v196 = vadd.f32 %v122, %v195
  %v197 = vpop.f32.mrb[0].mxu0
  %198 = vmatprep.mubr.f32.mxu0 0.0
  %199 = vmatmul.mubr.f32.gmra.mrb[0].mxu0 %v127
  %v200 = vpop.f32.mrb[0].mxu0
  %v201 = vadd.f32 %v122, %v200
  %v202 = vpop.f32.mrb[0].mxu0
  %203 = vdwg.mxu0
  %205 = vrot.lane.b32.xlu0 %v196, 96
  %v206 = vpop.permute.xlu0 %205
  %vm207 = vcmask 130048
  %v208 = vsel %vm207, %v196, 0
  %v210 = vsel %vm207, %v206, 0
  %212 = vmatprep.subr.mxu0 0.0
  %213 = vmatpush1.xpose.msra.mxu0 %v210
  %214 = vmatprep.subr.mxu0 0.0
  %215 = vmatpush1.xpose.msra.mxu0 0.0
  %216 = vmatprep.subr.mxu0 0.0
  %217 = vmatpush1.xpose.msra.mxu0 0.0
  %218 = vmatprep.subr.mxu0 0.0
  %219 = vmatpush1.xpose.msra.mxu0 0.0
  %220 = vmatprep.subr.mxu0 0.0
  %221 = vmatpush1.xpose.msra.mxu0 0.0
  %222 = vmatprep.subr.mxu0 0.0
  %223 = vmatpush1.xpose.msra.mxu0 0.0
  %224 = vmatprep.subr.mxu0 0.0
  %225 = vmatpush1.xpose.msra.mxu0 0.0
  %226 = vmatprep.subr.mxu0 0.0
  %227 = vmatpush1.xpose.msra.mxu0 0.0
  %228 = vmatprep.subr.mxu0 0.0
  %229 = vmatpush1.xpose.msra.mxu0 0.0
  %230 = vmatprep.subr.mxu0 0.0
  %231 = vmatpush1.xpose.msra.mxu0 0.0
  %232 = vmatprep.subr.mxu0 0.0
  %233 = vmatpush1.xpose.msra.mxu0 0.0
  %234 = vmatprep.subr.mxu0 0.0
  %235 = vmatpush1.xpose.msra.mxu0 0.0
  %236 = vmatprep.subr.mxu0 0.0
  %237 = vmatpush1.xpose.msra.mxu0 0.0
  %238 = vmatprep.subr.mxu0 0.0
  %239 = vmatpush1.xpose.msra.mxu0 0.0
  %240 = vmatprep.subr.mxu0 0.0
  %241 = vmatpush1.xpose.msra.mxu0 0.0
  %242 = vmatprep.subr.mxu0 0.0
  %243 = vmatpush1.xpose.msra.mxu0 0.0
  %244 = vmatprep.subr.mxu0 0.0
  %245 = vmatpush1.xpose.msra.mxu0 0.0
  %246 = vmatprep.subr.mxu0 0.0
  %247 = vmatpush1.xpose.msra.mxu0 0.0
  %248 = vmatprep.subr.mxu0 0.0
  %249 = vmatpush1.xpose.msra.mxu0 0.0
  %250 = vmatprep.subr.mxu0 0.0
  %251 = vmatpush1.xpose.msra.mxu0 0.0
  %252 = vmatprep.subr.mxu0 0.0
  %253 = vmatpush1.xpose.msra.mxu0 0.0
  %254 = vmatprep.subr.mxu0 0.0
  %255 = vmatpush1.xpose.msra.mxu0 0.0
  %256 = vmatprep.subr.mxu0 0.0
  %257 = vmatpush1.xpose.msra.mxu0 0.0
  %258 = vmatprep.subr.mxu0 0.0
  %259 = vmatpush1.xpose.msra.mxu0 0.0
  %260 = vmatprep.subr.mxu0 0.0
  %261 = vmatpush1.xpose.msra.mxu0 0.0
  %262 = vmatprep.subr.mxu0 0.0
  %263 = vmatpush1.xpose.msra.mxu0 0.0
  %264 = vmatprep.subr.mxu0 0.0
  %265 = vmatpush1.xpose.msra.mxu0 0.0
  %266 = vmatprep.subr.mxu0 0.0
  %267 = vmatpush1.xpose.msra.mxu0 0.0
  %268 = vmatprep.subr.mxu0 0.0
  %269 = vmatpush1.xpose.msra.mxu0 0.0
  %270 = vmatprep.subr.mxu0 0.0
  %271 = vmatpush1.xpose.msra.mxu0 0.0
  %272 = vmatprep.subr.mxu0 0.0
  %273 = vmatpush1.xpose.msra.mxu0 0.0
  %274 = vmatprep.subr.mxu0 0.0
  %275 = vmatpush1.xpose.msra.mxu0 0.0
  %276 = vmatprep.mubr.f32.mxu0 0.0
  %277 = vmatmul.mubr.f32.gmra.mrb[0].mxu0 %v208
  %v278 = vpop.f32.mrb[0].mxu0
  %v279 = vadd.f32 0.0, %v278
  %v280 = vpop.f32.mrb[0].mxu0
  %281 = vdwg.mxu0
  %283 = vrot.lane.b32.xlu0 %v201, 96
  %v284 = vpop.permute.xlu0 %283
  %v285 = vsel %vm207, %v201, 0
  %v287 = vsel %vm207, %v284, 0
  %289 = vmatprep.subr.mxu0 0.0
  %290 = vmatpush1.xpose.msra.mxu0 %v287
  %291 = vmatprep.subr.mxu0 0.0
  %292 = vmatpush1.xpose.msra.mxu0 0.0
  %293 = vmatprep.subr.mxu0 0.0
  %294 = vmatpush1.xpose.msra.mxu0 0.0
  %295 = vmatprep.subr.mxu0 0.0
  %296 = vmatpush1.xpose.msra.mxu0 0.0
  %297 = vmatprep.subr.mxu0 0.0
  %298 = vmatpush1.xpose.msra.mxu0 0.0
  %299 = vmatprep.subr.mxu0 0.0
  %300 = vmatpush1.xpose.msra.mxu0 0.0
  %301 = vmatprep.subr.mxu0 0.0
  %302 = vmatpush1.xpose.msra.mxu0 0.0
  %303 = vmatprep.subr.mxu0 0.0
  %304 = vmatpush1.xpose.msra.mxu0 0.0
  %305 = vmatprep.subr.mxu0 0.0
  %306 = vmatpush1.xpose.msra.mxu0 0.0
  %307 = vmatprep.subr.mxu0 0.0
  %308 = vmatpush1.xpose.msra.mxu0 0.0
  %309 = vmatprep.subr.mxu0 0.0
  %310 = vmatpush1.xpose.msra.mxu0 0.0
  %311 = vmatprep.subr.mxu0 0.0
  %312 = vmatpush1.xpose.msra.mxu0 0.0
  %313 = vmatprep.subr.mxu0 0.0
  %314 = vmatpush1.xpose.msra.mxu0 0.0
  %315 = vmatprep.subr.mxu0 0.0
  %316 = vmatpush1.xpose.msra.mxu0 0.0
  %317 = vmatprep.subr.mxu0 0.0
  %318 = vmatpush1.xpose.msra.mxu0 0.0
  %319 = vmatprep.subr.mxu0 0.0
  %320 = vmatpush1.xpose.msra.mxu0 0.0
  %321 = vmatprep.subr.mxu0 0.0
  %322 = vmatpush1.xpose.msra.mxu0 0.0
  %323 = vmatprep.subr.mxu0 0.0
  %324 = vmatpush1.xpose.msra.mxu0 0.0
  %325 = vmatprep.subr.mxu0 0.0
  %326 = vmatpush1.xpose.msra.mxu0 0.0
  %327 = vmatprep.subr.mxu0 0.0
  %328 = vmatpush1.xpose.msra.mxu0 0.0
  %329 = vmatprep.subr.mxu0 0.0
  %330 = vmatpush1.xpose.msra.mxu0 0.0
  %331 = vmatprep.subr.mxu0 0.0
  %332 = vmatpush1.xpose.msra.mxu0 0.0
  %333 = vmatprep.subr.mxu0 0.0
  %334 = vmatpush1.xpose.msra.mxu0 0.0
  %335 = vmatprep.subr.mxu0 0.0
  %336 = vmatpush1.xpose.msra.mxu0 0.0
  %337 = vmatprep.subr.mxu0 0.0
  %338 = vmatpush1.xpose.msra.mxu0 0.0
  %339 = vmatprep.subr.mxu0 0.0
  %340 = vmatpush1.xpose.msra.mxu0 0.0
  %341 = vmatprep.subr.mxu0 0.0
  %342 = vmatpush1.xpose.msra.mxu0 0.0
  %343 = vmatprep.subr.mxu0 0.0
  %344 = vmatpush1.xpose.msra.mxu0 0.0
  %345 = vmatprep.subr.mxu0 0.0
  %346 = vmatpush1.xpose.msra.mxu0 0.0
  %347 = vmatprep.subr.mxu0 0.0
  %348 = vmatpush1.xpose.msra.mxu0 0.0
  %349 = vmatprep.subr.mxu0 0.0
  %350 = vmatpush1.xpose.msra.mxu0 0.0
  %351 = vmatprep.subr.mxu0 0.0
  %352 = vmatpush1.xpose.msra.mxu0 0.0
  %353 = vmatprep.mubr.f32.mxu0 0.0
  %354 = vmatmul.mubr.f32.gmra.mrb[0].mxu0 %v285
  %v355 = vpop.f32.mrb[0].mxu0
  %v356 = vadd.f32 0.0, %v355
  %v357 = vpop.f32.mrb[0].mxu0
  %358 = vdwg.mxu0
  %v359 = vmul.f32 %v279, 0.25
  %v360 = vmul.f32 %v356, 0.25
  %v361 = vadd.f32 %v359, %v107
  %v362 = vadd.f32 %v360, %v111
  %vm363 = vcmask 64512
  %v364 = vsel %vm363, %v361, -inf
  %365 = vmax.xlane.f32.xlu0 %v364
  %v366 = vpop.xlane.xlu0 %365
  %v367 = vsel %vm363, %v362, -inf
  %368 = vmax.xlane.f32.xlu0 %v367
  %v369 = vpop.xlane.xlu0 %368
  %v370 = vsub.f32 %v361, %v366
  %v371 = vsub.f32 %v362, %v369
  %v372 = vmul.f32 %v370, 1.442695
  %v373 = vpow.pop %v372
  %v374 = vmul.f32 %v371, 1.442695
  %v375 = vpow.pop %v374
  %v376 = vsel %vm363, %v373, 0.0
  %377 = vadd.xlane.f32.xlu0 %v376
  %v378 = vpop.xlane.xlu0 %377
  %v379 = vsel %vm363, %v375, 0.0
  %380 = vadd.xlane.f32.xlu0 %v379
  %v381 = vpop.xlane.xlu0 %380
  %v382 = vrcp.pop %v378
  %v383 = vrcp.pop %v381
  %v384 = vmul.f32 %v373, %v382
  %v385 = vmul.f32 %v375, %v383
  %386 = vrot.lane.b32.xlu0 %v196, 64
  %v387 = vpop.permute.xlu0 %386
  %v390 = vsel %vm363, %v384, 0
  %392 = vmatprep.subr.mxu0 0.0
  %393 = vmatpush1.msra.mxu0 %v387
  %394 = vmatprep.subr.mxu0 0.0
  %395 = vmatpush1.msra.mxu0 0.0
  %396 = vmatprep.subr.mxu0 0.0
  %397 = vmatpush1.msra.mxu0 0.0
  %398 = vmatprep.subr.mxu0 0.0
  %399 = vmatpush1.msra.mxu0 0.0
  %400 = vmatprep.subr.mxu0 0.0
  %401 = vmatpush1.msra.mxu0 0.0
  %402 = vmatprep.subr.mxu0 0.0
  %403 = vmatpush1.msra.mxu0 0.0
  %404 = vmatprep.subr.mxu0 0.0
  %405 = vmatpush1.msra.mxu0 0.0
  %406 = vmatprep.subr.mxu0 0.0
  %407 = vmatpush1.msra.mxu0 0.0
  %408 = vmatprep.subr.mxu0 0.0
  %409 = vmatpush1.msra.mxu0 0.0
  %410 = vmatprep.subr.mxu0 0.0
  %411 = vmatpush1.msra.mxu0 0.0
  %412 = vmatprep.subr.mxu0 0.0
  %413 = vmatpush1.msra.mxu0 0.0
  %414 = vmatprep.subr.mxu0 0.0
  %415 = vmatpush1.msra.mxu0 0.0
  %416 = vmatprep.subr.mxu0 0.0
  %417 = vmatpush1.msra.mxu0 0.0
  %418 = vmatprep.subr.mxu0 0.0
  %419 = vmatpush1.msra.mxu0 0.0
  %420 = vmatprep.subr.mxu0 0.0
  %421 = vmatpush1.msra.mxu0 0.0
  %422 = vmatprep.subr.mxu0 0.0
  %423 = vmatpush1.msra.mxu0 0.0
  %424 = vmatprep.subr.mxu0 0.0
  %425 = vmatpush1.msra.mxu0 0.0
  %426 = vmatprep.subr.mxu0 0.0
  %427 = vmatpush1.msra.mxu0 0.0
  %428 = vmatprep.subr.mxu0 0.0
  %429 = vmatpush1.msra.mxu0 0.0
  %430 = vmatprep.subr.mxu0 0.0
  %431 = vmatpush1.msra.mxu0 0.0
  %432 = vmatprep.subr.mxu0 0.0
  %433 = vmatpush1.msra.mxu0 0.0
  %434 = vmatprep.subr.mxu0 0.0
  %435 = vmatpush1.msra.mxu0 0.0
  %436 = vmatprep.subr.mxu0 0.0
  %437 = vmatpush1.msra.mxu0 0.0
  %438 = vmatprep.subr.mxu0 0.0
  %439 = vmatpush1.msra.mxu0 0.0
  %440 = vmatprep.subr.mxu0 0.0
  %441 = vmatpush1.msra.mxu0 0.0
  %442 = vmatprep.subr.mxu0 0.0
  %443 = vmatpush1.msra.mxu0 0.0
  %444 = vmatprep.subr.mxu0 0.0
  %445 = vmatpush1.msra.mxu0 0.0
  %446 = vmatprep.subr.mxu0 0.0
  %447 = vmatpush1.msra.mxu0 0.0
  %448 = vmatprep.subr.mxu0 0.0
  %449 = vmatpush1.msra.mxu0 0.0
  %450 = vmatprep.subr.mxu0 0.0
  %451 = vmatpush1.msra.mxu0 0.0
  %452 = vmatprep.subr.mxu0 0.0
  %453 = vmatpush1.msra.mxu0 0.0
  %454 = vmatprep.subr.mxu0 0.0
  %455 = vmatpush1.msra.mxu0 0.0
  %456 = vmatprep.mubr.f32.mxu0 0.0
  %457 = vmatmul.mubr.f32.gmra.mrb[0].mxu0 %v390
  %v458 = vpop.f32.mrb[0].mxu0
  %v459 = vadd.f32 0.0, %v458
  %v460 = vpop.f32.mrb[0].mxu0
  %461 = vdwg.mxu0
  %462 = vrot.lane.b32.xlu0 %v201, 64
  %v463 = vpop.permute.xlu0 %462
  %v466 = vsel %vm363, %v385, 0
  %468 = vmatprep.subr.mxu0 0.0
  %469 = vmatpush1.msra.mxu0 %v463
  %470 = vmatprep.subr.mxu0 0.0
  %471 = vmatpush1.msra.mxu0 0.0
  %472 = vmatprep.subr.mxu0 0.0
  %473 = vmatpush1.msra.mxu0 0.0
  %474 = vmatprep.subr.mxu0 0.0
  %475 = vmatpush1.msra.mxu0 0.0
  %476 = vmatprep.subr.mxu0 0.0
  %477 = vmatpush1.msra.mxu0 0.0
  %478 = vmatprep.subr.mxu0 0.0
  %479 = vmatpush1.msra.mxu0 0.0
  %480 = vmatprep.subr.mxu0 0.0
  %481 = vmatpush1.msra.mxu0 0.0
  %482 = vmatprep.subr.mxu0 0.0
  %483 = vmatpush1.msra.mxu0 0.0
  %484 = vmatprep.subr.mxu0 0.0
  %485 = vmatpush1.msra.mxu0 0.0
  %486 = vmatprep.subr.mxu0 0.0
  %487 = vmatpush1.msra.mxu0 0.0
  %488 = vmatprep.subr.mxu0 0.0
  %489 = vmatpush1.msra.mxu0 0.0
  %490 = vmatprep.subr.mxu0 0.0
  %491 = vmatpush1.msra.mxu0 0.0
  %492 = vmatprep.subr.mxu0 0.0
  %493 = vmatpush1.msra.mxu0 0.0
  %494 = vmatprep.subr.mxu0 0.0
  %495 = vmatpush1.msra.mxu0 0.0
  %496 = vmatprep.subr.mxu0 0.0
  %497 = vmatpush1.msra.mxu0 0.0
  %498 = vmatprep.subr.mxu0 0.0
  %499 = vmatpush1.msra.mxu0 0.0
  %500 = vmatprep.subr.mxu0 0.0
  %501 = vmatpush1.msra.mxu0 0.0
  %502 = vmatprep.subr.mxu0 0.0
  %503 = vmatpush1.msra.mxu0 0.0
  %504 = vmatprep.subr.mxu0 0.0
  %505 = vmatpush1.msra.mxu0 0.0
  %506 = vmatprep.subr.mxu0 0.0
  %507 = vmatpush1.msra.mxu0 0.0
  %508 = vmatprep.subr.mxu0 0.0
  %509 = vmatpush1.msra.mxu0 0.0
  %510 = vmatprep.subr.mxu0 0.0
  %511 = vmatpush1.msra.mxu0 0.0
  %512 = vmatprep.subr.mxu0 0.0
  %513 = vmatpush1.msra.mxu0 0.0
  %514 = vmatprep.subr.mxu0 0.0
  %515 = vmatpush1.msra.mxu0 0.0
  %516 = vmatprep.subr.mxu0 0.0
  %517 = vmatpush1.msra.mxu0 0.0
  %518 = vmatprep.subr.mxu0 0.0
  %519 = vmatpush1.msra.mxu0 0.0
  %520 = vmatprep.subr.mxu0 0.0
  %521 = vmatpush1.msra.mxu0 0.0
  %522 = vmatprep.subr.mxu0 0.0
  %523 = vmatpush1.msra.mxu0 0.0
  %524 = vmatprep.subr.mxu0 0.0
  %525 = vmatpush1.msra.mxu0 0.0
  %526 = vmatprep.subr.mxu0 0.0
  %527 = vmatpush1.msra.mxu0 0.0
  %528 = vmatprep.subr.mxu0 0.0
  %529 = vmatpush1.msra.mxu0 0.0
  %530 = vmatprep.subr.mxu0 0.0
  %531 = vmatpush1.msra.mxu0 0.0
  %532 = vmatprep.mubr.f32.mxu0 0.0
  %533 = vmatmul.mubr.f32.gmra.mrb[0].mxu0 %v466
  %v534 = vpop.f32.mrb[0].mxu0
  %v535 = vadd.f32 0.0, %v534
  %v536 = vpop.f32.mrb[0].mxu0
  %537 = vdwg.mxu0
  %538 = vrot.lane.b32.xlu0 %v196, 112
  %v539 = vpop.permute.xlu0 %538
  %540 = vrot.lane.b32.xlu0 %v196, 80
  %v541 = vpop.permute.xlu0 %540
  %v542 = vsel %vm207, %v539, 0
  %v544 = vsel %vm207, %v541, 0
  %546 = vmatprep.subr.mxu0 0.0
  %547 = vmatpush1.xpose.msra.mxu0 %v544
  %548 = vmatprep.subr.mxu0 0.0
  %549 = vmatpush1.xpose.msra.mxu0 0.0
  %550 = vmatprep.subr.mxu0 0.0
  %551 = vmatpush1.xpose.msra.mxu0 0.0
  %552 = vmatprep.subr.mxu0 0.0
  %553 = vmatpush1.xpose.msra.mxu0 0.0
  %554 = vmatprep.subr.mxu0 0.0
  %555 = vmatpush1.xpose.msra.mxu0 0.0
  %556 = vmatprep.subr.mxu0 0.0
  %557 = vmatpush1.xpose.msra.mxu0 0.0
  %558 = vmatprep.subr.mxu0 0.0
  %559 = vmatpush1.xpose.msra.mxu0 0.0
  %560 = vmatprep.subr.mxu0 0.0
  %561 = vmatpush1.xpose.msra.mxu0 0.0
  %562 = vmatprep.subr.mxu0 0.0
  %563 = vmatpush1.xpose.msra.mxu0 0.0
  %564 = vmatprep.subr.mxu0 0.0
  %565 = vmatpush1.xpose.msra.mxu0 0.0
  %566 = vmatprep.subr.mxu0 0.0
  %567 = vmatpush1.xpose.msra.mxu0 0.0
  %568 = vmatprep.subr.mxu0 0.0
  %569 = vmatpush1.xpose.msra.mxu0 0.0
  %570 = vmatprep.subr.mxu0 0.0
  %571 = vmatpush1.xpose.msra.mxu0 0.0
  %572 = vmatprep.subr.mxu0 0.0
  %573 = vmatpush1.xpose.msra.mxu0 0.0
  %574 = vmatprep.subr.mxu0 0.0
  %575 = vmatpush1.xpose.msra.mxu0 0.0
  %576 = vmatprep.subr.mxu0 0.0
  %577 = vmatpush1.xpose.msra.mxu0 0.0
  %578 = vmatprep.subr.mxu0 0.0
  %579 = vmatpush1.xpose.msra.mxu0 0.0
  %580 = vmatprep.subr.mxu0 0.0
  %581 = vmatpush1.xpose.msra.mxu0 0.0
  %582 = vmatprep.subr.mxu0 0.0
  %583 = vmatpush1.xpose.msra.mxu0 0.0
  %584 = vmatprep.subr.mxu0 0.0
  %585 = vmatpush1.xpose.msra.mxu0 0.0
  %586 = vmatprep.subr.mxu0 0.0
  %587 = vmatpush1.xpose.msra.mxu0 0.0
  %588 = vmatprep.subr.mxu0 0.0
  %589 = vmatpush1.xpose.msra.mxu0 0.0
  %590 = vmatprep.subr.mxu0 0.0
  %591 = vmatpush1.xpose.msra.mxu0 0.0
  %592 = vmatprep.subr.mxu0 0.0
  %593 = vmatpush1.xpose.msra.mxu0 0.0
  %594 = vmatprep.subr.mxu0 0.0
  %595 = vmatpush1.xpose.msra.mxu0 0.0
  %596 = vmatprep.subr.mxu0 0.0
  %597 = vmatpush1.xpose.msra.mxu0 0.0
  %598 = vmatprep.subr.mxu0 0.0
  %599 = vmatpush1.xpose.msra.mxu0 0.0
  %600 = vmatprep.subr.mxu0 0.0
  %601 = vmatpush1.xpose.msra.mxu0 0.0
  %602 = vmatprep.subr.mxu0 0.0
  %603 = vmatpush1.xpose.msra.mxu0 0.0
  %604 = vmatprep.subr.mxu0 0.0
  %605 = vmatpush1.xpose.msra.mxu0 0.0
  %606 = vmatprep.subr.mxu0 0.0
  %607 = vmatpush1.xpose.msra.mxu0 0.0
  %608 = vmatprep.subr.mxu0 0.0
  %609 = vmatpush1.xpose.msra.mxu0 0.0
  %610 = vmatprep.mubr.f32.mxu0 0.0
  %611 = vmatmul.mubr.f32.gmra.mrb[0].mxu0 %v542
  %v612 = vpop.f32.mrb[0].mxu0
  %v613 = vadd.f32 0.0, %v612
  %v614 = vpop.f32.mrb[0].mxu0
  %615 = vdwg.mxu0
  %616 = vrot.lane.b32.xlu0 %v201, 112
  %v617 = vpop.permute.xlu0 %616
  %618 = vrot.lane.b32.xlu0 %v201, 80
  %v619 = vpop.permute.xlu0 %618
  %v620 = vsel %vm207, %v617, 0
  %v622 = vsel %vm207, %v619, 0
  %624 = vmatprep.subr.mxu0 0.0
  %625 = vmatpush1.xpose.msra.mxu0 %v622
  %626 = vmatprep.subr.mxu0 0.0
  %627 = vmatpush1.xpose.msra.mxu0 0.0
  %628 = vmatprep.subr.mxu0 0.0
  %629 = vmatpush1.xpose.msra.mxu0 0.0
  %630 = vmatprep.subr.mxu0 0.0
  %631 = vmatpush1.xpose.msra.mxu0 0.0
  %632 = vmatprep.subr.mxu0 0.0
  %633 = vmatpush1.xpose.msra.mxu0 0.0
  %634 = vmatprep.subr.mxu0 0.0
  %635 = vmatpush1.xpose.msra.mxu0 0.0
  %636 = vmatprep.subr.mxu0 0.0
  %637 = vmatpush1.xpose.msra.mxu0 0.0
  %638 = vmatprep.subr.mxu0 0.0
  %639 = vmatpush1.xpose.msra.mxu0 0.0
  %640 = vmatprep.subr.mxu0 0.0
  %641 = vmatpush1.xpose.msra.mxu0 0.0
  %642 = vmatprep.subr.mxu0 0.0
  %643 = vmatpush1.xpose.msra.mxu0 0.0
  %644 = vmatprep.subr.mxu0 0.0
  %645 = vmatpush1.xpose.msra.mxu0 0.0
  %646 = vmatprep.subr.mxu0 0.0
  %647 = vmatpush1.xpose.msra.mxu0 0.0
  %648 = vmatprep.subr.mxu0 0.0
  %649 = vmatpush1.xpose.msra.mxu0 0.0
  %650 = vmatprep.subr.mxu0 0.0
  %651 = vmatpush1.xpose.msra.mxu0 0.0
  %652 = vmatprep.subr.mxu0 0.0
  %653 = vmatpush1.xpose.msra.mxu0 0.0
  %654 = vmatprep.subr.mxu0 0.0
  %655 = vmatpush1.xpose.msra.mxu0 0.0
  %656 = vmatprep.subr.mxu0 0.0
  %657 = vmatpush1.xpose.msra.mxu0 0.0
  %658 = vmatprep.subr.mxu0 0.0
  %659 = vmatpush1.xpose.msra.mxu0 0.0
  %660 = vmatprep.subr.mxu0 0.0
  %661 = vmatpush1.xpose.msra.mxu0 0.0
  %662 = vmatprep.subr.mxu0 0.0
  %663 = vmatpush1.xpose.msra.mxu0 0.0
  %664 = vmatprep.subr.mxu0 0.0
  %665 = vmatpush1.xpose.msra.mxu0 0.0
  %666 = vmatprep.subr.mxu0 0.0
  %667 = vmatpush1.xpose.msra.mxu0 0.0
  %668 = vmatprep.subr.mxu0 0.0
  %669 = vmatpush1.xpose.msra.mxu0 0.0
  %670 = vmatprep.subr.mxu0 0.0
  %671 = vmatpush1.xpose.msra.mxu0 0.0
  %672 = vmatprep.subr.mxu0 0.0
  %673 = vmatpush1.xpose.msra.mxu0 0.0
  %674 = vmatprep.subr.mxu0 0.0
  %675 = vmatpush1.xpose.msra.mxu0 0.0
  %676 = vmatprep.subr.mxu0 0.0
  %677 = vmatpush1.xpose.msra.mxu0 0.0
  %678 = vmatprep.subr.mxu0 0.0
  %679 = vmatpush1.xpose.msra.mxu0 0.0
  %680 = vmatprep.subr.mxu0 0.0
  %681 = vmatpush1.xpose.msra.mxu0 0.0
  %682 = vmatprep.subr.mxu0 0.0
  %683 = vmatpush1.xpose.msra.mxu0 0.0
  %684 = vmatprep.subr.mxu0 0.0
  %685 = vmatpush1.xpose.msra.mxu0 0.0
  %686 = vmatprep.subr.mxu0 0.0
  %687 = vmatpush1.xpose.msra.mxu0 0.0
  %688 = vmatprep.mubr.f32.mxu0 0.0
  %689 = vmatmul.mubr.f32.gmra.mrb[0].mxu0 %v620
  %v690 = vpop.f32.mrb[0].mxu0
  %v691 = vadd.f32 0.0, %v690
  %v692 = vpop.f32.mrb[0].mxu0
  %693 = vdwg.mxu0
  %v694 = vmul.f32 %v613, 0.25
  %v695 = vmul.f32 %v691, 0.25
  %v696 = vadd.f32 %v694, %v107
  %v697 = vadd.f32 %v695, %v111
  %v698 = vsel %vm363, %v696, -inf
  %699 = vmax.xlane.f32.xlu0 %v698
  %v700 = vpop.xlane.xlu0 %699
  %v701 = vsel %vm363, %v697, -inf
  %702 = vmax.xlane.f32.xlu0 %v701
  %v703 = vpop.xlane.xlu0 %702
  %v704 = vsub.f32 %v696, %v700
  %v705 = vsub.f32 %v697, %v703
  %v706 = vmul.f32 %v704, 1.442695
  %v707 = vpow.pop %v706
  %v708 = vmul.f32 %v705, 1.442695
  %v709 = vpow.pop %v708
  %v710 = vsel %vm363, %v707, 0.0
  %711 = vadd.xlane.f32.xlu0 %v710
  %v712 = vpop.xlane.xlu0 %711
  %v713 = vsel %vm363, %v709, 0.0
  %714 = vadd.xlane.f32.xlu0 %v713
  %v715 = vpop.xlane.xlu0 %714
  %v716 = vrcp.pop %v712
  %v717 = vrcp.pop %v715
  %v718 = vmul.f32 %v707, %v716
  %v719 = vmul.f32 %v709, %v717
  %720 = vrot.lane.b32.xlu0 %v196, 48
  %v721 = vpop.permute.xlu0 %720
  %v724 = vsel %vm363, %v718, 0
  %726 = vmatprep.subr.mxu0 0.0
  %727 = vmatpush1.msra.mxu0 %v721
  %728 = vmatprep.subr.mxu0 0.0
  %729 = vmatpush1.msra.mxu0 0.0
  %730 = vmatprep.subr.mxu0 0.0
  %731 = vmatpush1.msra.mxu0 0.0
  %732 = vmatprep.subr.mxu0 0.0
  %733 = vmatpush1.msra.mxu0 0.0
  %734 = vmatprep.subr.mxu0 0.0
  %735 = vmatpush1.msra.mxu0 0.0
  %736 = vmatprep.subr.mxu0 0.0
  %737 = vmatpush1.msra.mxu0 0.0
  %738 = vmatprep.subr.mxu0 0.0
  %739 = vmatpush1.msra.mxu0 0.0
  %740 = vmatprep.subr.mxu0 0.0
  %741 = vmatpush1.msra.mxu0 0.0
  %742 = vmatprep.subr.mxu0 0.0
  %743 = vmatpush1.msra.mxu0 0.0
  %744 = vmatprep.subr.mxu0 0.0
  %745 = vmatpush1.msra.mxu0 0.0
  %746 = vmatprep.subr.mxu0 0.0
  %747 = vmatpush1.msra.mxu0 0.0
  %748 = vmatprep.subr.mxu0 0.0
  %749 = vmatpush1.msra.mxu0 0.0
  %750 = vmatprep.subr.mxu0 0.0
  %751 = vmatpush1.msra.mxu0 0.0
  %752 = vmatprep.subr.mxu0 0.0
  %753 = vmatpush1.msra.mxu0 0.0
  %754 = vmatprep.subr.mxu0 0.0
  %755 = vmatpush1.msra.mxu0 0.0
  %756 = vmatprep.subr.mxu0 0.0
  %757 = vmatpush1.msra.mxu0 0.0
  %758 = vmatprep.subr.mxu0 0.0
  %759 = vmatpush1.msra.mxu0 0.0
  %760 = vmatprep.subr.mxu0 0.0
  %761 = vmatpush1.msra.mxu0 0.0
  %762 = vmatprep.subr.mxu0 0.0
  %763 = vmatpush1.msra.mxu0 0.0
  %764 = vmatprep.subr.mxu0 0.0
  %765 = vmatpush1.msra.mxu0 0.0
  %766 = vmatprep.subr.mxu0 0.0
  %767 = vmatpush1.msra.mxu0 0.0
  %768 = vmatprep.subr.mxu0 0.0
  %769 = vmatpush1.msra.mxu0 0.0
  %770 = vmatprep.subr.mxu0 0.0
  %771 = vmatpush1.msra.mxu0 0.0
  %772 = vmatprep.subr.mxu0 0.0
  %773 = vmatpush1.msra.mxu0 0.0
  %774 = vmatprep.subr.mxu0 0.0
  %775 = vmatpush1.msra.mxu0 0.0
  %776 = vmatprep.subr.mxu0 0.0
  %777 = vmatpush1.msra.mxu0 0.0
  %778 = vmatprep.subr.mxu0 0.0
  %779 = vmatpush1.msra.mxu0 0.0
  %780 = vmatprep.subr.mxu0 0.0
  %781 = vmatpush1.msra.mxu0 0.0
  %782 = vmatprep.subr.mxu0 0.0
  %783 = vmatpush1.msra.mxu0 0.0
  %784 = vmatprep.subr.mxu0 0.0
  %785 = vmatpush1.msra.mxu0 0.0
  %786 = vmatprep.subr.mxu0 0.0
  %787 = vmatpush1.msra.mxu0 0.0
  %788 = vmatprep.subr.mxu0 0.0
  %789 = vmatpush1.msra.mxu0 0.0
  %790 = vmatprep.mubr.f32.mxu0 0.0
  %791 = vmatmul.mubr.f32.gmra.mrb[0].mxu0 %v724
  %v792 = vpop.f32.mrb[0].mxu0
  %v793 = vadd.f32 0.0, %v792
  %v794 = vpop.f32.mrb[0].mxu0
  %795 = vdwg.mxu0
  %796 = vrot.lane.b32.xlu0 %v201, 48
  %v797 = vpop.permute.xlu0 %796
  %v800 = vsel %vm363, %v719, 0
  %802 = vmatprep.subr.mxu0 0.0
  %803 = vmatpush1.msra.mxu0 %v797
  %804 = vmatprep.subr.mxu0 0.0
  %805 = vmatpush1.msra.mxu0 0.0
  %806 = vmatprep.subr.mxu0 0.0
  %807 = vmatpush1.msra.mxu0 0.0
  %808 = vmatprep.subr.mxu0 0.0
  %809 = vmatpush1.msra.mxu0 0.0
  %810 = vmatprep.subr.mxu0 0.0
  %811 = vmatpush1.msra.mxu0 0.0
  %812 = vmatprep.subr.mxu0 0.0
  %813 = vmatpush1.msra.mxu0 0.0
  %814 = vmatprep.subr.mxu0 0.0
  %815 = vmatpush1.msra.mxu0 0.0
  %816 = vmatprep.subr.mxu0 0.0
  %817 = vmatpush1.msra.mxu0 0.0
  %818 = vmatprep.subr.mxu0 0.0
  %819 = vmatpush1.msra.mxu0 0.0
  %820 = vmatprep.subr.mxu0 0.0
  %821 = vmatpush1.msra.mxu0 0.0
  %822 = vmatprep.subr.mxu0 0.0
  %823 = vmatpush1.msra.mxu0 0.0
  %824 = vmatprep.subr.mxu0 0.0
  %825 = vmatpush1.msra.mxu0 0.0
  %826 = vmatprep.subr.mxu0 0.0
  %827 = vmatpush1.msra.mxu0 0.0
  %828 = vmatprep.subr.mxu0 0.0
  %829 = vmatpush1.msra.mxu0 0.0
  %830 = vmatprep.subr.mxu0 0.0
  %831 = vmatpush1.msra.mxu0 0.0
  %832 = vmatprep.subr.mxu0 0.0
  %833 = vmatpush1.msra.mxu0 0.0
  %834 = vmatprep.subr.mxu0 0.0
  %835 = vmatpush1.msra.mxu0 0.0
  %836 = vmatprep.subr.mxu0 0.0
  %837 = vmatpush1.msra.mxu0 0.0
  %838 = vmatprep.subr.mxu0 0.0
  %839 = vmatpush1.msra.mxu0 0.0
  %840 = vmatprep.subr.mxu0 0.0
  %841 = vmatpush1.msra.mxu0 0.0
  %842 = vmatprep.subr.mxu0 0.0
  %843 = vmatpush1.msra.mxu0 0.0
  %844 = vmatprep.subr.mxu0 0.0
  %845 = vmatpush1.msra.mxu0 0.0
  %846 = vmatprep.subr.mxu0 0.0
  %847 = vmatpush1.msra.mxu0 0.0
  %848 = vmatprep.subr.mxu0 0.0
  %849 = vmatpush1.msra.mxu0 0.0
  %850 = vmatprep.subr.mxu0 0.0
  %851 = vmatpush1.msra.mxu0 0.0
  %852 = vmatprep.subr.mxu0 0.0
  %853 = vmatpush1.msra.mxu0 0.0
  %854 = vmatprep.subr.mxu0 0.0
  %855 = vmatpush1.msra.mxu0 0.0
  %856 = vmatprep.subr.mxu0 0.0
  %857 = vmatpush1.msra.mxu0 0.0
  %858 = vmatprep.subr.mxu0 0.0
  %859 = vmatpush1.msra.mxu0 0.0
  %860 = vmatprep.subr.mxu0 0.0
  %861 = vmatpush1.msra.mxu0 0.0
  %862 = vmatprep.subr.mxu0 0.0
  %863 = vmatpush1.msra.mxu0 0.0
  %864 = vmatprep.subr.mxu0 0.0
  %865 = vmatpush1.msra.mxu0 0.0
  %866 = vmatprep.mubr.f32.mxu0 0.0
  %867 = vmatmul.mubr.f32.gmra.mrb[0].mxu0 %v800
  %v868 = vpop.f32.mrb[0].mxu0
  %v869 = vadd.f32 0.0, %v868
  %v870 = vpop.f32.mrb[0].mxu0
  %871 = vdwg.mxu0
  %874 = vrot.lane.b32.xlu0 %v793, 16
  %v875 = vpop.permute.xlu0 %874
  %876 = vrot.lane.b32.xlu0 %v869, 16
  %v877 = vpop.permute.xlu0 %876
  %v880 = vsel %vm207, %v459, %v875
  %v881 = vsel %vm207, %v535, %v877
  %v882 = vld [vmem:[%s4] sm:$0xff]
  %v883 = vld [vmem:[%s4 + $0x8] sm:$0xff]
  %v884 = vld [vmem:[%s4 + $0x10] sm:$0xff]
  %v885 = vld [vmem:[%s4 + $0x18] sm:$0xff]
  %v886 = vld [vmem:[%s2 + $0x3] sm:$0x1]
  %v887 = vlaneseq
  %v888 = vshrl.u32 %v887, 7
  %v889 = vsub.s32 0, %v888
  %v890 = vrot.slane %v886, %v889
  %v892 = vsel %vm35, %v880, 0
  %v895 = vsel %vm35, %v881, 0
  %897 = vmatprep.subr.mxu0 0.0
  %898 = vmatpush1.msra.mxu0 %v882
  %899 = vmatprep.subr.mxu0 0.0
  %900 = vmatpush1.msra.mxu0 %v883
  %901 = vmatprep.subr.mxu0 0.0
  %902 = vmatpush1.msra.mxu0 %v884
  %903 = vmatprep.subr.mxu0 0.0
  %904 = vmatpush1.msra.mxu0 %v885
  %905 = vmatprep.subr.mxu0 0.0
  %906 = vmatpush1.msra.mxu0 0.0
  %907 = vmatprep.subr.mxu0 0.0
  %908 = vmatpush1.msra.mxu0 0.0
  %909 = vmatprep.subr.mxu0 0.0
  %910 = vmatpush1.msra.mxu0 0.0
  %911 = vmatprep.subr.mxu0 0.0
  %912 = vmatpush1.msra.mxu0 0.0
  %913 = vmatprep.subr.mxu0 0.0
  %914 = vmatpush1.msra.mxu0 0.0
  %915 = vmatprep.subr.mxu0 0.0
  %916 = vmatpush1.msra.mxu0 0.0
  %917 = vmatprep.subr.mxu0 0.0
  %918 = vmatpush1.msra.mxu0 0.0
  %919 = vmatprep.subr.mxu0 0.0
  %920 = vmatpush1.msra.mxu0 0.0
  %921 = vmatprep.subr.mxu0 0.0
  %922 = vmatpush1.msra.mxu0 0.0
  %923 = vmatprep.subr.mxu0 0.0
  %924 = vmatpush1.msra.mxu0 0.0
  %925 = vmatprep.subr.mxu0 0.0
  %926 = vmatpush1.msra.mxu0 0.0
  %927 = vmatprep.subr.mxu0 0.0
  %928 = vmatpush1.msra.mxu0 0.0
  %929 = vmatprep.subr.mxu0 0.0
  %930 = vmatpush1.msra.mxu0 0.0
  %931 = vmatprep.subr.mxu0 0.0
  %932 = vmatpush1.msra.mxu0 0.0
  %933 = vmatprep.subr.mxu0 0.0
  %934 = vmatpush1.msra.mxu0 0.0
  %935 = vmatprep.subr.mxu0 0.0
  %936 = vmatpush1.msra.mxu0 0.0
  %937 = vmatprep.subr.mxu0 0.0
  %938 = vmatpush1.msra.mxu0 0.0
  %939 = vmatprep.subr.mxu0 0.0
  %940 = vmatpush1.msra.mxu0 0.0
  %941 = vmatprep.subr.mxu0 0.0
  %942 = vmatpush1.msra.mxu0 0.0
  %943 = vmatprep.subr.mxu0 0.0
  %944 = vmatpush1.msra.mxu0 0.0
  %945 = vmatprep.subr.mxu0 0.0
  %946 = vmatpush1.msra.mxu0 0.0
  %947 = vmatprep.subr.mxu0 0.0
  %948 = vmatpush1.msra.mxu0 0.0
  %949 = vmatprep.subr.mxu0 0.0
  %950 = vmatpush1.msra.mxu0 0.0
  %951 = vmatprep.subr.mxu0 0.0
  %952 = vmatpush1.msra.mxu0 0.0
  %953 = vmatprep.subr.mxu0 0.0
  %954 = vmatpush1.msra.mxu0 0.0
  %955 = vmatprep.subr.mxu0 0.0
  %956 = vmatpush1.msra.mxu0 0.0
  %957 = vmatprep.subr.mxu0 0.0
  %958 = vmatpush1.msra.mxu0 0.0
  %959 = vmatprep.subr.mxu0 0.0
  %960 = vmatpush1.msra.mxu0 0.0
  %961 = vmatprep.mubr.f32.mxu0 0.0
  %962 = vmatmul.mubr.f32.gmra.mrb[0].mxu0 %v892
  %v963 = vpop.f32.mrb[0].mxu0
  %v964 = vadd.f32 %v890, %v963
  %v965 = vpop.f32.mrb[0].mxu0
  %966 = vmatprep.mubr.f32.mxu0 0.0
  %967 = vmatmul.mubr.f32.gmra.mrb[0].mxu0 %v895
  %v968 = vpop.f32.mrb[0].mxu0
  %v969 = vadd.f32 %v890, %v968
  %v970 = vpop.f32.mrb[0].mxu0
  %971 = vdwg.mxu0
  %v972 = vadd.f32 %v76, %v964
  %v973 = vadd.f32 %v77, %v969
  %v974 = vld [vmem:[%s2 + $0x4] sm:$0x1]
  %v975 = vld [vmem:[%s2 + $0x5] sm:$0x1]
  %v976 = vmul.f32 %v972, %v972
  %v977 = vmul.f32 %v973, %v973
  %v978 = vsel %vm35, %v972, 0.0
  %979 = vadd.xlane.f32.xlu0 %v978
  %v980 = vpop.xlane.xlu0 %979
  %v981 = vsel %vm35, %v973, 0.0
  %982 = vadd.xlane.f32.xlu0 %v981
  %v983 = vpop.xlane.xlu0 %982
  %v984 = vsel %vm35, %v976, 0.0
  %985 = vadd.xlane.f32.xlu0 %v984
  %v986 = vpop.xlane.xlu0 %985
  %v987 = vsel %vm35, %v977, 0.0
  %988 = vadd.xlane.f32.xlu0 %v987
  %v989 = vpop.xlane.xlu0 %988
  %v990 = vmul.f32 %v980, 0.03125
  %v991 = vmul.f32 %v983, 0.03125
  %v992 = vmul.f32 %v986, 0.03125
  %v993 = vmul.f32 %v989, 0.03125
  %v994 = vmul.f32 %v990, %v990
  %v995 = vmul.f32 %v991, %v991
  %v996 = vsub.f32 %v992, %v994
  %v997 = vsub.f32 %v993, %v995
  %v998 = vmax.f32 %v996, 0.0
  %v999 = vmax.f32 %v997, 0.0
  %v1000 = vsub.f32 %v972, %v990
  %v1001 = vsub.f32 %v973, %v991
  %v1002 = vadd.f32 %v998, 1e-12
  %v1003 = vadd.f32 %v999, 1e-12
  %v1004 = vrsqrt.pop %v1002
  %v1005 = vrsqrt.pop %v1003
  %v1006 = vmul.f32 %v1000, %v1004
  %v1007 = vmul.f32 %v1001, %v1005
  %v1008 = vlaneseq
  %v1009 = vshrl.u32 %v1008, 7
  %v1010 = vsub.s32 0, %v1009
  %v1011 = vrot.slane %v974, %v1010
  %v1012 = vmul.f32 %v1006, %v1011
  %v1013 = vmul.f32 %v1007, %v1011
  %v1014 = vlaneseq
  %v1015 = vshrl.u32 %v1014, 7
  %v1016 = vsub.s32 0, %v1015
  %v1017 = vrot.slane %v975, %v1016
  %v1018 = vadd.f32 %v1012, %v1017
  %v1019 = vadd.f32 %v1013, %v1017
  %v1020 = vld [vmem:[%s5] sm:$0xff]
  %v1021 = vld [vmem:[%s5 + $0x8] sm:$0xff]
  %v1022 = vld [vmem:[%s5 + $0x10] sm:$0xff]
  %v1023 = vld [vmem:[%s5 + $0x18] sm:$0xff]
  %v1024 = vld [vmem:[%s2 + $0x6] sm:$0x1]
  %v1025 = vlaneseq
  %v1026 = vshrl.u32 %v1025, 7
  %v1027 = vsub.s32 0, %v1026
  %v1028 = vrot.slane %v1024, %v1027
  %v1030 = vsel %vm35, %v1018, 0
  %v1033 = vsel %vm35, %v1019, 0
  %1035 = vmatprep.subr.mxu0 0.0
  %1036 = vmatpush1.msra.mxu0 %v1020
  %1037 = vmatprep.subr.mxu0 0.0
  %1038 = vmatpush1.msra.mxu0 %v1021
  %1039 = vmatprep.subr.mxu0 0.0
  %1040 = vmatpush1.msra.mxu0 %v1022
  %1041 = vmatprep.subr.mxu0 0.0
  %1042 = vmatpush1.msra.mxu0 %v1023
  %1043 = vmatprep.subr.mxu0 0.0
  %1044 = vmatpush1.msra.mxu0 0.0
  %1045 = vmatprep.subr.mxu0 0.0
  %1046 = vmatpush1.msra.mxu0 0.0
  %1047 = vmatprep.subr.mxu0 0.0
  %1048 = vmatpush1.msra.mxu0 0.0
  %1049 = vmatprep.subr.mxu0 0.0
  %1050 = vmatpush1.msra.mxu0 0.0
  %1051 = vmatprep.subr.mxu0 0.0
  %1052 = vmatpush1.msra.mxu0 0.0
  %1053 = vmatprep.subr.mxu0 0.0
  %1054 = vmatpush1.msra.mxu0 0.0
  %1055 = vmatprep.subr.mxu0 0.0
  %1056 = vmatpush1.msra.mxu0 0.0
  %1057 = vmatprep.subr.mxu0 0.0
  %1058 = vmatpush1.msra.mxu0 0.0
  %1059 = vmatprep.subr.mxu0 0.0
  %1060 = vmatpush1.msra.mxu0 0.0
  %1061 = vmatprep.subr.mxu0 0.0
  %1062 = vmatpush1.msra.mxu0 0.0
  %1063 = vmatprep.subr.mxu0 0.0
  %1064 = vmatpush1.msra.mxu0 0.0
  %1065 = vmatprep.subr.mxu0 0.0
  %1066 = vmatpush1.msra.mxu0 0.0
  %1067 = vmatprep.subr.mxu0 0.0
  %1068 = vmatpush1.msra.mxu0 0.0
  %1069 = vmatprep.subr.mxu0 0.0
  %1070 = vmatpush1.msra.mxu0 0.0
  %1071 = vmatprep.subr.mxu0 0.0
  %1072 = vmatpush1.msra.mxu0 0.0
  %1073 = vmatprep.subr.mxu0 0.0
  %1074 = vmatpush1.msra.mxu0 0.0
  %1075 = vmatprep.subr.mxu0 0.0
  %1076 = vmatpush1.msra.mxu0 0.0
  %1077 = vmatprep.subr.mxu0 0.0
  %1078 = vmatpush1.msra.mxu0 0.0
  %1079 = vmatprep.subr.mxu0 0.0
  %1080 = vmatpush1.msra.mxu0 0.0
  %1081 = vmatprep.subr.mxu0 0.0
  %1082 = vmatpush1.msra.mxu0 0.0
  %1083 = vmatprep.subr.mxu0 0.0
  %1084 = vmatpush1.msra.mxu0 0.0
  %1085 = vmatprep.subr.mxu0 0.0
  %1086 = vmatpush1.msra.mxu0 0.0
  %1087 = vmatprep.subr.mxu0 0.0
  %1088 = vmatpush1.msra.mxu0 0.0
  %1089 = vmatprep.subr.mxu0 0.0
  %1090 = vmatpush1.msra.mxu0 0.0
  %1091 = vmatprep.subr.mxu0 0.0
  %1092 = vmatpush1.msra.mxu0 0.0
  %1093 = vmatprep.subr.mxu0 0.0
  %1094 = vmatpush1.msra.mxu0 0.0
  %1095 = vmatprep.subr.mxu0 0.0
  %1096 = vmatpush1.msra.mxu0 0.0
  %1097 = vmatprep.subr.mxu0 0.0
  %1098 = vmatpush1.msra.mxu0 0.0
  %1099 = vmatprep.mubr.f32.mxu0 0.0
  %1100 = vmatmul.mubr.f32.gmra.mrb[0].mxu0 %v1030
  %v1101 = vpop.f32.mrb[0].mxu0
  %v1102 = vadd.f32 %v1028, %v1101
  %v1103 = vpop.f32.mrb[0].mxu0
  %1104 = vmatprep.mubr.f32.mxu0 0.0
  %1105 = vmatmul.mubr.f32.gmra.mrb[0].mxu0 %v1033
  %v1106 = vpop.f32.mrb[0].mxu0
  %v1107 = vadd.f32 %v1028, %v1106
  %v1108 = vpop.f32.mrb[0].mxu0
  %1109 = vdwg.mxu0
  %v1110 = vmul.f32 %v1102, %v1102
  %v1111 = vmul.f32 %v1107, %v1107
  %v1112 = vmul.f32 %v1102, %v1110
  %v1113 = vmul.f32 %v1107, %v1111
  %v1114 = vmul.f32 %v1112, 0.044715
  %v1115 = vmul.f32 %v1113, 0.044715
  %v1116 = vadd.f32 %v1102, %v1114
  %v1117 = vadd.f32 %v1107, %v1115
  %v1118 = vmul.f32 %v1116, 0.7978846
  %v1119 = vmul.f32 %v1117, 0.7978846
  %v1120 = vtanh.pop %v1118
  %v1121 = vtanh.pop %v1119
  %v1122 = vadd.f32 %v1120, 1.0
  %v1123 = vadd.f32 %v1121, 1.0
  %v1124 = vmul.f32 %v1122, 0.5
  %v1125 = vmul.f32 %v1123, 0.5
  %v1126 = vmul.f32 %v1102, %v1124
  %v1127 = vmul.f32 %v1107, %v1125
  %v1128 = vld [vmem:[%s6] sm:$0xff]
  %v1129 = vld [vmem:[%s6 + $0x8] sm:$0xff]
  %v1130 = vld [vmem:[%s6 + $0x10] sm:$0xff]
  %v1131 = vld [vmem:[%s6 + $0x18] sm:$0xff]
  %v1132 = vld [vmem:[%s6 + $0x20] sm:$0xff]
  %v1133 = vld [vmem:[%s6 + $0x28] sm:$0xff]
  %v1134 = vld [vmem:[%s6 + $0x30] sm:$0xff]
  %v1135 = vld [vmem:[%s6 + $0x38] sm:$0xff]
  %v1136 = vld [vmem:[%s2 + $0x7] sm:$0x1]
  %v1137 = vlaneseq
  %v1138 = vshrl.u32 %v1137, 7
  %v1139 = vsub.s32 0, %v1138
  %v1140 = vrot.slane %v1136, %v1139
  %vm1141 = vcmask 523264
  %v1143 = vsel %vm1141, %v1126, 0
  %v1146 = vsel %vm1141, %v1127, 0
  %1148 = vmatprep.subr.mxu0 0.0
  %1149 = vmatpush1.msra.mxu0 %v1128
  %1150 = vmatprep.subr.mxu0 0.0
  %1151 = vmatpush1.msra.mxu0 %v1129
  %1152 = vmatprep.subr.mxu0 0.0
  %1153 = vmatpush1.msra.mxu0 %v1130
  %1154 = vmatprep.subr.mxu0 0.0
  %1155 = vmatpush1.msra.mxu0 %v1131
  %1156 = vmatprep.subr.mxu0 0.0
  %1157 = vmatpush1.msra.mxu0 %v1132
  %1158 = vmatprep.subr.mxu0 0.0
  %1159 = vmatpush1.msra.mxu0 %v1133
  %1160 = vmatprep.subr.mxu0 0.0
  %1161 = vmatpush1.msra.mxu0 %v1134
  %1162 = vmatprep.subr.mxu0 0.0
  %1163 = vmatpush1.msra.mxu0 %v1135
  %1164 = vmatprep.subr.mxu0 0.0
  %1165 = vmatpush1.msra.mxu0 0.0
  %1166 = vmatprep.subr.mxu0 0.0
  %1167 = vmatpush1.msra.mxu0 0.0
  %1168 = vmatprep.subr.mxu0 0.0
  %1169 = vmatpush1.msra.mxu0 0.0
  %1170 = vmatprep.subr.mxu0 0.0
  %1171 = vmatpush1.msra.mxu0 0.0
  %1172 = vmatprep.subr.mxu0 0.0
  %1173 = vmatpush1.msra.mxu0 0.0
  %1174 = vmatprep.subr.mxu0 0.0
  %1175 = vmatpush1.msra.mxu0 0.0
  %1176 = vmatprep.subr.mxu0 0.0
  %1177 = vmatpush1.msra.mxu0 0.0
  %1178 = vmatprep.subr.mxu0 0.0
  %1179 = vmatpush1.msra.mxu0 0.0
  %1180 = vmatprep.subr.mxu0 0.0
  %1181 = vmatpush1.msra.mxu0 0.0
  %1182 = vmatprep.subr.mxu0 0.0
  %1183 = vmatpush1.msra.mxu0 0.0
  %1184 = vmatprep.subr.mxu0 0.0
  %1185 = vmatpush1.msra.mxu0 0.0
  %1186 = vmatprep.subr.mxu0 0.0
  %1187 = vmatpush1.msra.mxu0 0.0
  %1188 = vmatprep.subr.mxu0 0.0
  %1189 = vmatpush1.msra.mxu0 0.0
  %1190 = vmatprep.subr.mxu0 0.0
  %1191 = vmatpush1.msra.mxu0 0.0
  %1192 = vmatprep.subr.mxu0 0.0
  %1193 = vmatpush1.msra.mxu0 0.0
  %1194 = vmatprep.subr.mxu0 0.0
  %1195 = vmatpush1.msra.mxu0 0.0
  %1196 = vmatprep.subr.mxu0 0.0
  %1197 = vmatpush1.msra.mxu0 0.0
  %1198 = vmatprep.subr.mxu0 0.0
  %1199 = vmatpush1.msra.mxu0 0.0
  %1200 = vmatprep.subr.mxu0 0.0
  %1201 = vmatpush1.msra.mxu0 0.0
  %1202 = vmatprep.subr.mxu0 0.0
  %1203 = vmatpush1.msra.mxu0 0.0
  %1204 = vmatprep.subr.mxu0 0.0
  %1205 = vmatpush1.msra.mxu0 0.0
  %1206 = vmatprep.subr.mxu0 0.0
  %1207 = vmatpush1.msra.mxu0 0.0
  %1208 = vmatprep.subr.mxu0 0.0
  %1209 = vmatpush1.msra.mxu0 0.0
  %1210 = vmatprep.subr.mxu0 0.0
  %1211 = vmatpush1.msra.mxu0 0.0
  %1212 = vmatprep.mubr.f32.mxu0 0.0
  %1213 = vmatmul.mubr.f32.gmra.mrb[0].mxu0 %v1143
  %v1214 = vpop.f32.mrb[0].mxu0
  %v1215 = vadd.f32 %v1140, %v1214
  %v1216 = vpop.f32.mrb[0].mxu0
  %1217 = vmatprep.mubr.f32.mxu0 0.0
  %1218 = vmatmul.mubr.f32.gmra.mrb[0].mxu0 %v1146
  %v1219 = vpop.f32.mrb[0].mxu0
  %v1220 = vadd.f32 %v1140, %v1219
  %v1221 = vpop.f32.mrb[0].mxu0
  %1222 = vdwg.mxu0
  %v1223 = vadd.f32 %v1018, %v1215
  %v1224 = vadd.f32 %v1019, %v1220
  %v1225 = vld [vmem:[%s2 + $0x8] sm:$0x1]
  %v1226 = vld [vmem:[%s2 + $0x9] sm:$0x1]
  %v1227 = vmul.f32 %v1223, %v1223
  %v1228 = vmul.f32 %v1224, %v1224
  %v1229 = vsel %vm35, %v1223, 0.0
  %1230 = vadd.xlane.f32.xlu0 %v1229
  %v1231 = vpop.xlane.xlu0 %1230
  %v1232 = vsel %vm35, %v1224, 0.0
  %1233 = vadd.xlane.f32.xlu0 %v1232
  %v1234 = vpop.xlane.xlu0 %1233
  %v1235 = vsel %vm35, %v1227, 0.0
  %1236 = vadd.xlane.f32.xlu0 %v1235
  %v1237 = vpop.xlane.xlu0 %1236
  %v1238 = vsel %vm35, %v1228, 0.0
  %1239 = vadd.xlane.f32.xlu0 %v1238
  %v1240 = vpop.xlane.xlu0 %1239
  %v1241 = vmul.f32 %v1231, 0.03125
  %v1242 = vmul.f32 %v1234, 0.03125
  %v1243 = vmul.f32 %v1237, 0.03125
  %v1244 = vmul.f32 %v1240, 0.03125
  %v1245 = vmul.f32 %v1241, %v1241
  %v1246 = vmul.f32 %v1242, %v1242
  %v1247 = vsub.f32 %v1243, %v1245
  %v1248 = vsub.f32 %v1244, %v1246
  %v1249 = vmax.f32 %v1247, 0.0
  %v1250 = vmax.f32 %v1248, 0.0
  %v1251 = vsub.f32 %v1223, %v1241
  %v1252 = vsub.f32 %v1224, %v1242
  %v1253 = vadd.f32 %v1249, 1e-12
  %v1254 = vadd.f32 %v1250, 1e-12
  %v1255 = vrsqrt.pop %v1253
  %v1256 = vrsqrt.pop %v1254
  %v1257 = vmul.f32 %v1251, %v1255
  %v1258 = vmul.f32 %v1252, %v1256
  %v1259 = vlaneseq
  %v1260 = vshrl.u32 %v1259, 7
  %v1261 = vsub.s32 0, %v1260
  %v1262 = vrot.slane %v1225, %v1261
  %v1263 = vmul.f32 %v1257, %v1262
  %v1264 = vmul.f32 %v1258, %v1262
  %v1265 = vlaneseq
  %v1266 = vshrl.u32 %v1265, 7
  %v1267 = vsub.s32 0, %v1266
  %v1268 = vrot.slane %v1226, %v1267
  %v1269 = vadd.f32 %v1263, %v1268
  %v1270 = vadd.f32 %v1264, %v1268
  %s1271 = scalar_lea.vmem %s3, 32
  %v1272 = vld [vmem:[%s1271] sm:$0xff]
  %v1273 = vld [vmem:[%s1271 + $0x8] sm:$0xff]
  %v1274 = vld [vmem:[%s1271 + $0x10] sm:$0xff]
  %v1275 = vld [vmem:[%s1271 + $0x18] sm:$0xff]
  %v1276 = vld [vmem:[%s2 + $0xa] sm:$0x1]
  %v1277 = vlaneseq
  %v1278 = vshrl.u32 %v1277, 7
  %v1279 = vsub.s32 0, %v1278
  %v1280 = vrot.slane %v1276, %v1279
  %v1282 = vsel %vm35, %v1269, 0
  %v1285 = vsel %vm35, %v1270, 0
  %1287 = vmatprep.subr.mxu0 0.0
  %1288 = vmatpush1.msra.mxu0 %v1272
  %1289 = vmatprep.subr.mxu0 0.0
  %1290 = vmatpush1.msra.mxu0 %v1273
  %1291 = vmatprep.subr.mxu0 0.0
  %1292 = vmatpush1.msra.mxu0 %v1274
  %1293 = vmatprep.subr.mxu0 0.0
  %1294 = vmatpush1.msra.mxu0 %v1275
  %1295 = vmatprep.subr.mxu0 0.0
  %1296 = vmatpush1.msra.mxu0 0.0
  %1297 = vmatprep.subr.mxu0 0.0
  %1298 = vmatpush1.msra.mxu0 0.0
  %1299 = vmatprep.subr.mxu0 0.0
  %1300 = vmatpush1.msra.mxu0 0.0
  %1301 = vmatprep.subr.mxu0 0.0
  %1302 = vmatpush1.msra.mxu0 0.0
  %1303 = vmatprep.subr.mxu0 0.0
  %1304 = vmatpush1.msra.mxu0 0.0
  %1305 = vmatprep.subr.mxu0 0.0
  %1306 = vmatpush1.msra.mxu0 0.0
  %1307 = vmatprep.subr.mxu0 0.0
  %1308 = vmatpush1.msra.mxu0 0.0
  %1309 = vmatprep.subr.mxu0 0.0
  %1310 = vmatpush1.msra.mxu0 0.0
  %1311 = vmatprep.subr.mxu0 0.0
  %1312 = vmatpush1.msra.mxu0 0.0
  %1313 = vmatprep.subr.mxu0 0.0
  %1314 = vmatpush1.msra.mxu0 0.0
  %1315 = vmatprep.subr.mxu0 0.0
  %1316 = vmatpush1.msra.mxu0 0.0
  %1317 = vmatprep.subr.mxu0 0.0
  %1318 = vmatpush1.msra.mxu0 0.0
  %1319 = vmatprep.subr.mxu0 0.0
  %1320 = vmatpush1.msra.mxu0 0.0
  %1321 = vmatprep.subr.mxu0 0.0
  %1322 = vmatpush1.msra.mxu0 0.0
  %1323 = vmatprep.subr.mxu0 0.0
  %1324 = vmatpush1.msra.mxu0 0.0
  %1325 = vmatprep.subr.mxu0 0.0
  %1326 = vmatpush1.msra.mxu0 0.0
  %1327 = vmatprep.subr.mxu0 0.0
  %1328 = vmatpush1.msra.mxu0 0.0
  %1329 = vmatprep.subr.mxu0 0.0
  %1330 = vmatpush1.msra.mxu0 0.0
  %1331 = vmatprep.subr.mxu0 0.0
  %1332 = vmatpush1.msra.mxu0 0.0
  %1333 = vmatprep.subr.mxu0 0.0
  %1334 = vmatpush1.msra.mxu0 0.0
  %1335 = vmatprep.subr.mxu0 0.0
  %1336 = vmatpush1.msra.mxu0 0.0
  %1337 = vmatprep.subr.mxu0 0.0
  %1338 = vmatpush1.msra.mxu0 0.0
  %1339 = vmatprep.subr.mxu0 0.0
  %1340 = vmatpush1.msra.mxu0 0.0
  %1341 = vmatprep.subr.mxu0 0.0
  %1342 = vmatpush1.msra.mxu0 0.0
  %1343 = vmatprep.subr.mxu0 0.0
  %1344 = vmatpush1.msra.mxu0 0.0
  %1345 = vmatprep.subr.mxu0 0.0
  %1346 = vmatpush1.msra.mxu0 0.0
  %1347 = vmatprep.subr.mxu0 0.0
  %1348 = vmatpush1.msra.mxu0 0.0
  %1349 = vmatprep.subr.mxu0 0.0
  %1350 = vmatpush1.msra.mxu0 0.0
  %1351 = vmatprep.mubr.f32.mxu0 0.0
  %1352 = vmatmul.mubr.f32.gmra.mrb[0].mxu0 %v1282
  %v1353 = vpop.f32.mrb[0].mxu0
  %v1354 = vadd.f32 %v1280, %v1353
  %v1355 = vpop.f32.mrb[0].mxu0
  %1356 = vmatprep.mubr.f32.mxu0 0.0
  %1357 = vmatmul.mubr.f32.gmra.mrb[0].mxu0 %v1285
  %v1358 = vpop.f32.mrb[0].mxu0
  %v1359 = vadd.f32 %v1280, %v1358
  %v1360 = vpop.f32.mrb[0].mxu0
  %1361 = vdwg.mxu0
  %1363 = vrot.lane.b32.xlu0 %v1354, 96
  %v1364 = vpop.permute.xlu0 %1363
  %v1365 = vsel %vm207, %v1354, 0
  %v1367 = vsel %vm207, %v1364, 0
  %1369 = vmatprep.subr.mxu0 0.0
  %1370 = vmatpush1.xpose.msra.mxu0 %v1367
  %1371 = vmatprep.subr.mxu0 0.0
  %1372 = vmatpush1.xpose.msra.mxu0 0.0
  %1373 = vmatprep.subr.mxu0 0.0
  %1374 = vmatpush1.xpose.msra.mxu0 0.0
  %1375 = vmatprep.subr.mxu0 0.0
  %1376 = vmatpush1.xpose.msra.mxu0 0.0
  %1377 = vmatprep.subr.mxu0 0.0
  %1378 = vmatpush1.xpose.msra.mxu0 0.0
  %1379 = vmatprep.subr.mxu0 0.0
  %1380 = vmatpush1.xpose.msra.mxu0 0.0
  %1381 = vmatprep.subr.mxu0 0.0
  %1382 = vmatpush1.xpose.msra.mxu0 0.0
  %1383 = vmatprep.subr.mxu0 0.0
  %1384 = vmatpush1.xpose.msra.mxu0 0.0
  %1385 = vmatprep.subr.mxu0 0.0
  %1386 = vmatpush1.xpose.msra.mxu0 0.0
  %1387 = vmatprep.subr.mxu0 0.0
  %1388 = vmatpush1.xpose.msra.mxu0 0.0
  %1389 = vmatprep.subr.mxu0 0.0
  %1390 = vmatpush1.xpose.msra.mxu0 0.0
  %1391 = vmatprep.subr.mxu0 0.0
  %1392 = vmatpush1.xpose.msra.mxu0 0.0
  %1393 = vmatprep.subr.mxu0 0.0
  %1394 = vmatpush1.xpose.msra.mxu0 0.0
  %1395 = vmatprep.subr.mxu0 0.0
  %1396 = vmatpush1.xpose.msra.mxu0 0.0
  %1397 = vmatprep.subr.mxu0 0.0
  %1398 = vmatpush1.xpose.msra.mxu0 0.0
  %1399 = vmatprep.subr.mxu0 0.0
  %1400 = vmatpush1.xpose.msra.mxu0 0.0
  %1401 = vmatprep.subr.mxu0 0.0
  %1402 = vmatpush1.xpose.msra.mxu0 0.0
  %1403 = vmatprep.subr.mxu0 0.0
  %1404 = vmatpush1.xpose.msra.mxu0 0.0
  %1405 = vmatprep.subr.mxu0 0.0
  %1406 = vmatpush1.xpose.msra.mxu0 0.0
  %1407 = vmatprep.subr.mxu0 0.0
  %1408 = vmatpush1.xpose.msra.mxu0 0.0
  %1409 = vmatprep.subr.mxu0 0.0
  %1410 = vmatpush1.xpose.msra.mxu0 0.0
  %1411 = vmatprep.subr.mxu0 0.0
  %1412 = vmatpush1.xpose.msra.mxu0 0.0
  %1413 = vmatprep.subr.mxu0 0.0
  %1414 = vmatpush1.xpose.msra.mxu0 0.0
  %1415 = vmatprep.subr.mxu0 0.0
  %1416 = vmatpush1.xpose.msra.mxu0 0.0
  %1417 = vmatprep.subr.mxu0 0.0
  %1418 = vmatpush1.xpose.msra.mxu0 0.0
  %1419 = vmatprep.subr.mxu0 0.0
  %1420 = vmatpush1.xpose.msra.mxu0 0.0
  %1421 = vmatprep.subr.mxu0 0.0
  %1422 = vmatpush1.xpose.msra.mxu0 0.0
  %1423 = vmatprep.subr.mxu0 0.0
  %1424 = vmatpush1.xpose.msra.mxu0 0.0
  %1425 = vmatprep.subr.mxu0 0.0
  %1426 = vmatpush1.xpose.msra.mxu0 0.0
  %1427 = vmatprep.subr.mxu0 0.0
  %1428 = vmatpush1.xpose.msra.mxu0 0.0
  %1429 = vmatprep.subr.mxu0 0.0
  %1430 = vmatpush1.xpose.msra.mxu0 0.0
  %1431 = vmatprep.subr.mxu0 0.0
  %1432 = vmatpush1.xpose.msra.mxu0 0.0
  %1433 = vmatprep.mubr.f32.mxu0 0.0
  %1434 = vmatmul.mubr.f32.gmra.mrb[0].mxu0 %v1365
  %v1435 = vpop.f32.mrb[0].mxu0
  %v1436 = vadd.f32 0.0, %v1435
  %v1437 = vpop.f32.mrb[0].mxu0
  %1438 = vdwg.mxu0
  %1440 = vrot.lane.b32.xlu0 %v1359, 96
  %v1441 = vpop.permute.xlu0 %1440
  %v1442 = vsel %vm207, %v1359, 0
  %v1444 = vsel %vm207, %v1441, 0
  %1446 = vmatprep.subr.mxu0 0.0
  %1447 = vmatpush1.xpose.msra.mxu0 %v1444
  %1448 = vmatprep.subr.mxu0 0.0
  %1449 = vmatpush1.xpose.msra.mxu0 0.0
  %1450 = vmatprep.subr.mxu0 0.0
  %1451 = vmatpush1.xpose.msra.mxu0 0.0
  %1452 = vmatprep.subr.mxu0 0.0
  %1453 = vmatpush1.xpose.msra.mxu0 0.0
  %1454 = vmatprep.subr.mxu0 0.0
  %1455 = vmatpush1.xpose.msra.mxu0 0.0
  %1456 = vmatprep.subr.mxu0 0.0
  %1457 = vmatpush1.xpose.msra.mxu0 0.0
  %1458 = vmatprep.subr.mxu0 0.0
  %1459 = vmatpush1.xpose.msra.mxu0 0.0
  %1460 = vmatprep.subr.mxu0 0.0
  %1461 = vmatpush1.xpose.msra.mxu0 0.0
  %1462 = vmatprep.subr.mxu0 0.0
  %1463 = vmatpush1.xpose.msra.mxu0 0.0
  %1464 = vmatprep.subr.mxu0 0.0
  %1465 = vmatpush1.xpose.msra.mxu0 0.0
  %1466 = vmatprep.subr.mxu0 0.0
  %1467 = vmatpush1.xpose.msra.mxu0 0.0
  %1468 = vmatprep.subr.mxu0 0.0
  %1469 = vmatpush1.xpose.msra.mxu0 0.0
  %1470 = vmatprep.subr.mxu0 0.0
  %1471 = vmatpush1.xpose.msra.mxu0 0.0
  %1472 = vmatprep.subr.mxu0 0.0
  %1473 = vmatpush1.xpose.msra.mxu0 0.0
  %1474 = vmatprep.subr.mxu0 0.0
  %1475 = vmatpush1.xpose.msra.mxu0 0.0
  %1476 = vmatprep.subr.mxu0 0.0
  %1477 = vmatpush1.xpose.msra.mxu0 0.0
  %1478 = vmatprep.subr.mxu0 0.0
  %1479 = vmatpush1.xpose.msra.mxu0 0.0
  %1480 = vmatprep.subr.mxu0 0.0
  %1481 = vmatpush1.xpose.msra.mxu0 0.0
  %1482 = vmatprep.subr.mxu0 0.0
  %1483 = vmatpush1.xpose.msra.mxu0 0.0
  %1484 = vmatprep.subr.mxu0 0.0
  %1485 = vmatpush1.xpose.msra.mxu0 0.0
  %1486 = vmatprep.subr.mxu0 0.0
  %1487 = vmatpush1.xpose.msra.mxu0 0.0
  %1488 = vmatprep.subr.mxu0 0.0
  %1489 = vmatpush1.xpose.msra.mxu0 0.0
  %1490 = vmatprep.subr.mxu0 0.0
  %1491 = vmatpush1.xpose.msra.mxu0 0.0
  %1492 = vmatprep.subr.mxu0 0.0
  %1493 = vmatpush1.xpose.msra.mxu0 0.0
  %1494 = vmatprep.subr.mxu0 0.0
  %1495 = vmatpush1.xpose.msra.mxu0 0.0
  %1496 = vmatprep.subr.mxu0 0.0
  %1497 = vmatpush1.xpose.msra.mxu0 0.0
  %1498 = vmatprep.subr.mxu0 0.0
  %1499 = vmatpush1.xpose.msra.mxu0 0.0
  %1500 = vmatprep.subr.mxu0 0.0
  %1501 = vmatpush1.xpose.msra.mxu0 0.0
  %1502 = vmatprep.subr.mxu0 0.0
  %1503 = vmatpush1.xpose.msra.mxu0 0.0
  %1504 = vmatprep.subr.mxu0 0.0
  %1505 = vmatpush1.xpose.msra.mxu0 0.0
  %1506 = vmatprep.subr.mxu0 0.0
  %1507 = vmatpush1.xpose.msra.mxu0 0.0
  %1508 = vmatprep.subr.mxu0 0.0
  %1509 = vmatpush1.xpose.msra.mxu0 0.0
  %1510 = vmatprep.mubr.f32.mxu0 0.0
  %1511 = vmatmul.mubr.f32.gmra.mrb[0].mxu0 %v1442
  %v1512 = vpop.f32.mrb[0].mxu0
  %v1513 = vadd.f32 0.0, %v1512
  %v1514 = vpop.f32.mrb[0].mxu0
  %1515 = vdwg.mxu0
  %v1516 = vmul.f32 %v1436, 0.25
  %v1517 = vmul.f32 %v1513, 0.25
  %v1518 = vadd.f32 %v1516, %v107
  %v1519 = vadd.f32 %v1517, %v111
  %v1520 = vsel %vm363, %v1518, -inf
  %1521 = vmax.xlane.f32.xlu0 %v1520
  %v1522 = vpop.xlane.xlu0 %1521
  %v1523 = vsel %vm363, %v1519, -inf
  %1524 = vmax.xlane.f32.xlu0 %v1523
  %v1525 = vpop.xlane.xlu0 %1524
  %v1526 = vsub.f32 %v1518, %v1522
  %v1527 = vsub.f32 %v1519, %v1525
  %v1528 = vmul.f32 %v1526, 1.442695
  %v1529 = vpow.pop %v1528
  %v1530 = vmul.f32 %v1527, 1.442695
  %v1531 = vpow.pop %v1530
  %v1532 = vsel %vm363, %v1529, 0.0
  %1533 = vadd.xlane.f32.xlu0 %v1532
  %v1534 = vpop.xlane.xlu0 %1533
  %v1535 = vsel %vm363, %v1531, 0.0
  %1536 = vadd.xlane.f32.xlu0 %v1535
  %v1537 = vpop.xlane.xlu0 %1536
  %v1538 = vrcp.pop %v1534
  %v1539 = vrcp.pop %v1537
  %v1540 = vmul.f32 %v1529, %v1538
  %v1541 = vmul.f32 %v1531, %v1539
  %1542 = vrot.lane.b32.xlu0 %v1354, 64
  %v1543 = vpop.permute.xlu0 %1542
  %v1546 = vsel %vm363, %v1540, 0
  %1548 = vmatprep.subr.mxu0 0.0
  %1549 = vmatpush1.msra.mxu0 %v1543
  %1550 = vmatprep.subr.mxu0 0.0
  %1551 = vmatpush1.msra.mxu0 0.0
  %1552 = vmatprep.subr.mxu0 0.0
  %1553 = vmatpush1.msra.mxu0 0.0
  %1554 = vmatprep.subr.mxu0 0.0
  %1555 = vmatpush1.msra.mxu0 0.0
  %1556 = vmatprep.subr.mxu0 0.0
  %1557 = vmatpush1.msra.mxu0 0.0
  %1558 = vmatprep.subr.mxu0 0.0
  %1559 = vmatpush1.msra.mxu0 0.0
  %1560 = vmatprep.subr.mxu0 0.0
  %1561 = vmatpush1.msra.mxu0 0.0
  %1562 = vmatprep.subr.mxu0 0.0
  %1563 = vmatpush1.msra.mxu0 0.0
  %1564 = vmatprep.subr.mxu0 0.0
  %1565 = vmatpush1.msra.mxu0 0.0
  %1566 = vmatprep.subr.mxu0 0.0
  %1567 = vmatpush1.msra.mxu0 0.0
  %1568 = vmatprep.subr.mxu0 0.0
  %1569 = vmatpush1.msra.mxu0 0.0
  %1570 = vmatprep.subr.mxu0 0.0
  %1571 = vmatpush1.msra.mxu0 0.0
  %1572 = vmatprep.subr.mxu0 0.0
  %1573 = vmatpush1.msra.mxu0 0.0
  %1574 = vmatprep.subr.mxu0 0.0
  %1575 = vmatpush1.msra.mxu0 0.0
  %1576 = vmatprep.subr.mxu0 0.0
  %1577 = vmatpush1.msra.mxu0 0.0
  %1578 = vmatprep.subr.mxu0 0.0
  %1579 = vmatpush1.msra.mxu0 0.0
  %1580 = vmatprep.subr.mxu0 0.0
  %1581 = vmatpush1.msra.mxu0 0.0
  %1582 = vmatprep.subr.mxu0 0.0
  %1583 = vmatpush1.msra.mxu0 0.0
  %1584 = vmatprep.subr.mxu0 0.0
  %1585 = vmatpush1.msra.mxu0 0.0
  %1586 = vmatprep.subr.mxu0 0.0
  %1587 = vmatpush1.msra.mxu0 0.0
  %1588 = vmatprep.subr.mxu0 0.0
  %1589 = vmatpush1.msra.mxu0 0.0
  %1590 = vmatprep.subr.mxu0 0.0
  %1591 = vmatpush1.msra.mxu0 0.0
  %1592 = vmatprep.subr.mxu0 0.0
  %1593 = vmatpush1.msra.mxu0 0.0
  %1594 = vmatprep.subr.mxu0 0.0
  %1595 = vmatpush1.msra.mxu0 0.0
  %1596 = vmatprep.subr.mxu0 0.0
  %1597 = vmatpush1.msra.mxu0 0.0
  %1598 = vmatprep.subr.mxu0 0.0
  %1599 = vmatpush1.msra.mxu0 0.0
  %1600 = vmatprep.subr.mxu0 0.0
  %1601 = vmatpush1.msra.mxu0 0.0
  %1602 = vmatprep.subr.mxu0 0.0
  %1603 = vmatpush1.msra.mxu0 0.0
  %1604 = vmatprep.subr.mxu0 0.0
  %1605 = vmatpush1.msra.mxu0 0.0
  %1606 = vmatprep.subr.mxu0 0.0
  %1607 = vmatpush1.msra.mxu0 0.0
  %1608 = vmatprep.subr.mxu0 0.0
  %1609 = vmatpush1.msra.mxu0 0.0
  %1610 = vmatprep.subr.mxu0 0.0
  %1611 = vmatpush1.msra.mxu0 0.0
  %1612 = vmatprep.mubr.f32.mxu0 0.0
  %1613 = vmatmul.mubr.f32.gmra.mrb[0].mxu0 %v1546
  %v1614 = vpop.f32.mrb[0].mxu0
  %v1615 = vadd.f32 0.0, %v1614
  %v1616 = vpop.f32.mrb[0].mxu0
  %1617 = vdwg.mxu0
  %1618 = vrot.lane.b32.xlu0 %v1359, 64
  %v1619 = vpop.permute.xlu0 %1618
  %v1622 = vsel %vm363, %v1541, 0
  %1624 = vmatprep.subr.mxu0 0.0
  %1625 = vmatpush1.msra.mxu0 %v1619
  %1626 = vmatprep.subr.mxu0 0.0
  %1627 = vmatpush1.msra.mxu0 0.0
  %1628 = vmatprep.subr.mxu0 0.0
  %1629 = vmatpush1.msra.mxu0 0.0
  %1630 = vmatprep.subr.mxu0 0.0
  %1631 = vmatpush1.msra.mxu0 0.0
  %1632 = vmatprep.subr.mxu0 0.0
  %1633 = vmatpush1.msra.mxu0 0.0
  %1634 = vmatprep.subr.mxu0 0.0
  %1635 = vmatpush1.msra.mxu0 0.0
  %1636 = vmatprep.subr.mxu0 0.0
  %1637 = vmatpush1.msra.mxu0 0.0
  %1638 = vmatprep.subr.mxu0 0.0
  %1639 = vmatpush1.msra.mxu0 0.0
  %1640 = vmatprep.subr.mxu0 0.0
  %1641 = vmatpush1.msra.mxu0 0.0
  %1642 = vmatprep.subr.mxu0 0.0
  %1643 = vmatpush1.msra.mxu0 0.0
  %1644 = vmatprep.subr.mxu0 0.0
  %1645 = vmatpush1.msra.mxu0 0.0
  %1646 = vmatprep.subr.mxu0 0.0
  %1647 = vmatpush1.msra.mxu0 0.0
  %1648 = vmatprep.subr.mxu0 0.0
  %1649 = vmatpush1.msra.mxu0 0.0
  %1650 = vmatprep.subr.mxu0 0.0
  %1651 = vmatpush1.msra.mxu0 0.0
  %1652 = vmatprep.subr.mxu0 0.0
  %1653 = vmatpush1.msra.mxu0 0.0
  %1654 = vmatprep.subr.mxu0 0.0
  %1655 = vmatpush1.msra.mxu0 0.0
  %1656 = vmatprep.subr.mxu0 0.0
  %1657 = vmatpush1.msra.mxu0 0.0
  %1658 = vmatprep.subr.mxu0 0.0
  %1659 = vmatpush1.msra.mxu0 0.0
  %1660 = vmatprep.subr.mxu0 0.0
  %1661 = vmatpush1.msra.mxu0 0.0
  %1662 = vmatprep.subr.mxu0 0.0
  %1663 = vmatpush1.msra.mxu0 0.0
  %1664 = vmatprep.subr.mxu0 0.0
  %1665 = vmatpush1.msra.mxu0 0.0
  %1666 = vmatprep.subr.mxu0 0.0
  %1667 = vmatpush1.msra.mxu0 0.0
  %1668 = vmatprep.subr.mxu0 0.0
  %1669 = vmatpush1.msra.mxu0 0.0
  %1670 = vmatprep.subr.mxu0 0.0
  %1671 = vmatpush1.msra.mxu0 0.0
  %1672 = vmatprep.subr.mxu0 0.0
  %1673 = vmatpush1.msra.mxu0 0.0
  %1674 = vmatprep.subr.mxu0 0.0
  %1675 = vmatpush1.msra.mxu0 0.0
  %1676 = vmatprep.subr.mxu0 0.0
  %1677 = vmatpush1.msra.mxu0 0.0
  %1678 = vmatprep.subr.mxu0 0.0
  %1679 = vmatpush1.msra.mxu0 0.0
  %1680 = vmatprep.subr.mxu0 0.0
  %1681 = vmatpush1.msra.mxu0 0.0
  %1682 = vmatprep.subr.mxu0 0.0
  %1683 = vmatpush1.msra.mxu0 0.0
  %1684 = vmatprep.subr.mxu0 0.0
  %1685 = vmatpush1.msra.mxu0 0.0
  %1686 = vmatprep.subr.mxu0 0.0
  %1687 = vmatpush1.msra.mxu0 0.0
  %1688 = vmatprep.mubr.f32.mxu0 0.0
  %1689 = vmatmul.mubr.f32.gmra.mrb[0].mxu0 %v1622
  %v1690 = vpop.f32.mrb[0].mxu0
  %v1691 = vadd.f32 0.0, %v1690
  %v1692 = vpop.f32.mrb[0].mxu0
  %1693 = vdwg.mxu0
  %1694 = vrot.lane.b32.xlu0 %v1354, 112
  %v1695 = vpop.permute.xlu0 %1694
  %1696 = vrot.lane.b32.xlu0 %v1354, 80
  %v1697 = vpop.permute.xlu0 %1696
  %v1698 = vsel %vm207, %v1695, 0
  %v1700 = vsel %vm207, %v1697, 0
  %1702 = vmatprep.subr.mxu0 0.0
  %1703 = vmatpush1.xpose.msra.mxu0 %v1700
  %1704 = vmatprep.subr.mxu0 0.0
  %1705 = vmatpush1.xpose.msra.mxu0 0.0
  %1706 = vmatprep.subr.mxu0 0.0
  %1707 = vmatpush1.xpose.msra.mxu0 0.0
  %1708 = vmatprep.subr.mxu0 0.0
  %1709 = vmatpush1.xpose.msra.mxu0 0.0
  %1710 = vmatprep.subr.mxu0 0.0
  %1711 = vmatpush1.xpose.msra.mxu0 0.0
  %1712 = vmatprep.subr.mxu0 0.0
  %1713 = vmatpush1.xpose.msra.mxu0 0.0
  %1714 = vmatprep.subr.mxu0 0.0
  %1715 = vmatpush1.xpose.msra.mxu0 0.0
  %1716 = vmatprep.subr.mxu0 0.0
  %1717 = vmatpush1.xpose.msra.mxu0 0.0
  %1718 = vmatprep.subr.mxu0 0.0
  %1719 = vmatpush1.xpose.msra.mxu0 0.0
  %1720 = vmatprep.subr.mxu0 0.0
  %1721 = vmatpush1.xpose.msra.mxu0 0.0
  %1722 = vmatprep.subr.mxu0 0.0
  %1723 = vmatpush1.xpose.msra.mxu0 0.0
  %1724 = vmatprep.subr.mxu0 0.0
  %1725 = vmatpush1.xpose.msra.mxu0 0.0
  %1726 = vmatprep.subr.mxu0 0.0
  %1727 = vmatpush1.xpose.msra.mxu0 0.0
  %1728 = vmatprep.subr.mxu0 0.0
  %1729 = vmatpush1.xpose.msra.mxu0 0.0
  %1730 = vmatprep.subr.mxu0 0.0
  %1731 = vmatpush1.xpose.msra.mxu0 0.0
  %1732 = vmatprep.subr.mxu0 0.0
  %1733 = vmatpush1.xpose.msra.mxu0 0.0
  %1734 = vmatprep.subr.mxu0 0.0
  %1735 = vmatpush1.xpose.msra.mxu0 0.0
  %1736 = vmatprep.subr.mxu0 0.0
  %1737 = vmatpush1.xpose.msra.mxu0 0.0
  %1738 = vmatprep.subr.mxu0 0.0
  %1739 = vmatpush1.xpose.msra.mxu0 0.0
  %1740 = vmatprep.subr.mxu0 0.0
  %1741 = vmatpush1.xpose.msra.mxu0 0.0
  %1742 = vmatprep.subr.mxu0 0.0
  %1743 = vmatpush1.xpose.msra.mxu0 0.0
  %1744 = vmatprep.subr.mxu0 0.0
  %1745 = vmatpush1.xpose.msra.mxu0 0.0
  %1746 = vmatprep.subr.mxu0 0.0
  %1747 = vmatpush1.xpose.msra.mxu0 0.0
  %1748 = vmatprep.subr.mxu0 0.0
  %1749 = vmatpush1.xpose.msra.mxu0 0.0
  %1750 = vmatprep.subr.mxu0 0.0
  %1751 = vmatpush1.xpose.msra.mxu0 0.0
  %1752 = vmatprep.subr.mxu0 0.0
  %1753 = vmatpush1.xpose.msra.mxu0 0.0
  %1754 = vmatprep.subr.mxu0 0.0
  %1755 = vmatpush1.xpose.msra.mxu0 0.0
  %1756 = vmatprep.subr.mxu0 0.0
  %1757 = vmatpush1.xpose.msra.mxu0 0.0
  %1758 = vmatprep.subr.mxu0 0.0
  %1759 = vmatpush1.xpose.msra.mxu0 0.0
  %1760 = vmatprep.subr.mxu0 0.0
  %1761 = vmatpush1.xpose.msra.mxu0 0.0
  %1762 = vmatprep.subr.mxu0 0.0
  %1763 = vmatpush1.xpose.msra.mxu0 0.0
  %1764 = vmatprep.subr.mxu0 0.0
  %1765 = vmatpush1.xpose.msra.mxu0 0.0
  %1766 = vmatprep.mubr.f32.mxu0 0.0
  %1767 = vmatmul.mubr.f32.gmra.mrb[0].mxu0 %v1698
  %v1768 = vpop.f32.mrb[0].mxu0
  %v1769 = vadd.f32 0.0, %v1768
  %v1770 = vpop.f32.mrb[0].mxu0
  %1771 = vdwg.mxu0
  %1772 = vrot.lane.b32.xlu0 %v1359, 112
  %v1773 = vpop.permute.xlu0 %1772
  %1774 = vrot.lane.b32.xlu0 %v1359, 80
  %v1775 = vpop.permute.xlu0 %1774
  %v1776 = vsel %vm207, %v1773, 0
  %v1778 = vsel %vm207, %v1775, 0
  %1780 = vmatprep.subr.mxu0 0.0
  %1781 = vmatpush1.xpose.msra.mxu0 %v1778
  %1782 = vmatprep.subr.mxu0 0.0
  %1783 = vmatpush1.xpose.msra.mxu0 0.0
  %1784 = vmatprep.subr.mxu0 0.0
  %1785 = vmatpush1.xpose.msra.mxu0 0.0
  %1786 = vmatprep.subr.mxu0 0.0
  %1787 = vmatpush1.xpose.msra.mxu0 0.0
  %1788 = vmatprep.subr.mxu0 0.0
  %1789 = vmatpush1.xpose.msra.mxu0 0.0
  %1790 = vmatprep.subr.mxu0 0.0
  %1791 = vmatpush1.xpose.msra.mxu0 0.0
  %1792 = vmatprep.subr.mxu0 0.0
  %1793 = vmatpush1.xpose.msra.mxu0 0.0
  %1794 = vmatprep.subr.mxu0 0.0
  %1795 = vmatpush1.xpose.msra.mxu0 0.0
  %1796 = vmatprep.subr.mxu0 0.0
  %1797 = vmatpush1.xpose.msra.mxu0 0.0
  %1798 = vmatprep.subr.mxu0 0.0
  %1799 = vmatpush1.xpose.msra.mxu0 0.0
  %1800 = vmatprep.subr.mxu0 0.0
  %1801 = vmatpush1.xpose.msra.mxu0 0.0
  %1802 = vmatprep.subr.mxu0 0.0
  %1803 = vmatpush1.xpose.msra.mxu0 0.0
  %1804 = vmatprep.subr.mxu0 0.0
  %1805 = vmatpush1.xpose.msra.mxu0 0.0
  %1806 = vmatprep.subr.mxu0 0.0
  %1807 = vmatpush1.xpose.msra.mxu0 0.0
  %1808 = vmatprep.subr.mxu0 0.0
  %1809 = vmatpush1.xpose.msra.mxu0 0.0
  %1810 = vmatprep.subr.mxu0 0.0
  %1811 = vmatpush1.xpose.msra.mxu0 0.0
  %1812 = vmatprep.subr.mxu0 0.0
  %1813 = vmatpush1.xpose.msra.mxu0 0.0
  %1814 = vmatprep.subr.mxu0 0.0
  %1815 = vmatpush1.xpose.msra.mxu0 0.0
  %1816 = vmatprep.subr.mxu0 0.0
  %1817 = vmatpush1.xpose.msra.mxu0 0.0
  %1818 = vmatprep.subr.mxu0 0.0
  %1819 = vmatpush1.xpose.msra.mxu0 0.0
  %1820 = vmatprep.subr.mxu0 0.0
  %1821 = vmatpush1.xpose.msra.mxu0 0.0
  %1822 = vmatprep.subr.mxu0 0.0
  %1823 = vmatpush1.xpose.msra.mxu0 0.0
  %1824 = vmatprep.subr.mxu0 0.0
  %1825 = vmatpush1.xpose.msra.mxu0 0.0
  %1826 = vmatprep.subr.mxu0 0.0
  %1827 = vmatpush1.xpose.msra.mxu0 0.0
  %1828 = vmatprep.subr.mxu0 0.0
  %1829 = vmatpush1.xpose.msra.mxu0 0.0
  %1830 = vmatprep.subr.mxu0 0.0
  %1831 = vmatpush1.xpose.msra.mxu0 0.0
  %1832 = vmatprep.subr.mxu0 0.0
  %1833 = vmatpush1.xpose.msra.mxu0 0.0
  %1834 = vmatprep.subr.mxu0 0.0
  %1835 = vmatpush1.xpose.msra.mxu0 0.0
  %1836 = vmatprep.subr.mxu0 0.0
  %1837 = vmatpush1.xpose.msra.mxu0 0.0
  %1838 = vmatprep.subr.mxu0 0.0
  %1839 = vmatpush1.xpose.msra.mxu0 0.0
  %1840 = vmatprep.subr.mxu0 0.0
  %1841 = vmatpush1.xpose.msra.mxu0 0.0
  %1842 = vmatprep.subr.mxu0 0.0
  %1843 = vmatpush1.xpose.msra.mxu0 0.0
  %1844 = vmatprep.mubr.f32.mxu0 0.0
  %1845 = vmatmul.mubr.f32.gmra.mrb[0].mxu0 %v1776
  %v1846 = vpop.f32.mrb[0].mxu0
  %v1847 = vadd.f32 0.0, %v1846
  %v1848 = vpop.f32.mrb[0].mxu0
  %1849 = vdwg.mxu0
  %v1850 = vmul.f32 %v1769, 0.25
  %v1851 = vmul.f32 %v1847, 0.25
  %v1852 = vadd.f32 %v1850, %v107
  %v1853 = vadd.f32 %v1851, %v111
  %v1854 = vsel %vm363, %v1852, -inf
  %1855 = vmax.xlane.f32.xlu0 %v1854
  %v1856 = vpop.xlane.xlu0 %1855
  %v1857 = vsel %vm363, %v1853, -inf
  %1858 = vmax.xlane.f32.xlu0 %v1857
  %v1859 = vpop.xlane.xlu0 %1858
  %v1860 = vsub.f32 %v1852, %v1856
  %v1861 = vsub.f32 %v1853, %v1859
  %v1862 = vmul.f32 %v1860, 1.442695
  %v1863 = vpow.pop %v1862
  %v1864 = vmul.f32 %v1861, 1.442695
  %v1865 = vpow.pop %v1864
  %v1866 = vsel %vm363, %v1863, 0.0
  %1867 = vadd.xlane.f32.xlu0 %v1866
  %v1868 = vpop.xlane.xlu0 %1867
  %v1869 = vsel %vm363, %v1865, 0.0
  %1870 = vadd.xlane.f32.xlu0 %v1869
  %v1871 = vpop.xlane.xlu0 %1870
  %v1872 = vrcp.pop %v1868
  %v1873 = vrcp.pop %v1871
  %v1874 = vmul.f32 %v1863, %v1872
  %v1875 = vmul.f32 %v1865, %v1873
  %1876 = vrot.lane.b32.xlu0 %v1354, 48
  %v1877 = vpop.permute.xlu0 %1876
  %v1880 = vsel %vm363, %v1874, 0
  %1882 = vmatprep.subr.mxu0 0.0
  %1883 = vmatpush1.msra.mxu0 %v1877
  %1884 = vmatprep.subr.mxu0 0.0
  %1885 = vmatpush1.msra.mxu0 0.0
  %1886 = vmatprep.subr.mxu0 0.0
  %1887 = vmatpush1.msra.mxu0 0.0
  %1888 = vmatprep.subr.mxu0 0.0
  %1889 = vmatpush1.msra.mxu0 0.0
  %1890 = vmatprep.subr.mxu0 0.0
  %1891 = vmatpush1.msra.mxu0 0.0
  %1892 = vmatprep.subr.mxu0 0.0
  %1893 = vmatpush1.msra.mxu0 0.0
  %1894 = vmatprep.subr.mxu0 0.0
  %1895 = vmatpush1.msra.mxu0 0.0
  %1896 = vmatprep.subr.mxu0 0.0
  %1897 = vmatpush1.msra.mxu0 0.0
  %1898 = vmatprep.subr.mxu0 0.0
  %1899 = vmatpush1.msra.mxu0 0.0
  %1900 = vmatprep.subr.mxu0 0.0
  %1901 = vmatpush1.msra.mxu0 0.0
  %1902 = vmatprep.subr.mxu0 0.0
  %1903 = vmatpush1.msra.mxu0 0.0
  %1904 = vmatprep.subr.mxu0 0.0
  %1905 = vmatpush1.msra.mxu0 0.0
  %1906 = vmatprep.subr.mxu0 0.0
  %1907 = vmatpush1.msra.mxu0 0.0
  %1908 = vmatprep.subr.mxu0 0.0
  %1909 = vmatpush1.msra.mxu0 0.0
  %1910 = vmatprep.subr.mxu0 0.0
  %1911 = vmatpush1.msra.mxu0 0.0
  %1912 = vmatprep.subr.mxu0 0.0
  %1913 = vmatpush1.msra.mxu0 0.0
  %1914 = vmatprep.subr.mxu0 0.0
  %1915 = vmatpush1.msra.mxu0 0.0
  %1916 = vmatprep.subr.mxu0 0.0
  %1917 = vmatpush1.msra.mxu0 0.0
  %1918 = vmatprep.subr.mxu0 0.0
  %1919 = vmatpush1.msra.mxu0 0.0
  %1920 = vmatprep.subr.mxu0 0.0
  %1921 = vmatpush1.msra.mxu0 0.0
  %1922 = vmatprep.subr.mxu0 0.0
  %1923 = vmatpush1.msra.mxu0 0.0
  %1924 = vmatprep.subr.mxu0 0.0
  %1925 = vmatpush1.msra.mxu0 0.0
  %1926 = vmatprep.subr.mxu0 0.0
  %1927 = vmatpush1.msra.mxu0 0.0
  %1928 = vmatprep.subr.mxu0 0.0
  %1929 = vmatpush1.msra.mxu0 0.0
  %1930 = vmatprep.subr.mxu0 0.0
  %1931 = vmatpush1.msra.mxu0 0.0
  %1932 = vmatprep.subr.mxu0 0.0
  %1933 = vmatpush1.msra.mxu0 0.0
  %1934 = vmatprep.subr.mxu0 0.0
  %1935 = vmatpush1.msra.mxu0 0.0
  %1936 = vmatprep.subr.mxu0 0.0
  %1937 = vmatpush1.msra.mxu0 0.0
  %1938 = vmatprep.subr.mxu0 0.0
  %1939 = vmatpush1.msra.mxu0 0.0
  %1940 = vmatprep.subr.mxu0 0.0
  %1941 = vmatpush1.msra.mxu0 0.0
  %1942 = vmatprep.subr.mxu0 0.0
  %1943 = vmatpush1.msra.mxu0 0.0
  %1944 = vmatprep.subr.mxu0 0.0
  %1945 = vmatpush1.msra.mxu0 0.0
  %1946 = vmatprep.mubr.f32.mxu0 0.0
  %1947 = vmatmul.mubr.f32.gmra.mrb[0].mxu0 %v1880
  %v1948 = vpop.f32.mrb[0].mxu0
  %v1949 = vadd.f32 0.0, %v1948
  %v1950 = vpop.f32.mrb[0].mxu0
  %1951 = vdwg.mxu0
  %1952 = vrot.lane.b32.xlu0 %v1359, 48
  %v1953 = vpop.permute.xlu0 %1952
  %v1956 = vsel %vm363, %v1875, 0
  %1958 = vmatprep.subr.mxu0 0.0
  %1959 = vmatpush1.msra.mxu0 %v1953
  %1960 = vmatprep.subr.mxu0 0.0
  %1961 = vmatpush1.msra.mxu0 0.0
  %1962 = vmatprep.subr.mxu0 0.0
  %1963 = vmatpush1.msra.mxu0 0.0
  %1964 = vmatprep.subr.mxu0 0.0
  %1965 = vmatpush1.msra.mxu0 0.0
  %1966 = vmatprep.subr.mxu0 0.0
  %1967 = vmatpush1.msra.mxu0 0.0
  %1968 = vmatprep.subr.mxu0 0.0
  %1969 = vmatpush1.msra.mxu0 0.0
  %1970 = vmatprep.subr.mxu0 0.0
  %1971 = vmatpush1.msra.mxu0 0.0
  %1972 = vmatprep.subr.mxu0 0.0
  %1973 = vmatpush1.msra.mxu0 0.0
  %1974 = vmatprep.subr.mxu0 0.0
  %1975 = vmatpush1.msra.mxu0 0.0
  %1976 = vmatprep.subr.mxu0 0.0
  %1977 = vmatpush1.msra.mxu0 0.0
  %1978 = vmatprep.subr.mxu0 0.0
  %1979 = vmatpush1.msra.mxu0 0.0
  %1980 = vmatprep.subr.mxu0 0.0
  %1981 = vmatpush1.msra.mxu0 0.0
  %1982 = vmatprep.subr.mxu0 0.0
  %1983 = vmatpush1.msra.mxu0 0.0
  %1984 = vmatprep.subr.mxu0 0.0
  %1985 = vmatpush1.msra.mxu0 0.0
  %1986 = vmatprep.subr.mxu0 0.0
  %1987 = vmatpush1.msra.mxu0 0.0
  %1988 = vmatprep.subr.mxu0 0.0
  %1989 = vmatpush1.msra.mxu0 0.0
  %1990 = vmatprep.subr.mxu0 0.0
  %1991 = vmatpush1.msra.mxu0 0.0
  %1992 = vmatprep.subr.mxu0 0.0
  %1993 = vmatpush1.msra.mxu0 0.0
  %1994 = vmatprep.subr.mxu0 0.0
  %1995 = vmatpush1.msra.mxu0 0.0
  %1996 = vmatprep.subr.mxu0 0.0
  %1997 = vmatpush1.msra.mxu0 0.0
  %1998 = vmatprep.subr.mxu0 0.0
  %1999 = vmatpush1.msra.mxu0 0.0
  %2000 = vmatprep.subr.mxu0 0.0
  %2001 = vmatpush1.msra.mxu0 0.0
  %2002 = vmatprep.subr.mxu0 0.0
  %2003 = vmatpush1.msra.mxu0 0.0
  %2004 = vmatprep.subr.mxu0 0.0
  %2005 = vmatpush1.msra.mxu0 0.0
  %2006 = vmatprep.subr.mxu0 0.0
  %2007 = vmatpush1.msra.mxu0 0.0
  %2008 = vmatprep.subr.mxu0 0.0
  %2009 = vmatpush1.msra.mxu0 0.0
  %2010 = vmatprep.subr.mxu0 0.0
  %2011 = vmatpush1.msra.mxu0 0.0
  %2012 = vmatprep.subr.mxu0 0.0
  %2013 = vmatpush1.msra.mxu0 0.0
  %2014 = vmatprep.subr.mxu0 0.0
  %2015 = vmatpush1.msra.mxu0 0.0
  %2016 = vmatprep.subr.mxu0 0.0
  %2017 = vmatpush1.msra.mxu0 0.0
  %2018 = vmatprep.subr.mxu0 0.0
  %2019 = vmatpush1.msra.mxu0 0.0
  %2020 = vmatprep.subr.mxu0 0.0
  %2021 = vmatpush1.msra.mxu0 0.0
  %2022 = vmatprep.mubr.f32.mxu0 0.0
  %2023 = vmatmul.mubr.f32.gmra.mrb[0].mxu0 %v1956
  %v2024 = vpop.f32.mrb[0].mxu0
  %v2025 = vadd.f32 0.0, %v2024
  %v2026 = vpop.f32.mrb[0].mxu0
  %2027 = vdwg.mxu0
  %2030 = vrot.lane.b32.xlu0 %v1949, 16
  %v2031 = vpop.permute.xlu0 %2030
  %2032 = vrot.lane.b32.xlu0 %v2025, 16
  %v2033 = vpop.permute.xlu0 %2032
  %v2036 = vsel %vm207, %v1615, %v2031
  %v2037 = vsel %vm207, %v1691, %v2033
  %s2038 = scalar_lea.vmem %s4, 32
  %v2039 = vld [vmem:[%s2038] sm:$0xff]
  %v2040 = vld [vmem:[%s2038 + $0x8] sm:$0xff]
  %v2041 = vld [vmem:[%s2038 + $0x10] sm:$0xff]
  %v2042 = vld [vmem:[%s2038 + $0x18] sm:$0xff]
  %v2043 = vld [vmem:[%s2 + $0xb] sm:$0x1]
  %v2044 = vlaneseq
  %v2045 = vshrl.u32 %v2044, 7
  %v2046 = vsub.s32 0, %v2045
  %v2047 = vrot.slane %v2043, %v2046
  %v2049 = vsel %vm35, %v2036, 0
  %v2052 = vsel %vm35, %v2037, 0
  %2054 = vmatprep.subr.mxu0 0.0
  %2055 = vmatpush1.msra.mxu0 %v2039
  %2056 = vmatprep.subr.mxu0 0.0
  %2057 = vmatpush1.msra.mxu0 %v2040
  %2058 = vmatprep.subr.mxu0 0.0
  %2059 = vmatpush1.msra.mxu0 %v2041
  %2060 = vmatprep.subr.mxu0 0.0
  %2061 = vmatpush1.msra.mxu0 %v2042
  %2062 = vmatprep.subr.mxu0 0.0
  %2063 = vmatpush1.msra.mxu0 0.0
  %2064 = vmatprep.subr.mxu0 0.0
  %2065 = vmatpush1.msra.mxu0 0.0
  %2066 = vmatprep.subr.mxu0 0.0
  %2067 = vmatpush1.msra.mxu0 0.0
  %2068 = vmatprep.subr.mxu0 0.0
  %2069 = vmatpush1.msra.mxu0 0.0
  %2070 = vmatprep.subr.mxu0 0.0
  %2071 = vmatpush1.msra.mxu0 0.0
  %2072 = vmatprep.subr.mxu0 0.0
  %2073 = vmatpush1.msra.mxu0 0.0
  %2074 = vmatprep.subr.mxu0 0.0
  %2075 = vmatpush1.msra.mxu0 0.0
  %2076 = vmatprep.subr.mxu0 0.0
  %2077 = vmatpush1.msra.mxu0 0.0
  %2078 = vmatprep.subr.mxu0 0.0
  %2079 = vmatpush1.msra.mxu0 0.0
  %2080 = vmatprep.subr.mxu0 0.0
  %2081 = vmatpush1.msra.mxu0 0.0
  %2082 = vmatprep.subr.mxu0 0.0
  %2083 = vmatpush1.msra.mxu0 0.0
  %2084 = vmatprep.subr.mxu0 0.0
  %2085 = vmatpush1.msra.mxu0 0.0
  %2086 = vmatprep.subr.mxu0 0.0
  %2087 = vmatpush1.msra.mxu0 0.0
  %2088 = vmatprep.subr.mxu0 0.0
  %2089 = vmatpush1.msra.mxu0 0.0
  %2090 = vmatprep.subr.mxu0 0.0
  %2091 = vmatpush1.msra.mxu0 0.0
  %2092 = vmatprep.subr.mxu0 0.0
  %2093 = vmatpush1.msra.mxu0 0.0
  %2094 = vmatprep.subr.mxu0 0.0
  %2095 = vmatpush1.msra.mxu0 0.0
  %2096 = vmatprep.subr.mxu0 0.0
  %2097 = vmatpush1.msra.mxu0 0.0
  %2098 = vmatprep.subr.mxu0 0.0
  %2099 = vmatpush1.msra.mxu0 0.0
  %2100 = vmatprep.subr.mxu0 0.0
  %2101 = vmatpush1.msra.mxu0 0.0
  %2102 = vmatprep.subr.mxu0 0.0
  %2103 = vmatpush1.msra.mxu0 0.0
  %2104 = vmatprep.subr.mxu0 0.0
  %2105 = vmatpush1.msra.mxu0 0.0
  %2106 = vmatprep.subr.mxu0 0.0
  %2107 = vmatpush1.msra.mxu0 0.0
  %2108 = vmatprep.subr.mxu0 0.0
  %2109 = vmatpush1.msra.mxu0 0.0
  %2110 = vmatprep.subr.mxu0 0.0
  %2111 = vmatpush1.msra.mxu0 0.0
  %2112 = vmatprep.subr.mxu0 0.0
  %2113 = vmatpush1.msra.mxu0 0.0
  %2114 = vmatprep.subr.mxu0 0.0
  %2115 = vmatpush1.msra.mxu0 0.0
  %2116 = vmatprep.subr.mxu0 0.0
  %2117 = vmatpush1.msra.mxu0 0.0
  %2118 = vmatprep.mubr.f32.mxu0 0.0
  %2119 = vmatmul.mubr.f32.gmra.mrb[0].mxu0 %v2049
  %v2120 = vpop.f32.mrb[0].mxu0
  %v2121 = vadd.f32 %v2047, %v2120
  %v2122 = vpop.f32.mrb[0].mxu0
  %2123 = vmatprep.mubr.f32.mxu0 0.0
  %2124 = vmatmul.mubr.f32.gmra.mrb[0].mxu0 %v2052
  %v2125 = vpop.f32.mrb[0].mxu0
  %v2126 = vadd.f32 %v2047, %v2125
  %v2127 = vpop.f32.mrb[0].mxu0
  %2128 = vdwg.mxu0
  %v2129 = vadd.f32 %v1269, %v2121
  %v2130 = vadd.f32 %v1270, %v2126
  %v2131 = vld [vmem:[%s2 + $0xc] sm:$0x1]
  %v2132 = vld [vmem:[%s2 + $0xd] sm:$0x1]
  %v2133 = vmul.f32 %v2129, %v2129
  %v2134 = vmul.f32 %v2130, %v2130
  %v2135 = vsel %vm35, %v2129, 0.0
  %2136 = vadd.xlane.f32.xlu0 %v2135
  %v2137 = vpop.xlane.xlu0 %2136
  %v2138 = vsel %vm35, %v2130, 0.0
  %2139 = vadd.xlane.f32.xlu0 %v2138
  %v2140 = vpop.xlane.xlu0 %2139
  %v2141 = vsel %vm35, %v2133, 0.0
  %2142 = vadd.xlane.f32.xlu0 %v2141
  %v2143 = vpop.xlane.xlu0 %2142
  %v2144 = vsel %vm35, %v2134, 0.0
  %2145 = vadd.xlane.f32.xlu0 %v2144
  %v2146 = vpop.xlane.xlu0 %2145
  %v2147 = vmul.f32 %v2137, 0.03125
  %v2148 = vmul.f32 %v2140, 0.03125
  %v2149 = vmul.f32 %v2143, 0.03125
  %v2150 = vmul.f32 %v2146, 0.03125
  %v2151 = vmul.f32 %v2147, %v2147
  %v2152 = vmul.f32 %v2148, %v2148
  %v2153 = vsub.f32 %v2149, %v2151
  %v2154 = vsub.f32 %v2150, %v2152
  %v2155 = vmax.f32 %v2153, 0.0
  %v2156 = vmax.f32 %v2154, 0.0
  %v2157 = vsub.f32 %v2129, %v2147
  %v2158 = vsub.f32 %v2130, %v2148
  %v2159 = vadd.f32 %v2155, 1e-12
  %v2160 = vadd.f32 %v2156, 1e-12
  %v2161 = vrsqrt.pop %v2159
  %v2162 = vrsqrt.pop %v2160
  %v2163 = vmul.f32 %v2157, %v2161
  %v2164 = vmul.f32 %v2158, %v2162
  %v2165 = vlaneseq
  %v2166 = vshrl.u32 %v2165, 7
  %v2167 = vsub.s32 0, %v2166
  %v2168 = vrot.slane %v2131, %v2167
  %v2169 = vmul.f32 %v2163, %v2168
  %v2170 = vmul.f32 %v2164, %v2168
  %v2171 = vlaneseq
  %v2172 = vshrl.u32 %v2171, 7
  %v2173 = vsub.s32 0, %v2172
  %v2174 = vrot.slane %v2132, %v2173
  %v2175 = vadd.f32 %v2169, %v2174
  %v2176 = vadd.f32 %v2170, %v2174
  %s2177 = scalar_lea.vmem %s5, 32
  %v2178 = vld [vmem:[%s2177] sm:$0xff]
  %v2179 = vld [vmem:[%s2177 + $0x8] sm:$0xff]
  %v2180 = vld [vmem:[%s2177 + $0x10] sm:$0xff]
  %v2181 = vld [vmem:[%s2177 + $0x18] sm:$0xff]
  %v2182 = vld [vmem:[%s2 + $0xe] sm:$0x1]
  %v2183 = vlaneseq
  %v2184 = vshrl.u32 %v2183, 7
  %v2185 = vsub.s32 0, %v2184
  %v2186 = vrot.slane %v2182, %v2185
  %v2188 = vsel %vm35, %v2175, 0
  %v2191 = vsel %vm35, %v2176, 0
  %2193 = vmatprep.subr.mxu0 0.0
  %2194 = vmatpush1.msra.mxu0 %v2178
  %2195 = vmatprep.subr.mxu0 0.0
  %2196 = vmatpush1.msra.mxu0 %v2179
  %2197 = vmatprep.subr.mxu0 0.0
  %2198 = vmatpush1.msra.mxu0 %v2180
  %2199 = vmatprep.subr.mxu0 0.0
  %2200 = vmatpush1.msra.mxu0 %v2181
  %2201 = vmatprep.subr.mxu0 0.0
  %2202 = vmatpush1.msra.mxu0 0.0
  %2203 = vmatprep.subr.mxu0 0.0
  %2204 = vmatpush1.msra.mxu0 0.0
  %2205 = vmatprep.subr.mxu0 0.0
  %2206 = vmatpush1.msra.mxu0 0.0
  %2207 = vmatprep.subr.mxu0 0.0
  %2208 = vmatpush1.msra.mxu0 0.0
  %2209 = vmatprep.subr.mxu0 0.0
  %2210 = vmatpush1.msra.mxu0 0.0
  %2211 = vmatprep.subr.mxu0 0.0
  %2212 = vmatpush1.msra.mxu0 0.0
  %2213 = vmatprep.subr.mxu0 0.0
  %2214 = vmatpush1.msra.mxu0 0.0
  %2215 = vmatprep.subr.mxu0 0.0
  %2216 = vmatpush1.msra.mxu0 0.0
  %2217 = vmatprep.subr.mxu0 0.0
  %2218 = vmatpush1.msra.mxu0 0.0
  %2219 = vmatprep.subr.mxu0 0.0
  %2220 = vmatpush1.msra.mxu0 0.0
  %2221 = vmatprep.subr.mxu0 0.0
  %2222 = vmatpush1.msra.mxu0 0.0
  %2223 = vmatprep.subr.mxu0 0.0
  %2224 = vmatpush1.msra.mxu0 0.0
  %2225 = vmatprep.subr.mxu0 0.0
  %2226 = vmatpush1.msra.mxu0 0.0
  %2227 = vmatprep.subr.mxu0 0.0
  %2228 = vmatpush1.msra.mxu0 0.0
  %2229 = vmatprep.subr.mxu0 0.0
  %2230 = vmatpush1.msra.mxu0 0.0
  %2231 = vmatprep.subr.mxu0 0.0
  %2232 = vmatpush1.msra.mxu0 0.0
  %2233 = vmatprep.subr.mxu0 0.0
  %2234 = vmatpush1.msra.mxu0 0.0
  %2235 = vmatprep.subr.mxu0 0.0
  %2236 = vmatpush1.msra.mxu0 0.0
  %2237 = vmatprep.subr.mxu0 0.0
  %2238 = vmatpush1.msra.mxu0 0.0
  %2239 = vmatprep.subr.mxu0 0.0
  %2240 = vmatpush1.msra.mxu0 0.0
  %2241 = vmatprep.subr.mxu0 0.0
  %2242 = vmatpush1.msra.mxu0 0.0
  %2243 = vmatprep.subr.mxu0 0.0
  %2244 = vmatpush1.msra.mxu0 0.0
  %2245 = vmatprep.subr.mxu0 0.0
  %2246 = vmatpush1.msra.mxu0 0.0
  %2247 = vmatprep.subr.mxu0 0.0
  %2248 = vmatpush1.msra.mxu0 0.0
  %2249 = vmatprep.subr.mxu0 0.0
  %2250 = vmatpush1.msra.mxu0 0.0
  %2251 = vmatprep.subr.mxu0 0.0
  %2252 = vmatpush1.msra.mxu0 0.0
  %2253 = vmatprep.subr.mxu0 0.0
  %2254 = vmatpush1.msra.mxu0 0.0
  %2255 = vmatprep.subr.mxu0 0.0
  %2256 = vmatpush1.msra.mxu0 0.0
  %2257 = vmatprep.mubr.f32.mxu0 0.0
  %2258 = vmatmul.mubr.f32.gmra.mrb[0].mxu0 %v2188
  %v2259 = vpop.f32.mrb[0].mxu0
  %v2260 = vadd.f32 %v2186, %v2259
  %v2261 = vpop.f32.mrb[0].mxu0
  %2262 = vmatprep.mubr.f32.mxu0 0.0
  %2263 = vmatmul.mubr.f32.gmra.mrb[0].mxu0 %v2191
  %v2264 = vpop.f32.mrb[0].mxu0
  %v2265 = vadd.f32 %v2186, %v2264
  %v2266 = vpop.f32.mrb[0].mxu0
  %2267 = vdwg.mxu0
  %v2268 = vmul.f32 %v2260, %v2260
  %v2269 = vmul.f32 %v2265, %v2265
  %v2270 = vmul.f32 %v2260, %v2268
  %v2271 = vmul.f32 %v2265, %v2269
  %v2272 = vmul.f32 %v2270, 0.044715
  %v2273 = vmul.f32 %v2271, 0.044715
  %v2274 = vadd.f32 %v2260, %v2272
  %v2275 = vadd.f32 %v2265, %v2273
  %v2276 = vmul.f32 %v2274, 0.7978846
  %v2277 = vmul.f32 %v2275, 0.7978846
  %v2278 = vtanh.pop %v2276
  %v2279 = vtanh.pop %v2277
  %v2280 = vadd.f32 %v2278, 1.0
  %v2281 = vadd.f32 %v2279, 1.0
  %v2282 = vmul.f32 %v2280, 0.5
  %v2283 = vmul.f32 %v2281, 0.5
  %v2284 = vmul.f32 %v2260, %v2282
  %v2285 = vmul.f32 %v2265, %v2283
  %s2286 = scalar_lea.vmem %s6, 64
  %v2287 = vld [vmem:[%s2286] sm:$0xff]
  %v2288 = vld [vmem:[%s2286 + $0x8] sm:$0xff]
  %v2289 = vld [vmem:[%s2286 + $0x10] sm:$0xff]
  %v2290 = vld [vmem:[%s2286 + $0x18] sm:$0xff]
  %v2291 = vld [vmem:[%s2286 + $0x20] sm:$0xff]
  %v2292 = vld [vmem:[%s2286 + $0x28] sm:$0xff]
  %v2293 = vld [vmem:[%s2286 + $0x30] sm:$0xff]
  %v2294 = vld [vmem:[%s2286 + $0x38] sm:$0xff]
  %v2295 = vld [vmem:[%s2 + $0xf] sm:$0x1]
  %v2296 = vlaneseq
  %v2297 = vshrl.u32 %v2296, 7
  %v2298 = vsub.s32 0, %v2297
  %v2299 = vrot.slane %v2295, %v2298
  %v2301 = vsel %vm1141, %v2284, 0
  %v2304 = vsel %vm1141, %v2285, 0
  %2306 = vmatprep.subr.mxu0 0.0
  %2307 = vmatpush1.msra.mxu0 %v2287
  %2308 = vmatprep.subr.mxu0 0.0
  %2309 = vmatpush1.msra.mxu0 %v2288
  %2310 = vmatprep.subr.mxu0 0.0
  %2311 = vmatpush1.msra.mxu0 %v2289
  %2312 = vmatprep.subr.mxu0 0.0
  %2313 = vmatpush1.msra.mxu0 %v2290
  %2314 = vmatprep.subr.mxu0 0.0
  %2315 = vmatpush1.msra.mxu0 %v2291
  %2316 = vmatprep.subr.mxu0 0.0
  %2317 = vmatpush1.msra.mxu0 %v2292
  %2318 = vmatprep.subr.mxu0 0.0
  %2319 = vmatpush1.msra.mxu0 %v2293
  %2320 = vmatprep.subr.mxu0 0.0
  %2321 = vmatpush1.msra.mxu0 %v2294
  %2322 = vmatprep.subr.mxu0 0.0
  %2323 = vmatpush1.msra.mxu0 0.0
  %2324 = vmatprep.subr.mxu0 0.0
  %2325 = vmatpush1.msra.mxu0 0.0
  %2326 = vmatprep.subr.mxu0 0.0
  %2327 = vmatpush1.msra.mxu0 0.0
  %2328 = vmatprep.subr.mxu0 0.0
  %2329 = vmatpush1.msra.mxu0 0.0
  %2330 = vmatprep.subr.mxu0 0.0
  %2331 = vmatpush1.msra.mxu0 0.0
  %2332 = vmatprep.subr.mxu0 0.0
  %2333 = vmatpush1.msra.mxu0 0.0
  %2334 = vmatprep.subr.mxu0 0.0
  %2335 = vmatpush1.msra.mxu0 0.0
  %2336 = vmatprep.subr.mxu0 0.0
  %2337 = vmatpush1.msra.mxu0 0.0
  %2338 = vmatprep.subr.mxu0 0.0
  %2339 = vmatpush1.msra.mxu0 0.0
  %2340 = vmatprep.subr.mxu0 0.0
  %2341 = vmatpush1.msra.mxu0 0.0
  %2342 = vmatprep.subr.mxu0 0.0
  %2343 = vmatpush1.msra.mxu0 0.0
  %2344 = vmatprep.subr.mxu0 0.0
  %2345 = vmatpush1.msra.mxu0 0.0
  %2346 = vmatprep.subr.mxu0 0.0
  %2347 = vmatpush1.msra.mxu0 0.0
  %2348 = vmatprep.subr.mxu0 0.0
  %2349 = vmatpush1.msra.mxu0 0.0
  %2350 = vmatprep.subr.mxu0 0.0
  %2351 = vmatpush1.msra.mxu0 0.0
  %2352 = vmatprep.subr.mxu0 0.0
  %2353 = vmatpush1.msra.mxu0 0.0
  %2354 = vmatprep.subr.mxu0 0.0
  %2355 = vmatpush1.msra.mxu0 0.0
  %2356 = vmatprep.subr.mxu0 0.0
  %2357 = vmatpush1.msra.mxu0 0.0
  %2358 = vmatprep.subr.mxu0 0.0
  %2359 = vmatpush1.msra.mxu0 0.0
  %2360 = vmatprep.subr.mxu0 0.0
  %2361 = vmatpush1.msra.mxu0 0.0
  %2362 = vmatprep.subr.mxu0 0.0
  %2363 = vmatpush1.msra.mxu0 0.0
  %2364 = vmatprep.subr.mxu0 0.0
  %2365 = vmatpush1.msra.mxu0 0.0
  %2366 = vmatprep.subr.mxu0 0.0
  %2367 = vmatpush1.msra.mxu0 0.0
  %2368 = vmatprep.subr.mxu0 0.0
  %2369 = vmatpush1.msra.mxu0 0.0
  %2370 = vmatprep.mubr.f32.mxu0 0.0
  %2371 = vmatmul.mubr.f32.gmra.mrb[0].mxu0 %v2301
  %v2372 = vpop.f32.mrb[0].mxu0
  %v2373 = vadd.f32 %v2299, %v2372
  %v2374 = vpop.f32.mrb[0].mxu0
  %2375 = vmatprep.mubr.f32.mxu0 0.0
  %2376 = vmatmul.mubr.f32.gmra.mrb[0].mxu0 %v2304
  %v2377 = vpop.f32.mrb[0].mxu0
  %v2378 = vadd.f32 %v2299, %v2377
  %v2379 = vpop.f32.mrb[0].mxu0
  %2380 = vdwg.mxu0
  %v2381 = vadd.f32 %v2175, %v2373
  %v2382 = vadd.f32 %v2176, %v2378
  %v2383 = vld [vmem:[%s2 + $0x10] sm:$0x1]
  %v2384 = vld [vmem:[%s2 + $0x11] sm:$0x1]
  %v2385 = vmul.f32 %v2381, %v2381
  %v2386 = vmul.f32 %v2382, %v2382
  %v2387 = vsel %vm35, %v2381, 0.0
  %2388 = vadd.xlane.f32.xlu0 %v2387
  %v2389 = vpop.xlane.xlu0 %2388
  %v2390 = vsel %vm35, %v2382, 0.0
  %2391 = vadd.xlane.f32.xlu0 %v2390
  %v2392 = vpop.xlane.xlu0 %2391
  %v2393 = vsel %vm35, %v2385, 0.0
  %2394 = vadd.xlane.f32.xlu0 %v2393
  %v2395 = vpop.xlane.xlu0 %2394
  %v2396 = vsel %vm35, %v2386, 0.0
  %2397 = vadd.xlane.f32.xlu0 %v2396
  %v2398 = vpop.xlane.xlu0 %2397
  %v2399 = vmul.f32 %v2389, 0.03125
  %v2400 = vmul.f32 %v2392, 0.03125
  %v2401 = vmul.f32 %v2395, 0.03125
  %v2402 = vmul.f32 %v2398, 0.03125
  %v2403 = vmul.f32 %v2399, %v2399
  %v2404 = vmul.f32 %v2400, %v2400
  %v2405 = vsub.f32 %v2401, %v2403
  %v2406 = vsub.f32 %v2402, %v2404
  %v2407 = vmax.f32 %v2405, 0.0
  %v2408 = vmax.f32 %v2406, 0.0
  %v2409 = vsub.f32 %v2381, %v2399
  %v2410 = vsub.f32 %v2382, %v2400
  %v2411 = vadd.f32 %v2407, 1e-12
  %v2412 = vadd.f32 %v2408, 1e-12
  %v2413 = vrsqrt.pop %v2411
  %v2414 = vrsqrt.pop %v2412
  %v2415 = vmul.f32 %v2409, %v2413
  %v2416 = vmul.f32 %v2410, %v2414
  %v2417 = vlaneseq
  %v2418 = vshrl.u32 %v2417, 7
  %v2419 = vsub.s32 0, %v2418
  %v2420 = vrot.slane %v2383, %v2419
  %v2421 = vmul.f32 %v2415, %v2420
  %v2422 = vmul.f32 %v2416, %v2420
  %v2423 = vlaneseq
  %v2424 = vshrl.u32 %v2423, 7
  %v2425 = vsub.s32 0, %v2424
  %v2426 = vrot.slane %v2384, %v2425
  %v2427 = vadd.f32 %v2421, %v2426
  %v2428 = vadd.f32 %v2422, %v2426
  %v2429 = vcombine.high %v2427, 0.0
  %v2431 = vunpack.c.l.s4 1983009808
  %v2432 = vunpack.c.0.s8 %v2431
  %v2433 = vlaneseq
  %v2434 = vshrl.u32 %v2433, 7
  %v2435 = vsub.s32 %v2432, %v2434
  %v2436 = vrot.slane %v2427, %v2435
  %v2438 = vunpack.c.l.s4 1983009808
  %v2439 = vunpack.c.0.s8 %v2438
  %v2440 = vlaneseq
  %v2441 = vshrl.u32 %v2440, 7
  %v2442 = vsub.s32 %v2439, %v2441
  %v2443 = vrot.slane %v2429, %v2442
  %v2444 = vcombine.high %v2428, 0.0
  %v2446 = vunpack.c.l.s4 1983009808
  %v2447 = vunpack.c.0.s8 %v2446
  %v2448 = vlaneseq
  %v2449 = vshrl.u32 %v2448, 7
  %v2450 = vsub.s32 %v2447, %v2449
  %v2451 = vrot.slane %v2428, %v2450
  %v2453 = vunpack.c.l.s4 1983009808
  %v2454 = vunpack.c.0.s8 %v2453
  %v2455 = vlaneseq
  %v2456 = vshrl.u32 %v2455, 7
  %v2457 = vsub.s32 %v2454, %v2456
  %v2458 = vrot.slane %v2444, %v2457
  %v2459 = vcombine.low %v2436, %v2451
  %v2460 = vcombine.high %v2436, %v2451
  %v2462 = vunpack.c.l.s4 1934713408
  %v2463 = vunpack.c.0.s8 %v2462
  %v2464 = vlaneseq
  %v2465 = vshrl.u32 %v2464, 7
  %v2466 = vsub.s32 %v2463, %v2465
  %v2467 = vrot.slane %v2459, %v2466
  %v2469 = vunpack.c.l.s4 1934713408
  %v2470 = vunpack.c.0.s8 %v2469
  %v2471 = vlaneseq
  %v2472 = vshrl.u32 %v2471, 7
  %v2473 = vsub.s32 %v2470, %v2472
  %v2474 = vrot.slane %v2460, %v2473
  %v2475 = vcombine.low %v2443, %v2458
  %v2476 = vcombine.high %v2443, %v2458
  %v2478 = vunpack.c.l.s4 1934713408
  %v2479 = vunpack.c.0.s8 %v2478
  %v2480 = vlaneseq
  %v2481 = vshrl.u32 %v2480, 7
  %v2482 = vsub.s32 %v2479, %v2481
  %v2483 = vrot.slane %v2475, %v2482
  %v2485 = vunpack.c.l.s4 1934713408
  %v2486 = vunpack.c.0.s8 %v2485
  %v2487 = vlaneseq
  %v2488 = vshrl.u32 %v2487, 7
  %v2489 = vsub.s32 %v2486, %v2488
  %v2490 = vrot.slane %v2476, %v2489
  %v2491 = vcombine.high %v2467, 0.0
  %v2492 = vcombine.high %v2474, 0.0
  %v2493 = vcombine.high %v2483, 0.0
  %v2494 = vcombine.high %v2490, 0.0
  %v2495 = vld [vmem:[%s7] sm:$0xff]
  %v2496 = vld [vmem:[%s7 + $0x8] sm:$0xff]
  %v2497 = vld [vmem:[%s7 + $0x10] sm:$0xff]
  %v2498 = vld [vmem:[%s7 + $0x18] sm:$0xff]
  %v2499 = vld [vmem:[%s7 + $0x20] sm:$0xff]
  %v2500 = vld [vmem:[%s7 + $0x28] sm:$0xff]
  %v2501 = vld [vmem:[%s7 + $0x30] sm:$0xff]
  %v2502 = vld [vmem:[%s7 + $0x38] sm:$0xff]
  %v2503 = vld [vmem:[%s2 + $0x12] sm:$0x1]
  %v2504 = vlaneseq
  %v2505 = vshrl.u32 %v2504, 7
  %v2506 = vsub.s32 0, %v2505
  %v2507 = vrot.slane %v2503, %v2506
  %v2516 = vcombine.low %v2467, %v2491
  %v2517 = vcombine.low %v2474, %v2492
  %v2519 = vunpack.c.l.s4 1983009808
  %v2520 = vunpack.c.0.s8 %v2519
  %v2521 = vlaneseq
  %v2522 = vshrl.u32 %v2521, 7
  %v2523 = vsub.s32 %v2520, %v2522
  %v2524 = vrot.slane %v2516, %v2523
  %v2526 = vunpack.c.l.s4 1983009808
  %v2527 = vunpack.c.0.s8 %v2526
  %v2528 = vlaneseq
  %v2529 = vshrl.u32 %v2528, 7
  %v2530 = vsub.s32 %v2527, %v2529
  %v2531 = vrot.slane %v2517, %v2530
  %v2532 = vcombine.low %v2524, %v2531
  %v2533 = vcombine.low %v2483, %v2493
  %v2534 = vcombine.low %v2490, %v2494
  %v2536 = vunpack.c.l.s4 1983009808
  %v2537 = vunpack.c.0.s8 %v2536
  %v2538 = vlaneseq
  %v2539 = vshrl.u32 %v2538, 7
  %v2540 = vsub.s32 %v2537, %v2539
  %v2541 = vrot.slane %v2533, %v2540
  %v2543 = vunpack.c.l.s4 1983009808
  %v2544 = vunpack.c.0.s8 %v2543
  %v2545 = vlaneseq
  %v2546 = vshrl.u32 %v2545, 7
  %v2547 = vsub.s32 %v2544, %v2546
  %v2548 = vrot.slane %v2534, %v2547
  %v2549 = vcombine.low %v2541, %v2548
  %v2550 = vsel %vm35, %v2532, 0
  %v2552 = vsel %vm35, %v2549, 0
  %2554 = vmatprep.subr.mxu0 0.0
  %2555 = vmatpush1.msra.mxu0 %v2495
  %2556 = vmatprep.subr.mxu0 0.0
  %2557 = vmatpush1.msra.mxu0 %v2496
  %2558 = vmatprep.subr.mxu0 0.0
  %2559 = vmatpush1.msra.mxu0 %v2497
  %2560 = vmatprep.subr.mxu0 0.0
  %2561 = vmatpush1.msra.mxu0 %v2498
  %2562 = vmatprep.subr.mxu0 0.0
  %2563 = vmatpush1.msra.mxu0 0.0
  %2564 = vmatprep.subr.mxu0 0.0
  %2565 = vmatpush1.msra.mxu0 0.0
  %2566 = vmatprep.subr.mxu0 0.0
  %2567 = vmatpush1.msra.mxu0 0.0
  %2568 = vmatprep.subr.mxu0 0.0
  %2569 = vmatpush1.msra.mxu0 0.0
  %2570 = vmatprep.subr.mxu0 0.0
  %2571 = vmatpush1.msra.mxu0 0.0
  %2572 = vmatprep.subr.mxu0 0.0
  %2573 = vmatpush1.msra.mxu0 0.0
  %2574 = vmatprep.subr.mxu0 0.0
  %2575 = vmatpush1.msra.mxu0 0.0
  %2576 = vmatprep.subr.mxu0 0.0
  %2577 = vmatpush1.msra.mxu0 0.0
  %2578 = vmatprep.subr.mxu0 0.0
  %2579 = vmatpush1.msra.mxu0 0.0
  %2580 = vmatprep.subr.mxu0 0.0
  %2581 = vmatpush1.msra.mxu0 0.0
  %2582 = vmatprep.subr.mxu0 0.0
  %2583 = vmatpush1.msra.mxu0 0.0
  %2584 = vmatprep.subr.mxu0 0.0
  %2585 = vmatpush1.msra.mxu0 0.0
  %2586 = vmatprep.subr.mxu0 0.0
  %2587 = vmatpush1.msra.mxu0 0.0
  %2588 = vmatprep.subr.mxu0 0.0
  %2589 = vmatpush1.msra.mxu0 0.0
  %2590 = vmatprep.subr.mxu0 0.0
  %2591 = vmatpush1.msra.mxu0 0.0
  %2592 = vmatprep.subr.mxu0 0.0
  %2593 = vmatpush1.msra.mxu0 0.0
  %2594 = vmatprep.subr.mxu0 0.0
  %2595 = vmatpush1.msra.mxu0 0.0
  %2596 = vmatprep.subr.mxu0 0.0
  %2597 = vmatpush1.msra.mxu0 0.0
  %2598 = vmatprep.subr.mxu0 0.0
  %2599 = vmatpush1.msra.mxu0 0.0
  %2600 = vmatprep.subr.mxu0 0.0
  %2601 = vmatpush1.msra.mxu0 0.0
  %2602 = vmatprep.subr.mxu0 0.0
  %2603 = vmatpush1.msra.mxu0 0.0
  %2604 = vmatprep.subr.mxu0 0.0
  %2605 = vmatpush1.msra.mxu0 0.0
  %2606 = vmatprep.subr.mxu0 0.0
  %2607 = vmatpush1.msra.mxu0 0.0
  %2608 = vmatprep.subr.mxu0 0.0
  %2609 = vmatpush1.msra.mxu0 0.0
  %2610 = vmatprep.subr.mxu0 0.0
  %2611 = vmatpush1.msra.mxu0 0.0
  %2612 = vmatprep.subr.mxu0 0.0
  %2613 = vmatpush1.msra.mxu0 0.0
  %2614 = vmatprep.subr.mxu0 0.0
  %2615 = vmatpush1.msra.mxu0 0.0
  %2616 = vmatprep.subr.mxu0 0.0
  %2617 = vmatpush1.msra.mxu0 0.0
  %2618 = vmatprep.mubr.f32.mxu0 0.0
  %2619 = vmatmul.mubr.f32.gmra.mrb[0].mxu0 %v2550
  %v2620 = vpop.f32.mrb[0].mxu0
  %v2621 = vadd.f32 %v2507, %v2620
  %v2622 = vpop.f32.mrb[0].mxu0
  %2623 = vmatprep.mubr.f32.mxu0 0.0
  %2624 = vmatmul.mubr.f32.gmra.mrb[0].mxu0 %v2552
  %v2625 = vpop.f32.mrb[0].mxu0
  %v2626 = vadd.f32 %v2507, %v2625
  %v2627 = vpop.f32.mrb[0].mxu0
  %2628 = vdwg.mxu0
  %v2630 = vsel %vm35, 0.0, 0
  %2632 = vmatprep.subr.mxu0 0.0
  %2633 = vmatpush1.msra.mxu0 %v2499
  %2634 = vmatprep.subr.mxu0 0.0
  %2635 = vmatpush1.msra.mxu0 %v2500
  %2636 = vmatprep.subr.mxu0 0.0
  %2637 = vmatpush1.msra.mxu0 %v2501
  %2638 = vmatprep.subr.mxu0 0.0
  %2639 = vmatpush1.msra.mxu0 %v2502
  %2640 = vmatprep.subr.mxu0 0.0
  %2641 = vmatpush1.msra.mxu0 0.0
  %2642 = vmatprep.subr.mxu0 0.0
  %2643 = vmatpush1.msra.mxu0 0.0
  %2644 = vmatprep.subr.mxu0 0.0
  %2645 = vmatpush1.msra.mxu0 0.0
  %2646 = vmatprep.subr.mxu0 0.0
  %2647 = vmatpush1.msra.mxu0 0.0
  %2648 = vmatprep.subr.mxu0 0.0
  %2649 = vmatpush1.msra.mxu0 0.0
  %2650 = vmatprep.subr.mxu0 0.0
  %2651 = vmatpush1.msra.mxu0 0.0
  %2652 = vmatprep.subr.mxu0 0.0
  %2653 = vmatpush1.msra.mxu0 0.0
  %2654 = vmatprep.subr.mxu0 0.0
  %2655 = vmatpush1.msra.mxu0 0.0
  %2656 = vmatprep.subr.mxu0 0.0
  %2657 = vmatpush1.msra.mxu0 0.0
  %2658 = vmatprep.subr.mxu0 0.0
  %2659 = vmatpush1.msra.mxu0 0.0
  %2660 = vmatprep.subr.mxu0 0.0
  %2661 = vmatpush1.msra.mxu0 0.0
  %2662 = vmatprep.subr.mxu0 0.0
  %2663 = vmatpush1.msra.mxu0 0.0
  %2664 = vmatprep.subr.mxu0 0.0
  %2665 = vmatpush1.msra.mxu0 0.0
  %2666 = vmatprep.subr.mxu0 0.0
  %2667 = vmatpush1.msra.mxu0 0.0
  %2668 = vmatprep.subr.mxu0 0.0
  %2669 = vmatpush1.msra.mxu0 0.0
  %2670 = vmatprep.subr.mxu0 0.0
  %2671 = vmatpush1.msra.mxu0 0.0
  %2672 = vmatprep.subr.mxu0 0.0
  %2673 = vmatpush1.msra.mxu0 0.0
  %2674 = vmatprep.subr.mxu0 0.0
  %2675 = vmatpush1.msra.mxu0 0.0
  %2676 = vmatprep.subr.mxu0 0.0
  %2677 = vmatpush1.msra.mxu0 0.0
  %2678 = vmatprep.subr.mxu0 0.0
  %2679 = vmatpush1.msra.mxu0 0.0
  %2680 = vmatprep.subr.mxu0 0.0
  %2681 = vmatpush1.msra.mxu0 0.0
  %2682 = vmatprep.subr.mxu0 0.0
  %2683 = vmatpush1.msra.mxu0 0.0
  %2684 = vmatprep.subr.mxu0 0.0
  %2685 = vmatpush1.msra.mxu0 0.0
  %2686 = vmatprep.subr.mxu0 0.0
  %2687 = vmatpush1.msra.mxu0 0.0
  %2688 = vmatprep.subr.mxu0 0.0
  %2689 = vmatpush1.msra.mxu0 0.0
  %2690 = vmatprep.subr.mxu0 0.0
  %2691 = vmatpush1.msra.mxu0 0.0
  %2692 = vmatprep.subr.mxu0 0.0
  %2693 = vmatpush1.msra.mxu0 0.0
  %2694 = vmatprep.subr.mxu0 0.0
  %2695 = vmatpush1.msra.mxu0 0.0
  %2696 = vmatprep.mubr.f32.mxu0 0.0
  %2697 = vmatmul.mubr.f32.gmra.mrb[0].mxu0 %v2630
  %v2698 = vpop.f32.mrb[0].mxu0
  %v2699 = vadd.f32 0.0, %v2698
  %v2700 = vpop.f32.mrb[0].mxu0
  %2701 = vdwg.mxu0
  %v2702 = vadd.f32 %v2621, %v2699
  %v2703 = vxor.u32 %v2702, 2147483648
  %v2704 = vmul.f32 %v2703, 1.442695
  %v2705 = vpow.pop %v2704
  %v2706 = vadd.f32 %v2705, 1.0
  %v2707 = vrcp.pop %v2706
  %v2708 = vmul.f32 1.0, %v2707
  %v2709 = vtanh.pop %v2702
  %v2710 = vmul.f32 %v2708, 0.0
  %2712 = vrot.lane.b32.xlu0 %v2709, 64
  %v2713 = vpop.permute.xlu0 %2712
  %v2715 = vmul.f32 %v2708, %v2713
  %2717 = vrot.lane.b32.xlu0 %v2715, 32
  %v2718 = vpop.permute.xlu0 %2717
  %v2720 = vadd.f32 %v2710, %v2718
  %v2721 = vtanh.pop %v2720
  %2723 = vrot.lane.b32.xlu0 %v2721, 64
  %v2724 = vpop.permute.xlu0 %2723
  %v2726 = vmul.f32 %v2708, %v2724
  %2728 = vrot.lane.b32.xlu0 %v2726, 32
  %v2729 = vpop.permute.xlu0 %2728
  %v2730 = vsel %vm35, %v2729, 0
  %2732 = vmatprep.subr.mxu0 0.0
  %2733 = vmatpush1.msra.mxu0 %v2499
  %2734 = vmatprep.subr.mxu0 0.0
  %2735 = vmatpush1.msra.mxu0 %v2500
  %2736 = vmatprep.subr.mxu0 0.0
  %2737 = vmatpush1.msra.mxu0 %v2501
  %2738 = vmatprep.subr.mxu0 0.0
  %2739 = vmatpush1.msra.mxu0 %v2502
  %2740 = vmatprep.subr.mxu0 0.0
  %2741 = vmatpush1.msra.mxu0 0.0
  %2742 = vmatprep.subr.mxu0 0.0
  %2743 = vmatpush1.msra.mxu0 0.0
  %2744 = vmatprep.subr.mxu0 0.0
  %2745 = vmatpush1.msra.mxu0 0.0
  %2746 = vmatprep.subr.mxu0 0.0
  %2747 = vmatpush1.msra.mxu0 0.0
  %2748 = vmatprep.subr.mxu0 0.0
  %2749 = vmatpush1.msra.mxu0 0.0
  %2750 = vmatprep.subr.mxu0 0.0
  %2751 = vmatpush1.msra.mxu0 0.0
  %2752 = vmatprep.subr.mxu0 0.0
  %2753 = vmatpush1.msra.mxu0 0.0
  %2754 = vmatprep.subr.mxu0 0.0
  %2755 = vmatpush1.msra.mxu0 0.0
  %2756 = vmatprep.subr.mxu0 0.0
  %2757 = vmatpush1.msra.mxu0 0.0
  %2758 = vmatprep.subr.mxu0 0.0
  %2759 = vmatpush1.msra.mxu0 0.0
  %2760 = vmatprep.subr.mxu0 0.0
  %2761 = vmatpush1.msra.mxu0 0.0
  %2762 = vmatprep.subr.mxu0 0.0
  %2763 = vmatpush1.msra.mxu0 0.0
  %2764 = vmatprep.subr.mxu0 0.0
  %2765 = vmatpush1.msra.mxu0 0.0
  %2766 = vmatprep.subr.mxu0 0.0
  %2767 = vmatpush1.msra.mxu0 0.0
  %2768 = vmatprep.subr.mxu0 0.0
  %2769 = vmatpush1.msra.mxu0 0.0
  %2770 = vmatprep.subr.mxu0 0.0
  %2771 = vmatpush1.msra.mxu0 0.0
  %2772 = vmatprep.subr.mxu0 0.0
  %2773 = vmatpush1.msra.mxu0 0.0
  %2774 = vmatprep.subr.mxu0 0.0
  %2775 = vmatpush1.msra.mxu0 0.0
  %2776 = vmatprep.subr.mxu0 0.0
  %2777 = vmatpush1.msra.mxu0 0.0
  %2778 = vmatprep.subr.mxu0 0.0
  %2779 = vmatpush1.msra.mxu0 0.0
  %2780 = vmatprep.subr.mxu0 0.0
  %2781 = vmatpush1.msra.mxu0 0.0
  %2782 = vmatprep.subr.mxu0 0.0
  %2783 = vmatpush1.msra.mxu0 0.0
  %2784 = vmatprep.subr.mxu0 0.0
  %2785 = vmatpush1.msra.mxu0 0.0
  %2786 = vmatprep.subr.mxu0 0.0
  %2787 = vmatpush1.msra.mxu0 0.0
  %2788 = vmatprep.subr.mxu0 0.0
  %2789 = vmatpush1.msra.mxu0 0.0
  %2790 = vmatprep.subr.mxu0 0.0
  %2791 = vmatpush1.msra.mxu0 0.0
  %2792 = vmatprep.subr.mxu0 0.0
  %2793 = vmatpush1.msra.mxu0 0.0
  %2794 = vmatprep.subr.mxu0 0.0
  %2795 = vmatpush1.msra.mxu0 0.0
  %2796 = vmatprep.mubr.f32.mxu0 0.0
  %2797 = vmatmul.mubr.f32.gmra.mrb[0].mxu0 %v2730
  %v2798 = vpop.f32.mrb[0].mxu0
  %v2799 = vadd.f32 0.0, %v2798
  %v2800 = vpop.f32.mrb[0].mxu0
  %2801 = vdwg.mxu0
  %v2803 = vrot.slane %v2799, 6
  %v2805 = vadd.f32 %v2621, %v2803
  %v2806 = vxor.u32 %v2805, 2147483648
  %v2807 = vmul.f32 %v2806, 1.442695
  %v2808 = vpow.pop %v2807
  %v2809 = vadd.f32 %v2808, 1.0
  %v2810 = vrcp.pop %v2809
  %v2811 = vmul.f32 1.0, %v2810
  %v2812 = vtanh.pop %v2805
  %v2814 = vrot.slane %v2720, 6
  %v2816 = vmul.f32 %v2811, %v2814
  %2818 = vrot.lane.b32.xlu0 %v2812, 64
  %v2819 = vpop.permute.xlu0 %2818
  %v2821 = vmul.f32 %v2811, %v2819
  %2823 = vrot.lane.b32.xlu0 %v2821, 32
  %v2824 = vpop.permute.xlu0 %2823
  %v2826 = vadd.f32 %v2816, %v2824
  %v2827 = vtanh.pop %v2826
  %2829 = vrot.lane.b32.xlu0 %v2827, 64
  %v2830 = vpop.permute.xlu0 %2829
  %v2832 = vmul.f32 %v2811, %v2830
  %v2834 = vrot.slane %v2832, 2
  %2835 = vrot.lane.b32.xlu0 %v2834, 32
  %v2836 = vpop.permute.xlu0 %2835
  %v2837 = vsel %vm35, %v2836, 0
  %2839 = vmatprep.subr.mxu0 0.0
  %2840 = vmatpush1.msra.mxu0 %v2499
  %2841 = vmatprep.subr.mxu0 0.0
  %2842 = vmatpush1.msra.mxu0 %v2500
  %2843 = vmatprep.subr.mxu0 0.0
  %2844 = vmatpush1.msra.mxu0 %v2501
  %2845 = vmatprep.subr.mxu0 0.0
  %2846 = vmatpush1.msra.mxu0 %v2502
  %2847 = vmatprep.subr.mxu0 0.0
  %2848 = vmatpush1.msra.mxu0 0.0
  %2849 = vmatprep.subr.mxu0 0.0
  %2850 = vmatpush1.msra.mxu0 0.0
  %2851 = vmatprep.subr.mxu0 0.0
  %2852 = vmatpush1.msra.mxu0 0.0
  %2853 = vmatprep.subr.mxu0 0.0
  %2854 = vmatpush1.msra.mxu0 0.0
  %2855 = vmatprep.subr.mxu0 0.0
  %2856 = vmatpush1.msra.mxu0 0.0
  %2857 = vmatprep.subr.mxu0 0.0
  %2858 = vmatpush1.msra.mxu0 0.0
  %2859 = vmatprep.subr.mxu0 0.0
  %2860 = vmatpush1.msra.mxu0 0.0
  %2861 = vmatprep.subr.mxu0 0.0
  %2862 = vmatpush1.msra.mxu0 0.0
  %2863 = vmatprep.subr.mxu0 0.0
  %2864 = vmatpush1.msra.mxu0 0.0
  %2865 = vmatprep.subr.mxu0 0.0
  %2866 = vmatpush1.msra.mxu0 0.0
  %2867 = vmatprep.subr.mxu0 0.0
  %2868 = vmatpush1.msra.mxu0 0.0
  %2869 = vmatprep.subr.mxu0 0.0
  %2870 = vmatpush1.msra.mxu0 0.0
  %2871 = vmatprep.subr.mxu0 0.0
  %2872 = vmatpush1.msra.mxu0 0.0
  %2873 = vmatprep.subr.mxu0 0.0
  %2874 = vmatpush1.msra.mxu0 0.0
  %2875 = vmatprep.subr.mxu0 0.0
  %2876 = vmatpush1.msra.mxu0 0.0
  %2877 = vmatprep.subr.mxu0 0.0
  %2878 = vmatpush1.msra.mxu0 0.0
  %2879 = vmatprep.subr.mxu0 0.0
  %2880 = vmatpush1.msra.mxu0 0.0
  %2881 = vmatprep.subr.mxu0 0.0
  %2882 = vmatpush1.msra.mxu0 0.0
  %2883 = vmatprep.subr.mxu0 0.0
  %2884 = vmatpush1.msra.mxu0 0.0
  %2885 = vmatprep.subr.mxu0 0.0
  %2886 = vmatpush1.msra.mxu0 0.0
  %2887 = vmatprep.subr.mxu0 0.0
  %2888 = vmatpush1.msra.mxu0 0.0
  %2889 = vmatprep.subr.mxu0 0.0
  %2890 = vmatpush1.msra.mxu0 0.0
  %2891 = vmatprep.subr.mxu0 0.0
  %2892 = vmatpush1.msra.mxu0 0.0
  %2893 = vmatprep.subr.mxu0 0.0
  %2894 = vmatpush1.msra.mxu0 0.0
  %2895 = vmatprep.subr.mxu0 0.0
  %2896 = vmatpush1.msra.mxu0 0.0
  %2897 = vmatprep.subr.mxu0 0.0
  %2898 = vmatpush1.msra.mxu0 0.0
  %2899 = vmatprep.subr.mxu0 0.0
  %2900 = vmatpush1.msra.mxu0 0.0
  %2901 = vmatprep.subr.mxu0 0.0
  %2902 = vmatpush1.msra.mxu0 0.0
  %2903 = vmatprep.mubr.f32.mxu0 0.0
  %2904 = vmatmul.mubr.f32.gmra.mrb[0].mxu0 %v2837
  %v2905 = vpop.f32.mrb[0].mxu0
  %v2906 = vadd.f32 0.0, %v2905
  %v2907 = vpop.f32.mrb[0].mxu0
  %2908 = vdwg.mxu0
  %v2910 = vrot.slane %v2906, 4
  %v2912 = vadd.f32 %v2621, %v2910
  %v2913 = vxor.u32 %v2912, 2147483648
  %v2914 = vmul.f32 %v2913, 1.442695
  %v2915 = vpow.pop %v2914
  %v2916 = vadd.f32 %v2915, 1.0
  %v2917 = vrcp.pop %v2916
  %v2918 = vmul.f32 1.0, %v2917
  %v2919 = vtanh.pop %v2912
  %v2921 = vrot.slane %v2826, 6
  %v2923 = vmul.f32 %v2918, %v2921
  %2925 = vrot.lane.b32.xlu0 %v2919, 64
  %v2926 = vpop.permute.xlu0 %2925
  %v2928 = vmul.f32 %v2918, %v2926
  %2930 = vrot.lane.b32.xlu0 %v2928, 32
  %v2931 = vpop.permute.xlu0 %2930
  %v2933 = vadd.f32 %v2923, %v2931
  %v2934 = vtanh.pop %v2933
  %2936 = vrot.lane.b32.xlu0 %v2934, 64
  %v2937 = vpop.permute.xlu0 %2936
  %v2939 = vmul.f32 %v2918, %v2937
  %v2941 = vrot.slane %v2939, 4
  %2942 = vrot.lane.b32.xlu0 %v2941, 32
  %v2943 = vpop.permute.xlu0 %2942
  %v2944 = vsel %vm35, %v2943, 0
  %2946 = vmatprep.subr.mxu0 0.0
  %2947 = vmatpush1.msra.mxu0 %v2499
  %2948 = vmatprep.subr.mxu0 0.0
  %2949 = vmatpush1.msra.mxu0 %v2500
  %2950 = vmatprep.subr.mxu0 0.0
  %2951 = vmatpush1.msra.mxu0 %v2501
  %2952 = vmatprep.subr.mxu0 0.0
  %2953 = vmatpush1.msra.mxu0 %v2502
  %2954 = vmatprep.subr.mxu0 0.0
  %2955 = vmatpush1.msra.mxu0 0.0
  %2956 = vmatprep.subr.mxu0 0.0
  %2957 = vmatpush1.msra.mxu0 0.0
  %2958 = vmatprep.subr.mxu0 0.0
  %2959 = vmatpush1.msra.mxu0 0.0
  %2960 = vmatprep.subr.mxu0 0.0
  %2961 = vmatpush1.msra.mxu0 0.0
  %2962 = vmatprep.subr.mxu0 0.0
  %2963 = vmatpush1.msra.mxu0 0.0
  %2964 = vmatprep.subr.mxu0 0.0
  %2965 = vmatpush1.msra.mxu0 0.0
  %2966 = vmatprep.subr.mxu0 0.0
  %2967 = vmatpush1.msra.mxu0 0.0
  %2968 = vmatprep.subr.mxu0 0.0
  %2969 = vmatpush1.msra.mxu0 0.0
  %2970 = vmatprep.subr.mxu0 0.0
  %2971 = vmatpush1.msra.mxu0 0.0
  %2972 = vmatprep.subr.mxu0 0.0
  %2973 = vmatpush1.msra.mxu0 0.0
  %2974 = vmatprep.subr.mxu0 0.0
  %2975 = vmatpush1.msra.mxu0 0.0
  %2976 = vmatprep.subr.mxu0 0.0
  %2977 = vmatpush1.msra.mxu0 0.0
  %2978 = vmatprep.subr.mxu0 0.0
  %2979 = vmatpush1.msra.mxu0 0.0
  %2980 = vmatprep.subr.mxu0 0.0
  %2981 = vmatpush1.msra.mxu0 0.0
  %2982 = vmatprep.subr.mxu0 0.0
  %2983 = vmatpush1.msra.mxu0 0.0
  %2984 = vmatprep.subr.mxu0 0.0
  %2985 = vmatpush1.msra.mxu0 0.0
  %2986 = vmatprep.subr.mxu0 0.0
  %2987 = vmatpush1.msra.mxu0 0.0
  %2988 = vmatprep.subr.mxu0 0.0
  %2989 = vmatpush1.msra.mxu0 0.0
  %2990 = vmatprep.subr.mxu0 0.0
  %2991 = vmatpush1.msra.mxu0 0.0
  %2992 = vmatprep.subr.mxu0 0.0
  %2993 = vmatpush1.msra.mxu0 0.0
  %2994 = vmatprep.subr.mxu0 0.0
  %2995 = vmatpush1.msra.mxu0 0.0
  %2996 = vmatprep.subr.mxu0 0.0
  %2997 = vmatpush1.msra.mxu0 0.0
  %2998 = vmatprep.subr.mxu0 0.0
  %2999 = vmatpush1.msra.mxu0 0.0
  %3000 = vmatprep.subr.mxu0 0.0
  %3001 = vmatpush1.msra.mxu0 0.0
  %3002 = vmatprep.subr.mxu0 0.0
  %3003 = vmatpush1.msra.mxu0 0.0
  %3004 = vmatprep.subr.mxu0 0.0
  %3005 = vmatpush1.msra.mxu0 0.0
  %3006 = vmatprep.subr.mxu0 0.0
  %3007 = vmatpush1.msra.mxu0 0.0
  %3008 = vmatprep.subr.mxu0 0.0
  %3009 = vmatpush1.msra.mxu0 0.0
  %3010 = vmatprep.mubr.f32.mxu0 0.0
  %3011 = vmatmul.mubr.f32.gmra.mrb[0].mxu0 %v2944
  %v3012 = vpop.f32.mrb[0].mxu0
  %v3013 = vadd.f32 0.0, %v3012
  %v3014 = vpop.f32.mrb[0].mxu0
  %3015 = vdwg.mxu0
  %v3017 = vrot.slane %v3013, 2
  %v3019 = vadd.f32 %v2621, %v3017
  %v3020 = vxor.u32 %v3019, 2147483648
  %v3021 = vmul.f32 %v3020, 1.442695
  %v3022 = vpow.pop %v3021
  %v3023 = vadd.f32 %v3022, 1.0
  %v3024 = vrcp.pop %v3023
  %v3025 = vmul.f32 1.0, %v3024
  %v3026 = vtanh.pop %v3019
  %v3028 = vrot.slane %v2933, 6
  %v3030 = vmul.f32 %v3025, %v3028
  %3032 = vrot.lane.b32.xlu0 %v3026, 64
  %v3033 = vpop.permute.xlu0 %3032
  %v3035 = vmul.f32 %v3025, %v3033
  %3037 = vrot.lane.b32.xlu0 %v3035, 32
  %v3038 = vpop.permute.xlu0 %3037
  %v3040 = vadd.f32 %v3030, %v3038
  %v3041 = vtanh.pop %v3040
  %3043 = vrot.lane.b32.xlu0 %v3041, 64
  %v3044 = vpop.permute.xlu0 %3043
  %v3046 = vmul.f32 %v3025, %v3044
  %v3048 = vrot.slane %v3046, 6
  %3049 = vrot.lane.b32.xlu0 %v3048, 32
  %v3050 = vpop.permute.xlu0 %3049
  %v3051 = vsel %vm35, %v3050, 0
  %3053 = vmatprep.subr.mxu0 0.0
  %3054 = vmatpush1.msra.mxu0 %v2499
  %3055 = vmatprep.subr.mxu0 0.0
  %3056 = vmatpush1.msra.mxu0 %v2500
  %3057 = vmatprep.subr.mxu0 0.0
  %3058 = vmatpush1.msra.mxu0 %v2501
  %3059 = vmatprep.subr.mxu0 0.0
  %3060 = vmatpush1.msra.mxu0 %v2502
  %3061 = vmatprep.subr.mxu0 0.0
  %3062 = vmatpush1.msra.mxu0 0.0
  %3063 = vmatprep.subr.mxu0 0.0
  %3064 = vmatpush1.msra.mxu0 0.0
  %3065 = vmatprep.subr.mxu0 0.0
  %3066 = vmatpush1.msra.mxu0 0.0
  %3067 = vmatprep.subr.mxu0 0.0
  %3068 = vmatpush1.msra.mxu0 0.0
  %3069 = vmatprep.subr.mxu0 0.0
  %3070 = vmatpush1.msra.mxu0 0.0
  %3071 = vmatprep.subr.mxu0 0.0
  %3072 = vmatpush1.msra.mxu0 0.0
  %3073 = vmatprep.subr.mxu0 0.0
  %3074 = vmatpush1.msra.mxu0 0.0
  %3075 = vmatprep.subr.mxu0 0.0
  %3076 = vmatpush1.msra.mxu0 0.0
  %3077 = vmatprep.subr.mxu0 0.0
  %3078 = vmatpush1.msra.mxu0 0.0
  %3079 = vmatprep.subr.mxu0 0.0
  %3080 = vmatpush1.msra.mxu0 0.0
  %3081 = vmatprep.subr.mxu0 0.0
  %3082 = vmatpush1.msra.mxu0 0.0
  %3083 = vmatprep.subr.mxu0 0.0
  %3084 = vmatpush1.msra.mxu0 0.0
  %3085 = vmatprep.subr.mxu0 0.0
  %3086 = vmatpush1.msra.mxu0 0.0
  %3087 = vmatprep.subr.mxu0 0.0
  %3088 = vmatpush1.msra.mxu0 0.0
  %3089 = vmatprep.subr.mxu0 0.0
  %3090 = vmatpush1.msra.mxu0 0.0
  %3091 = vmatprep.subr.mxu0 0.0
  %3092 = vmatpush1.msra.mxu0 0.0
  %3093 = vmatprep.subr.mxu0 0.0
  %3094 = vmatpush1.msra.mxu0 0.0
  %3095 = vmatprep.subr.mxu0 0.0
  %3096 = vmatpush1.msra.mxu0 0.0
  %3097 = vmatprep.subr.mxu0 0.0
  %3098 = vmatpush1.msra.mxu0 0.0
  %3099 = vmatprep.subr.mxu0 0.0
  %3100 = vmatpush1.msra.mxu0 0.0
  %3101 = vmatprep.subr.mxu0 0.0
  %3102 = vmatpush1.msra.mxu0 0.0
  %3103 = vmatprep.subr.mxu0 0.0
  %3104 = vmatpush1.msra.mxu0 0.0
  %3105 = vmatprep.subr.mxu0 0.0
  %3106 = vmatpush1.msra.mxu0 0.0
  %3107 = vmatprep.subr.mxu0 0.0
  %3108 = vmatpush1.msra.mxu0 0.0
  %3109 = vmatprep.subr.mxu0 0.0
  %3110 = vmatpush1.msra.mxu0 0.0
  %3111 = vmatprep.subr.mxu0 0.0
  %3112 = vmatpush1.msra.mxu0 0.0
  %3113 = vmatprep.subr.mxu0 0.0
  %3114 = vmatpush1.msra.mxu0 0.0
  %3115 = vmatprep.subr.mxu0 0.0
  %3116 = vmatpush1.msra.mxu0 0.0
  %3117 = vmatprep.mubr.f32.mxu0 0.0
  %3118 = vmatmul.mubr.f32.gmra.mrb[0].mxu0 %v3051
  %v3119 = vpop.f32.mrb[0].mxu0
  %v3120 = vadd.f32 0.0, %v3119
  %v3121 = vpop.f32.mrb[0].mxu0
  %3122 = vdwg.mxu0
  %v3123 = vadd.f32 %v2626, %v3120
  %v3124 = vxor.u32 %v3123, 2147483648
  %v3125 = vmul.f32 %v3124, 1.442695
  %v3126 = vpow.pop %v3125
  %v3127 = vadd.f32 %v3126, 1.0
  %v3128 = vrcp.pop %v3127
  %v3129 = vmul.f32 1.0, %v3128
  %v3130 = vtanh.pop %v3123
  %v3132 = vrot.slane %v3040, 6
  %v3134 = vmul.f32 %v3129, %v3132
  %3136 = vrot.lane.b32.xlu0 %v3130, 64
  %v3137 = vpop.permute.xlu0 %3136
  %v3139 = vmul.f32 %v3129, %v3137
  %3141 = vrot.lane.b32.xlu0 %v3139, 32
  %v3142 = vpop.permute.xlu0 %3141
  %v3144 = vadd.f32 %v3134, %v3142
  %v3145 = vtanh.pop %v3144
  %3147 = vrot.lane.b32.xlu0 %v3145, 64
  %v3148 = vpop.permute.xlu0 %3147
  %v3150 = vmul.f32 %v3129, %v3148
  %3152 = vrot.lane.b32.xlu0 %v3150, 32
  %v3153 = vpop.permute.xlu0 %3152
  %v3154 = vsel %vm35, %v3153, 0
  %3156 = vmatprep.subr.mxu0 0.0
  %3157 = vmatpush1.msra.mxu0 %v2499
  %3158 = vmatprep.subr.mxu0 0.0
  %3159 = vmatpush1.msra.mxu0 %v2500
  %3160 = vmatprep.subr.mxu0 0.0
  %3161 = vmatpush1.msra.mxu0 %v2501
  %3162 = vmatprep.subr.mxu0 0.0
  %3163 = vmatpush1.msra.mxu0 %v2502
  %3164 = vmatprep.subr.mxu0 0.0
  %3165 = vmatpush1.msra.mxu0 0.0
  %3166 = vmatprep.subr.mxu0 0.0
  %3167 = vmatpush1.msra.mxu0 0.0
  %3168 = vmatprep.subr.mxu0 0.0
  %3169 = vmatpush1.msra.mxu0 0.0
  %3170 = vmatprep.subr.mxu0 0.0
  %3171 = vmatpush1.msra.mxu0 0.0
  %3172 = vmatprep.subr.mxu0 0.0
  %3173 = vmatpush1.msra.mxu0 0.0
  %3174 = vmatprep.subr.mxu0 0.0
  %3175 = vmatpush1.msra.mxu0 0.0
  %3176 = vmatprep.subr.mxu0 0.0
  %3177 = vmatpush1.msra.mxu0 0.0
  %3178 = vmatprep.subr.mxu0 0.0
  %3179 = vmatpush1.msra.mxu0 0.0
  %3180 = vmatprep.subr.mxu0 0.0
  %3181 = vmatpush1.msra.mxu0 0.0
  %3182 = vmatprep.subr.mxu0 0.0
  %3183 = vmatpush1.msra.mxu0 0.0
  %3184 = vmatprep.subr.mxu0 0.0
  %3185 = vmatpush1.msra.mxu0 0.0
  %3186 = vmatprep.subr.mxu0 0.0
  %3187 = vmatpush1.msra.mxu0 0.0
  %3188 = vmatprep.subr.mxu0 0.0
  %3189 = vmatpush1.msra.mxu0 0.0
  %3190 = vmatprep.subr.mxu0 0.0
  %3191 = vmatpush1.msra.mxu0 0.0
  %3192 = vmatprep.subr.mxu0 0.0
  %3193 = vmatpush1.msra.mxu0 0.0
  %3194 = vmatprep.subr.mxu0 0.0
  %3195 = vmatpush1.msra.mxu0 0.0
  %3196 = vmatprep.subr.mxu0 0.0
  %3197 = vmatpush1.msra.mxu0 0.0
  %3198 = vmatprep.subr.mxu0 0.0
  %3199 = vmatpush1.msra.mxu0 0.0
  %3200 = vmatprep.subr.mxu0 0.0
  %3201 = vmatpush1.msra.mxu0 0.0
  %3202 = vmatprep.subr.mxu0 0.0
  %3203 = vmatpush1.msra.mxu0 0.0
  %3204 = vmatprep.subr.mxu0 0.0
  %3205 = vmatpush1.msra.mxu0 0.0
  %3206 = vmatprep.subr.mxu0 0.0
  %3207 = vmatpush1.msra.mxu0 0.0
  %3208 = vmatprep.subr.mxu0 0.0
  %3209 = vmatpush1.msra.mxu0 0.0
  %3210 = vmatprep.subr.mxu0 0.0
  %3211 = vmatpush1.msra.mxu0 0.0
  %3212 = vmatprep.subr.mxu0 0.0
  %3213 = vmatpush1.msra.mxu0 0.0
  %3214 = vmatprep.subr.mxu0 0.0
  %3215 = vmatpush1.msra.mxu0 0.0
  %3216 = vmatprep.subr.mxu0 0.0
  %3217 = vmatpush1.msra.mxu0 0.0
  %3218 = vmatprep.subr.mxu0 0.0
  %3219 = vmatpush1.msra.mxu0 0.0
  %3220 = vmatprep.mubr.f32.mxu0 0.0
  %3221 = vmatmul.mubr.f32.gmra.mrb[0].mxu0 %v3154
  %v3222 = vpop.f32.mrb[0].mxu0
  %v3223 = vadd.f32 0.0, %v3222
  %v3224 = vpop.f32.mrb[0].mxu0
  %3225 = vdwg.mxu0
  %v3227 = vrot.slane %v3223, 6
  %v3229 = vadd.f32 %v2626, %v3227
  %v3230 = vxor.u32 %v3229, 2147483648
  %v3231 = vmul.f32 %v3230, 1.442695
  %v3232 = vpow.pop %v3231
  %v3233 = vadd.f32 %v3232, 1.0
  %v3234 = vrcp.pop %v3233
  %v3235 = vmul.f32 1.0, %v3234
  %v3236 = vtanh.pop %v3229
  %v3238 = vrot.slane %v3144, 6
  %v3240 = vmul.f32 %v3235, %v3238
  %3242 = vrot.lane.b32.xlu0 %v3236, 64
  %v3243 = vpop.permute.xlu0 %3242
  %v3245 = vmul.f32 %v3235, %v3243
  %3247 = vrot.lane.b32.xlu0 %v3245, 32
  %v3248 = vpop.permute.xlu0 %3247
  %v3250 = vadd.f32 %v3240, %v3248
  %v3251 = vtanh.pop %v3250
  %3253 = vrot.lane.b32.xlu0 %v3251, 64
  %v3254 = vpop.permute.xlu0 %3253
  %v3256 = vmul.f32 %v3235, %v3254
  %v3258 = vrot.slane %v3256, 2
  %3259 = vrot.lane.b32.xlu0 %v3258, 32
  %v3260 = vpop.permute.xlu0 %3259
  %v3261 = vsel %vm35, %v3260, 0
  %3263 = vmatprep.subr.mxu0 0.0
  %3264 = vmatpush1.msra.mxu0 %v2499
  %3265 = vmatprep.subr.mxu0 0.0
  %3266 = vmatpush1.msra.mxu0 %v2500
  %3267 = vmatprep.subr.mxu0 0.0
  %3268 = vmatpush1.msra.mxu0 %v2501
  %3269 = vmatprep.subr.mxu0 0.0
  %3270 = vmatpush1.msra.mxu0 %v2502
  %3271 = vmatprep.subr.mxu0 0.0
  %3272 = vmatpush1.msra.mxu0 0.0
  %3273 = vmatprep.subr.mxu0 0.0
  %3274 = vmatpush1.msra.mxu0 0.0
  %3275 = vmatprep.subr.mxu0 0.0
  %3276 = vmatpush1.msra.mxu0 0.0
  %3277 = vmatprep.subr.mxu0 0.0
  %3278 = vmatpush1.msra.mxu0 0.0
  %3279 = vmatprep.subr.mxu0 0.0
  %3280 = vmatpush1.msra.mxu0 0.0
  %3281 = vmatprep.subr.mxu0 0.0
  %3282 = vmatpush1.msra.mxu0 0.0
  %3283 = vmatprep.subr.mxu0 0.0
  %3284 = vmatpush1.msra.mxu0 0.0
  %3285 = vmatprep.subr.mxu0 0.0
  %3286 = vmatpush1.msra.mxu0 0.0
  %3287 = vmatprep.subr.mxu0 0.0
  %3288 = vmatpush1.msra.mxu0 0.0
  %3289 = vmatprep.subr.mxu0 0.0
  %3290 = vmatpush1.msra.mxu0 0.0
  %3291 = vmatprep.subr.mxu0 0.0
  %3292 = vmatpush1.msra.mxu0 0.0
  %3293 = vmatprep.subr.mxu0 0.0
  %3294 = vmatpush1.msra.mxu0 0.0
  %3295 = vmatprep.subr.mxu0 0.0
  %3296 = vmatpush1.msra.mxu0 0.0
  %3297 = vmatprep.subr.mxu0 0.0
  %3298 = vmatpush1.msra.mxu0 0.0
  %3299 = vmatprep.subr.mxu0 0.0
  %3300 = vmatpush1.msra.mxu0 0.0
  %3301 = vmatprep.subr.mxu0 0.0
  %3302 = vmatpush1.msra.mxu0 0.0
  %3303 = vmatprep.subr.mxu0 0.0
  %3304 = vmatpush1.msra.mxu0 0.0
  %3305 = vmatprep.subr.mxu0 0.0
  %3306 = vmatpush1.msra.mxu0 0.0
  %3307 = vmatprep.subr.mxu0 0.0
  %3308 = vmatpush1.msra.mxu0 0.0
  %3309 = vmatprep.subr.mxu0 0.0
  %3310 = vmatpush1.msra.mxu0 0.0
  %3311 = vmatprep.subr.mxu0 0.0
  %3312 = vmatpush1.msra.mxu0 0.0
  %3313 = vmatprep.subr.mxu0 0.0
  %3314 = vmatpush1.msra.mxu0 0.0
  %3315 = vmatprep.subr.mxu0 0.0
  %3316 = vmatpush1.msra.mxu0 0.0
  %3317 = vmatprep.subr.mxu0 0.0
  %3318 = vmatpush1.msra.mxu0 0.0
  %3319 = vmatprep.subr.mxu0 0.0
  %3320 = vmatpush1.msra.mxu0 0.0
  %3321 = vmatprep.subr.mxu0 0.0
  %3322 = vmatpush1.msra.mxu0 0.0
  %3323 = vmatprep.subr.mxu0 0.0
  %3324 = vmatpush1.msra.mxu0 0.0
  %3325 = vmatprep.subr.mxu0 0.0
  %3326 = vmatpush1.msra.mxu0 0.0
  %3327 = vmatprep.mubr.f32.mxu0 0.0
  %3328 = vmatmul.mubr.f32.gmra.mrb[0].mxu0 %v3261
  %v3329 = vpop.f32.mrb[0].mxu0
  %v3330 = vadd.f32 0.0, %v3329
  %v3331 = vpop.f32.mrb[0].mxu0
  %3332 = vdwg.mxu0
  %v3334 = vrot.slane %v3330, 4
  %v3336 = vadd.f32 %v2626, %v3334
  %v3337 = vxor.u32 %v3336, 2147483648
  %v3338 = vmul.f32 %v3337, 1.442695
  %v3339 = vpow.pop %v3338
  %v3340 = vadd.f32 %v3339, 1.0
  %v3341 = vrcp.pop %v3340
  %v3342 = vmul.f32 1.0, %v3341
  %v3343 = vtanh.pop %v3336
  %v3345 = vrot.slane %v3250, 6
  %v3347 = vmul.f32 %v3342, %v3345
  %3349 = vrot.lane.b32.xlu0 %v3343, 64
  %v3350 = vpop.permute.xlu0 %3349
  %v3352 = vmul.f32 %v3342, %v3350
  %3354 = vrot.lane.b32.xlu0 %v3352, 32
  %v3355 = vpop.permute.xlu0 %3354
  %v3357 = vadd.f32 %v3347, %v3355
  %v3358 = vtanh.pop %v3357
  %3360 = vrot.lane.b32.xlu0 %v3358, 64
  %v3361 = vpop.permute.xlu0 %3360
  %v3363 = vmul.f32 %v3342, %v3361
  %v3365 = vrot.slane %v3363, 4
  %3366 = vrot.lane.b32.xlu0 %v3365, 32
  %v3367 = vpop.permute.xlu0 %3366
  %v3368 = vsel %vm35, %v3367, 0
  %3370 = vmatprep.subr.mxu0 0.0
  %3371 = vmatpush1.msra.mxu0 %v2499
  %3372 = vmatprep.subr.mxu0 0.0
  %3373 = vmatpush1.msra.mxu0 %v2500
  %3374 = vmatprep.subr.mxu0 0.0
  %3375 = vmatpush1.msra.mxu0 %v2501
  %3376 = vmatprep.subr.mxu0 0.0
  %3377 = vmatpush1.msra.mxu0 %v2502
  %3378 = vmatprep.subr.mxu0 0.0
  %3379 = vmatpush1.msra.mxu0 0.0
  %3380 = vmatprep.subr.mxu0 0.0
  %3381 = vmatpush1.msra.mxu0 0.0
  %3382 = vmatprep.subr.mxu0 0.0
  %3383 = vmatpush1.msra.mxu0 0.0
  %3384 = vmatprep.subr.mxu0 0.0
  %3385 = vmatpush1.msra.mxu0 0.0
  %3386 = vmatprep.subr.mxu0 0.0
  %3387 = vmatpush1.msra.mxu0 0.0
  %3388 = vmatprep.subr.mxu0 0.0
  %3389 = vmatpush1.msra.mxu0 0.0
  %3390 = vmatprep.subr.mxu0 0.0
  %3391 = vmatpush1.msra.mxu0 0.0
  %3392 = vmatprep.subr.mxu0 0.0
  %3393 = vmatpush1.msra.mxu0 0.0
  %3394 = vmatprep.subr.mxu0 0.0
  %3395 = vmatpush1.msra.mxu0 0.0
  %3396 = vmatprep.subr.mxu0 0.0
  %3397 = vmatpush1.msra.mxu0 0.0
  %3398 = vmatprep.subr.mxu0 0.0
  %3399 = vmatpush1.msra.mxu0 0.0
  %3400 = vmatprep.subr.mxu0 0.0
  %3401 = vmatpush1.msra.mxu0 0.0
  %3402 = vmatprep.subr.mxu0 0.0
  %3403 = vmatpush1.msra.mxu0 0.0
  %3404 = vmatprep.subr.mxu0 0.0
  %3405 = vmatpush1.msra.mxu0 0.0
  %3406 = vmatprep.subr.mxu0 0.0
  %3407 = vmatpush1.msra.mxu0 0.0
  %3408 = vmatprep.subr.mxu0 0.0
  %3409 = vmatpush1.msra.mxu0 0.0
  %3410 = vmatprep.subr.mxu0 0.0
  %3411 = vmatpush1.msra.mxu0 0.0
  %3412 = vmatprep.subr.mxu0 0.0
  %3413 = vmatpush1.msra.mxu0 0.0
  %3414 = vmatprep.subr.mxu0 0.0
  %3415 = vmatpush1.msra.mxu0 0.0
  %3416 = vmatprep.subr.mxu0 0.0
  %3417 = vmatpush1.msra.mxu0 0.0
  %3418 = vmatprep.subr.mxu0 0.0
  %3419 = vmatpush1.msra.mxu0 0.0
  %3420 = vmatprep.subr.mxu0 0.0
  %3421 = vmatpush1.msra.mxu0 0.0
  %3422 = vmatprep.subr.mxu0 0.0
  %3423 = vmatpush1.msra.mxu0 0.0
  %3424 = vmatprep.subr.mxu0 0.0
  %3425 = vmatpush1.msra.mxu0 0.0
  %3426 = vmatprep.subr.mxu0 0.0
  %3427 = vmatpush1.msra.mxu0 0.0
  %3428 = vmatprep.subr.mxu0 0.0
  %3429 = vmatpush1.msra.mxu0 0.0
  %3430 = vmatprep.subr.mxu0 0.0
  %3431 = vmatpush1.msra.mxu0 0.0
  %3432 = vmatprep.subr.mxu0 0.0
  %3433 = vmatpush1.msra.mxu0 0.0
  %3434 = vmatprep.mubr.f32.mxu0 0.0
  %3435 = vmatmul.mubr.f32.gmra.mrb[0].mxu0 %v3368
  %v3436 = vpop.f32.mrb[0].mxu0
  %v3437 = vadd.f32 0.0, %v3436
  %v3438 = vpop.f32.mrb[0].mxu0
  %3439 = vdwg.mxu0
  %v3441 = vrot.slane %v3437, 2
  %v3443 = vadd.f32 %v2626, %v3441
  %v3444 = vxor.u32 %v3443, 2147483648
  %v3445 = vmul.f32 %v3444, 1.442695
  %v3446 = vpow.pop %v3445
  %v3447 = vadd.f32 %v3446, 1.0
  %v3448 = vrcp.pop %v3447
  %v3449 = vmul.f32 1.0, %v3448
  %v3450 = vtanh.pop %v3443
  %v3452 = vrot.slane %v3357, 6
  %v3454 = vmul.f32 %v3449, %v3452
  %3456 = vrot.lane.b32.xlu0 %v3450, 64
  %v3457 = vpop.permute.xlu0 %3456
  %v3459 = vmul.f32 %v3449, %v3457
  %3461 = vrot.lane.b32.xlu0 %v3459, 32
  %v3462 = vpop.permute.xlu0 %3461
  %v3464 = vadd.f32 %v3454, %v3462
  %v3465 = vtanh.pop %v3464
  %3467 = vrot.lane.b32.xlu0 %v3465, 64
  %v3468 = vpop.permute.xlu0 %3467
  %v3470 = vmul.f32 %v3449, %v3468
  %3472 = vrot.lane.b32.xlu0 %v2834, 64
  %v3473 = vpop.permute.xlu0 %3472
  %3475 = vrot.lane.b32.xlu0 %v2941, 96
  %v3476 = vpop.permute.xlu0 %3475
  %3480 = vrot.lane.b32.xlu0 %v3258, 64
  %v3481 = vpop.permute.xlu0 %3480
  %3483 = vrot.lane.b32.xlu0 %v3365, 96
  %v3484 = vpop.permute.xlu0 %3483
  %v3487 = vrot.slane %v3470, 6
  %v3489 = vsel %vm35, %v2729, %v3473
  %v3490 = vsel %vm1141, %v3489, %v3476
  %vm3491 = vcmask 785408
  %v3492 = vsel %vm3491, %v3490, %v3048
  %v3493 = vsel %vm35, %v3153, %v3481
  %v3494 = vsel %vm1141, %v3493, %v3484
  %v3495 = vsel %vm3491, %v3494, %v3487
  %v3498 = vcombine.low %v3492, %v3495
  %v3500 = vunpack.c.l.s4 1983009808
  %v3501 = vunpack.c.0.s8 %v3500
  %v3502 = vlaneseq
  %v3503 = vshrl.u32 %v3502, 7
  %v3504 = vsub.s32 %v3501, %v3503
  %v3505 = vrot.slane %v3498, %v3504
  %3507 = vst [vmem:[%s8] sm:$0xf] %v3505
  // Predicated region
  $region34: #{bert_lstm_forward.1} parent=0 // pred_check
    _
  $region35: #{bert_lstm_forward.1} parent=0 // pred_check_branch
    %3509 = sbr.rel (0) target = $region37
  $region36: #{bert_lstm_forward.1} parent=0 // pred_region
    _
  $region37: #{bert_lstm_forward.1} parent=0 // pred_fallthru
    _
  // Predicated region
  $region38: #{bert_lstm_forward.1} parent=0 // pred_check
    _
  $region39: #{bert_lstm_forward.1} parent=0 // pred_check_branch
    %3511 = sbr.rel (0) target = $region41
  $region40: #{bert_lstm_forward.1} parent=0 // pred_region
    _
  $region41: #{bert_lstm_forward.1} parent=0 // pred_fallthru
    _

</llo_original>
